<compile_context>
chip_gen: v6e
topology: v6e:2x2x1
jax: 0.10.0
libtpu: 0.0.40
codegen_flags: <defaults>
</compile_context>

<pallas_src>
import functools
import math

import jax
import jax.numpy as jnp
from jax.experimental import pallas as pl
from jax.experimental.pallas import tpu as pltpu

# ----------------------------------------------------------------------------
# Config mirroring ViTEncoder('basic', embedding_dim=32, input_shape=(3,16,16),
#                             patch_size=4) at small scale.
# ----------------------------------------------------------------------------
D_MODEL = 64          # 'basic'
NUM_LAYERS = 3        # 'basic'
NUM_HEADS = 4         # nn.TransformerEncoderLayer(nhead=4)
DIM_FF = 2048         # nn.TransformerEncoderLayer default dim_feedforward
LN_EPS = 1e-5         # nn.LayerNorm default
EMBED_DIM = 32
PATCH = 4
IN_SHAPE = (3, 16, 16)   # (C, H, W)
BATCH = 2


def _layernorm(y, g, b, eps):
    mu = jnp.mean(y, axis=-1, keepdims=True)
    var = jnp.mean(jnp.square(y - mu), axis=-1, keepdims=True)
    return (y - mu) * jax.lax.rsqrt(var + eps) * g + b


# ----------------------------------------------------------------------------
# The single fused kernel.  Grid = (layer l,).
#   l == 0     : patch embed + pos
#   every step : MHA + residual + LN1, full FFN + residual + LN2
#   l == last  : mean over patches + fc head
# Token state lives in VMEM scratch for the whole forward.
# ----------------------------------------------------------------------------
def _vit_fused_kernel(
    patches_ref, w_proj_ref, b_proj_ref, pos_ref, hp_ref, hpt_ref, pool_ref,
    w_qkv_ref, b_qkv_ref, w_ao_ref, b_ao_ref, ln1_g_ref, ln1_b_ref,
    w_ff1_ref, b_ff1_ref, w_ff2_ref, b_ff2_ref, ln2_g_ref, ln2_b_ref,
    w_fc_ref, b_fc_ref,
    out_ref,
    x_ref,
    *, n_patch, n_heads, eps,
):
    l = pl.program_id(0)
    n_layers = pl.num_programs(0)
    d_model = x_ref.shape[-1]
    d_head = d_model // n_heads
    scale = 1.0 / math.sqrt(d_head)

    # ---------------- layer 0 entry: patch projection + pos-embed ----------------
    @pl.when(l == 0)
    def _patch_embed():
        tok = jnp.dot(patches_ref[...], w_proj_ref[...],
                      preferred_element_type=jnp.float32)
        x_ref[...] = tok + b_proj_ref[...] + pos_ref[...]

    x = x_ref[...]                                  # (B*P, E) f32
    xb = x.astype(jnp.bfloat16)

    # ---------------- MHA over the batch axis (batch_first=False quirk) ----------
    # Stacked QKV weights: one DMA block per layer, three lane-dense dots.
    q = jnp.dot(xb, w_qkv_ref[0], preferred_element_type=jnp.float32) + b_qkv_ref[0]
    k = jnp.dot(xb, w_qkv_ref[1], preferred_element_type=jnp.float32) + b_qkv_ref[1]
    v = jnp.dot(xb, w_qkv_ref[2], preferred_element_type=jnp.float32) + b_qkv_ref[2]

    # "Other" sequence element = other batch row at the same patch (S = B = 2):
    # a sublane roll by n_patch swaps the two batch halves of the (2*P, E) slab.
    k_o = pltpu.roll(k, shift=n_patch, axis=0)
    v_o = pltpu.roll(v, shift=n_patch, axis=0)

    hp = hp_ref[...]                                # (E, H) per-head reduce
    hp_t = hpt_ref[...]                             # (H, E) per-head broadcast
    s_same = scale * jnp.dot(q * k, hp, preferred_element_type=jnp.float32)
    s_cross = scale * jnp.dot(q * k_o, hp, preferred_element_type=jnp.float32)
    # softmax over exactly two keys == sigmoid of the score difference
    w_same = 1.0 / (1.0 + jnp.exp(s_cross - s_same))                 # (B*P, H)
    w_b = jnp.dot(w_same, hp_t, preferred_element_type=jnp.float32)  # (B*P, E)
    o = v_o + w_b * (v - v_o)

    attn = jnp.dot(o.astype(jnp.bfloat16), w_ao_ref[...],
                   preferred_element_type=jnp.float32) + b_ao_ref[...]
    y = _layernorm(x + attn, ln1_g_ref[...], ln1_b_ref[...], eps)

    # ---------------- feed-forward (full, un-chunked) -----------------------------
    h = jnp.dot(y.astype(jnp.bfloat16), w_ff1_ref[...],
                preferred_element_type=jnp.float32) + b_ff1_ref[...]
    h = jnp.maximum(h, 0.0)
    f = jnp.dot(h.astype(jnp.bfloat16), w_ff2_ref[...],
                preferred_element_type=jnp.float32) + b_ff2_ref[...]
    z = _layernorm(y + f, ln2_g_ref[...], ln2_b_ref[...], eps)
    x_ref[...] = z

    # ---------------- final layer: mean over patches + fc head --------------------
    @pl.when(l == n_layers - 1)
    def _head():
        means = jnp.dot(pool_ref[...], z, preferred_element_type=jnp.float32)  # (B, E)
        out = jnp.dot(means, w_fc_ref[...],
                      preferred_element_type=jnp.float32) + b_fc_ref[...]
        out_ref[...] = out.astype(out_ref.dtype)


# ----------------------------------------------------------------------------
# Wrapper: layout glue + one pallas_call
# ----------------------------------------------------------------------------
def vit_encoder_forward(x_nchw, params):
    B, C, H, W = x_nchw.shape
    p = PATCH
    Hp, Wp = H // p, W // p
    P = Hp * Wp
    E = D_MODEL
    L = NUM_LAYERS
    Hh = NUM_HEADS
    dh = E // Hh

    # Guards for the fused-attention specializations (review feedback).
    assert B == 2, "roll-based attention / 2-key sigmoid-softmax assume batch==2"
    assert P % 8 == 0, "patch count must be a multiple of 8 sublanes"
    assert E % Hh == 0

    # Patch extraction (pure layout glue): (B,C,H,W) -> (B*P, C*p*p) in (c,ph,pw)
    # order, matching nn.Conv2d(kernel=stride=patch).
    patches = (x_nchw.reshape(B, C, Hp, p, Wp, p)
               .transpose(0, 2, 4, 1, 3, 5)
               .reshape(B * P, C * p * p))
    pos_tiled = jnp.tile(params["pos"], (B, 1))                     # (B*P, E), host-side

    # Tiny constant pooling matrices (trace-time constants, DMA'd once).
    head_of = jnp.arange(E) // dh
    hp = (head_of[:, None] == jnp.arange(Hh)[None, :]).astype(jnp.float32)     # (E, H)
    hp_t = hp.T                                                                # (H, E)
    row_b = jnp.arange(B * P) // P
    pool = (jnp.arange(B)[:, None] == row_b[None, :]).astype(jnp.float32) / P  # (B, B*P)

    kernel = functools.partial(_vit_fused_kernel, n_patch=P, n_heads=Hh, eps=LN_EPS)

    def const_spec(shape):
        nd = len(shape)
        return pl.BlockSpec(shape, lambda l, _nd=nd: (0,) * _nd)

    def layer_spec(shape_rest):   # stacked (L,)+shape_rest, re-DMA'd only when l changes
        nd = len(shape_rest)
        return pl.BlockSpec((None,) + shape_rest, lambda l, _nd=nd: (l,) + (0,) * _nd)

    in_specs = [
        const_spec((B * P, C * p * p)),            # patches
        const_spec((C * p * p, E)),                # w_proj
        const_spec((1, E)),                        # b_proj
        const_spec((B * P, E)),                    # pos (pre-tiled)
        const_spec((E, Hh)),                       # hp
        const_spec((Hh, E)),                       # hp_t
        const_spec((B, B * P)),                    # pool
        layer_spec((3, E, E)),                     # w_qkv (bf16, stacked q|k|v)
        layer_spec((3, 1, E)),                     # b_qkv
        layer_spec((E, E)),                        # w_ao  (bf16)
        layer_spec((1, E)),                        # b_ao
        layer_spec((1, E)), layer_spec((1, E)),    # ln1_g, ln1_b
        layer_spec((E, DIM_FF)),                   # w_ff1 (bf16)
        layer_spec((1, DIM_FF)),                   # b_ff1
        layer_spec((DIM_FF, E)),                   # w_ff2 (bf16)
        layer_spec((1, E)),                        # b_ff2
        layer_spec((1, E)), layer_spec((1, E)),    # ln2_g, ln2_b
        const_spec((E, EMBED_DIM)),                # w_fc
        const_spec((1, EMBED_DIM)),                # b_fc
    ]

    return pl.pallas_call(
        kernel,
        out_shape=jax.ShapeDtypeStruct((B, EMBED_DIM), jnp.float32),
        grid=(L,),
        in_specs=in_specs,
        out_specs=pl.BlockSpec((B, EMBED_DIM), lambda l: (0, 0)),
        scratch_shapes=[pltpu.VMEM((B * P, E), jnp.float32)],       # token state
        compiler_params=pltpu.CompilerParams(
            dimension_semantics=("arbitrary",)),
    )(patches, params["w_proj"], params["b_proj"], pos_tiled, hp, hp_t, pool,
      params["w_qkv"], params["b_qkv"], params["w_ao"], params["b_ao"],
      params["ln1_g"], params["ln1_b"],
      params["w_ff1"], params["b_ff1"], params["w_ff2"], params["b_ff2"],
      params["ln2_g"], params["ln2_b"],
      params["w_fc"], params["b_fc"])


# ----------------------------------------------------------------------------
# Pure-JAX reference (same math, f32) for a correctness self-check.
# ----------------------------------------------------------------------------
def _reference_forward(x_nchw, params):
    B, C, H, W = x_nchw.shape
    p = PATCH
    Hp, Wp = H // p, W // p
    P = Hp * Wp
    E = D_MODEL
    hN = NUM_HEADS
    dh = E // hN

    patches = (x_nchw.reshape(B, C, Hp, p, Wp, p)
               .transpose(0, 2, 4, 1, 3, 5)
               .reshape(B * P, C * p * p))
    x = patches @ params["w_proj"] + params["b_proj"] + jnp.tile(params["pos"], (B, 1))
    for l in range(NUM_LAYERS):
        w_q = params["w_qkv"][l, 0].astype(jnp.float32)
        w_k = params["w_qkv"][l, 1].astype(jnp.float32)
        w_v = params["w_qkv"][l, 2].astype(jnp.float32)
        q = (x @ w_q + params["b_qkv"][l, 0]).reshape(B, P, hN, dh)
        k = (x @ w_k + params["b_qkv"][l, 1]).reshape(B, P, hN, dh)
        v = (x @ w_v + params["b_qkv"][l, 2]).reshape(B, P, hN, dh)
        s = jnp.einsum("bnhd,cnhd->nhbc", q, k) / math.sqrt(dh)
        w = jax.nn.softmax(s, axis=-1)
        a = jnp.einsum("nhbc,cnhd->bnhd", w, v).reshape(B * P, E)
        a = a @ params["w_ao"][l].astype(jnp.float32) + params["b_ao"][l]
        x = _layernorm(x + a, params["ln1_g"][l], params["ln1_b"][l], LN_EPS)
        f = jnp.maximum(x @ params["w_ff1"][l].astype(jnp.float32) + params["b_ff1"][l], 0.0)
        f = f @ params["w_ff2"][l].astype(jnp.float32) + params["b_ff2"][l]
        x = _layernorm(x + f, params["ln2_g"][l], params["ln2_b"][l], LN_EPS)
    xm = x.reshape(B, P, E).mean(axis=1)
    return xm @ params["w_fc"] + params["b_fc"]


# ----------------------------------------------------------------------------
# Parameter init.  Per-layer weights stacked along a leading layer axis so the
# kernel can stream them via BlockSpec index_maps; big weights stored bf16.
# ----------------------------------------------------------------------------
def init_params(key):
    C, H, W = IN_SHAPE
    P = (H // PATCH) * (W // PATCH)
    L = NUM_LAYERS
    E = D_MODEL
    keys = iter(jax.random.split(key, 8))

    def nrm(shape, std=0.02, dtype=jnp.float32):
        return (std * jax.random.normal(next(keys), shape)).astype(dtype)

    return {
        "w_proj": nrm((C * PATCH * PATCH, E)),            # conv weight, flattened & transposed
        "b_proj": jnp.zeros((1, E), jnp.float32),
        "pos":    nrm((P, E)),                            # trunc_normal(std=0.02) analogue
        "w_qkv":  nrm((L, 3, E, E), dtype=jnp.bfloat16),  # stacked q|k|v
        "b_qkv":  jnp.zeros((L, 3, 1, E), jnp.float32),
        "w_ao":   nrm((L, E, E), dtype=jnp.bfloat16),
        "b_ao":   jnp.zeros((L, 1, E), jnp.float32),
        "ln1_g":  jnp.ones((L, 1, E), jnp.float32),
        "ln1_b":  jnp.zeros((L, 1, E), jnp.float32),
        "w_ff1":  nrm((L, E, DIM_FF), dtype=jnp.bfloat16),
        "b_ff1":  jnp.zeros((L, 1, DIM_FF), jnp.float32),
        "w_ff2":  nrm((L, DIM_FF, E), dtype=jnp.bfloat16),
        "b_ff2":  jnp.zeros((L, 1, E), jnp.float32),
        "ln2_g":  jnp.ones((L, 1, E), jnp.float32),
        "ln2_b":  jnp.zeros((L, 1, E), jnp.float32),
        "w_fc":   nrm((E, EMBED_DIM)),
        "b_fc":   jnp.zeros((1, EMBED_DIM), jnp.float32),
    }


if __name__ == "__main__":
    key = jax.random.PRNGKey(0)
    pkey, xkey = jax.random.split(key)
    params = init_params(pkey)
    x = jax.random.normal(xkey, (BATCH,) + IN_SHAPE, dtype=jnp.float32)   # NCHW

    fwd = jax.jit(vit_encoder_forward)
    out = jax.block_until_ready(fwd(x, params))

    assert out.shape == (BATCH, EMBED_DIM), out.shape
    assert bool(jnp.all(jnp.isfinite(out)))

    # Numerical self-check against a pure-JAX f32 reference of the same math
    # (weights stored bf16, so the only kernel-side extra error is the bf16
    # rounding of matmul activations).
    with jax.default_matmul_precision("highest"):
        ref = _reference_forward(x, params)
    err = float(jnp.max(jnp.abs(out - ref)))
    scale = float(jnp.max(jnp.abs(ref))) + 1e-6
    tol = 5e-2 * scale + 1e-4
    assert err <= tol, f"kernel vs reference mismatch: {err} > {tol}"

    print("KERNEL_OK")
</pallas_src>

<mosaic_0001>
module attributes {stable_mosaic.version = 11 : i64} {
  func.func @_vit_fused_kernel(%arg0: i32, %arg1: memref<32x48xf32, #tpu.memory_space<vmem>>, %arg2: memref<48x64xf32, #tpu.memory_space<vmem>>, %arg3: memref<1x64xf32, #tpu.memory_space<vmem>>, %arg4: memref<32x64xf32, #tpu.memory_space<vmem>>, %arg5: memref<64x4xf32, #tpu.memory_space<vmem>>, %arg6: memref<4x64xf32, #tpu.memory_space<vmem>>, %arg7: memref<2x32xf32, #tpu.memory_space<vmem>>, %arg8: memref<1x3x64x64xbf16, #tpu.memory_space<vmem>>, %arg9: memref<1x3x1x64xf32, #tpu.memory_space<vmem>>, %arg10: memref<1x64x64xbf16, #tpu.memory_space<vmem>>, %arg11: memref<1x1x64xf32, #tpu.memory_space<vmem>>, %arg12: memref<1x1x64xf32, #tpu.memory_space<vmem>>, %arg13: memref<1x1x64xf32, #tpu.memory_space<vmem>>, %arg14: memref<1x64x2048xbf16, #tpu.memory_space<vmem>>, %arg15: memref<1x1x2048xf32, #tpu.memory_space<vmem>>, %arg16: memref<1x2048x64xbf16, #tpu.memory_space<vmem>>, %arg17: memref<1x1x64xf32, #tpu.memory_space<vmem>>, %arg18: memref<1x1x64xf32, #tpu.memory_space<vmem>>, %arg19: memref<1x1x64xf32, #tpu.memory_space<vmem>>, %arg20: memref<64x32xf32, #tpu.memory_space<vmem>>, %arg21: memref<1x32xf32, #tpu.memory_space<vmem>>, %arg22: memref<2x32xf32, #tpu.memory_space<vmem>>, %arg23: memref<32x64xf32, #tpu.memory_space<vmem>>) attributes {dimension_semantics = [#tpu.dimension_semantics<arbitrary>], iteration_bounds = array<i64: 3>, scalar_prefetch = 0 : i64, scratch_operands = 1 : i64, tpu.core_type = #tpu.core_type<tc>, window_params = [{pipeline_mode = #tpu.pipeline_mode<synchronous>, transform_indices = @transform_0, window_bounds = array<i64: 32, 48>}, {pipeline_mode = #tpu.pipeline_mode<synchronous>, transform_indices = @transform_1, window_bounds = array<i64: 48, 64>}, {pipeline_mode = #tpu.pipeline_mode<synchronous>, transform_indices = @transform_2, window_bounds = array<i64: 1, 64>}, {pipeline_mode = #tpu.pipeline_mode<synchronous>, transform_indices = @transform_3, window_bounds = array<i64: 32, 64>}, {pipeline_mode = #tpu.pipeline_mode<synchronous>, transform_indices = @transform_4, window_bounds = array<i64: 64, 4>}, {pipeline_mode = #tpu.pipeline_mode<synchronous>, transform_indices = @transform_5, window_bounds = array<i64: 4, 64>}, {pipeline_mode = #tpu.pipeline_mode<synchronous>, transform_indices = @transform_6, window_bounds = array<i64: 2, 32>}, {transform_indices = @transform_7, window_bounds = array<i64: 1, 3, 64, 64>}, {transform_indices = @transform_8, window_bounds = array<i64: 1, 3, 1, 64>}, {transform_indices = @transform_9, window_bounds = array<i64: 1, 64, 64>}, {transform_indices = @transform_10, window_bounds = array<i64: 1, 1, 64>}, {transform_indices = @transform_11, window_bounds = array<i64: 1, 1, 64>}, {transform_indices = @transform_12, window_bounds = array<i64: 1, 1, 64>}, {transform_indices = @transform_13, window_bounds = array<i64: 1, 64, 2048>}, {transform_indices = @transform_14, window_bounds = array<i64: 1, 1, 2048>}, {transform_indices = @transform_15, window_bounds = array<i64: 1, 2048, 64>}, {transform_indices = @transform_16, window_bounds = array<i64: 1, 1, 64>}, {transform_indices = @transform_17, window_bounds = array<i64: 1, 1, 64>}, {transform_indices = @transform_18, window_bounds = array<i64: 1, 1, 64>}, {pipeline_mode = #tpu.pipeline_mode<synchronous>, transform_indices = @transform_19, window_bounds = array<i64: 64, 32>}, {pipeline_mode = #tpu.pipeline_mode<synchronous>, transform_indices = @transform_20, window_bounds = array<i64: 1, 32>}, {pipeline_mode = #tpu.pipeline_mode<synchronous>, transform_indices = @transform_21, window_bounds = array<i64: 2, 32>}]} {
    %c0_i32 = arith.constant 0 : i32
    %0 = arith.cmpi eq, %arg0, %c0_i32 : i32
    %1 = arith.extui %0 : i1 to i32
    %c0_i32_0 = arith.constant 0 : i32
    %2 = arith.cmpi ne, %1, %c0_i32_0 : i32
    scf.if %2 {
      %c0_85 = arith.constant 0 : index
      %c0_86 = arith.constant 0 : index
      %132 = vector.load %arg1[%c0_85, %c0_86] : memref<32x48xf32, #tpu.memory_space<vmem>>, vector<32x48xf32>
      %c0_87 = arith.constant 0 : index
      %c0_88 = arith.constant 0 : index
      %133 = vector.load %arg2[%c0_87, %c0_88] : memref<48x64xf32, #tpu.memory_space<vmem>>, vector<48x64xf32>
      %cst_89 = arith.constant dense<0.000000e+00> : vector<32x64xf32>
      %134 = tpu.matmul %132, %133, %cst_89 {dimension_numbers = #tpu.dot_dimension_numbers<[1], [0], [0], [1], [0, 0, 1, 1], [], []>} : vector<32x48xf32>, vector<48x64xf32>, vector<32x64xf32> -> vector<32x64xf32>
      %c0_90 = arith.constant 0 : index
      %c0_91 = arith.constant 0 : index
      %135 = vector.load %arg3[%c0_90, %c0_91] : memref<1x64xf32, #tpu.memory_space<vmem>>, vector<1x64xf32>
      %136 = vector.broadcast %135 : vector<1x64xf32> to vector<32x64xf32>
      %137 = arith.addf %134, %136 : vector<32x64xf32>
      %c0_92 = arith.constant 0 : index
      %c0_93 = arith.constant 0 : index
      %138 = vector.load %arg4[%c0_92, %c0_93] : memref<32x64xf32, #tpu.memory_space<vmem>>, vector<32x64xf32>
      %139 = arith.addf %137, %138 : vector<32x64xf32>
      %c0_94 = arith.constant 0 : index
      %c0_95 = arith.constant 0 : index
      %140 = vector.load %arg23[%c0_94, %c0_95] : memref<32x64xf32, #tpu.memory_space<vmem>>, vector<32x64xf32>
      tpu.vector_store %arg23[%c0_94, %c0_95], %139 {strides = array<i32>} : memref<32x64xf32, #tpu.memory_space<vmem>>, vector<32x64xf32>,
    } else {
    }
    %c0 = arith.constant 0 : index
    %c0_1 = arith.constant 0 : index
    %3 = vector.load %arg23[%c0, %c0_1] : memref<32x64xf32, #tpu.memory_space<vmem>>, vector<32x64xf32>
    %4 = arith.truncf %3 : vector<32x64xf32> to vector<32x64xbf16>
    %c0_2 = arith.constant 0 : index
    %c0_3 = arith.constant 0 : index
    %c0_4 = arith.constant 0 : index
    %c0_5 = arith.constant 0 : index
    %5 = vector.load %arg8[%c0_2, %c0_3, %c0_4, %c0_5] : memref<1x3x64x64xbf16, #tpu.memory_space<vmem>>, vector<1x1x64x64xbf16>
    %6 = vector.shape_cast %5 : vector<1x1x64x64xbf16> to vector<64x64xbf16>
    %cst = arith.constant dense<0.000000e+00> : vector<32x64xf32>
    %7 = tpu.matmul %4, %6, %cst {dimension_numbers = #tpu.dot_dimension_numbers<[1], [0], [0], [1], [0, 0, 1, 1], [], []>} : vector<32x64xbf16>, vector<64x64xbf16>, vector<32x64xf32> -> vector<32x64xf32>
    %c0_6 = arith.constant 0 : index
    %c0_7 = arith.constant 0 : index
    %c0_8 = arith.constant 0 : index
    %c0_9 = arith.constant 0 : index
    %8 = vector.load %arg9[%c0_6, %c0_7, %c0_8, %c0_9] : memref<1x3x1x64xf32, #tpu.memory_space<vmem>>, vector<1x1x1x64xf32>
    %9 = vector.shape_cast %8 : vector<1x1x1x64xf32> to vector<1x64xf32>
    %10 = vector.broadcast %9 : vector<1x64xf32> to vector<32x64xf32>
    %11 = arith.addf %7, %10 : vector<32x64xf32>
    %c0_10 = arith.constant 0 : index
    %c1 = arith.constant 1 : index
    %c0_11 = arith.constant 0 : index
    %c0_12 = arith.constant 0 : index
    %12 = vector.load %arg8[%c0_10, %c1, %c0_11, %c0_12] : memref<1x3x64x64xbf16, #tpu.memory_space<vmem>>, vector<1x1x64x64xbf16>
    %13 = vector.shape_cast %12 : vector<1x1x64x64xbf16> to vector<64x64xbf16>
    %cst_13 = arith.constant dense<0.000000e+00> : vector<32x64xf32>
    %14 = tpu.matmul %4, %13, %cst_13 {dimension_numbers = #tpu.dot_dimension_numbers<[1], [0], [0], [1], [0, 0, 1, 1], [], []>} : vector<32x64xbf16>, vector<64x64xbf16>, vector<32x64xf32> -> vector<32x64xf32>
    %c0_14 = arith.constant 0 : index
    %c1_15 = arith.constant 1 : index
    %c0_16 = arith.constant 0 : index
    %c0_17 = arith.constant 0 : index
    %15 = vector.load %arg9[%c0_14, %c1_15, %c0_16, %c0_17] : memref<1x3x1x64xf32, #tpu.memory_space<vmem>>, vector<1x1x1x64xf32>
    %16 = vector.shape_cast %15 : vector<1x1x1x64xf32> to vector<1x64xf32>
    %17 = vector.broadcast %16 : vector<1x64xf32> to vector<32x64xf32>
    %18 = arith.addf %14, %17 : vector<32x64xf32>
    %c0_18 = arith.constant 0 : index
    %c2 = arith.constant 2 : index
    %c0_19 = arith.constant 0 : index
    %c0_20 = arith.constant 0 : index
    %19 = vector.load %arg8[%c0_18, %c2, %c0_19, %c0_20] : memref<1x3x64x64xbf16, #tpu.memory_space<vmem>>, vector<1x1x64x64xbf16>
    %20 = vector.shape_cast %19 : vector<1x1x64x64xbf16> to vector<64x64xbf16>
    %cst_21 = arith.constant dense<0.000000e+00> : vector<32x64xf32>
    %21 = tpu.matmul %4, %20, %cst_21 {dimension_numbers = #tpu.dot_dimension_numbers<[1], [0], [0], [1], [0, 0, 1, 1], [], []>} : vector<32x64xbf16>, vector<64x64xbf16>, vector<32x64xf32> -> vector<32x64xf32>
    %c0_22 = arith.constant 0 : index
    %c2_23 = arith.constant 2 : index
    %c0_24 = arith.constant 0 : index
    %c0_25 = arith.constant 0 : index
    %22 = vector.load %arg9[%c0_22, %c2_23, %c0_24, %c0_25] : memref<1x3x1x64xf32, #tpu.memory_space<vmem>>, vector<1x1x1x64xf32>
    %23 = vector.shape_cast %22 : vector<1x1x1x64xf32> to vector<1x64xf32>
    %24 = vector.broadcast %23 : vector<1x64xf32> to vector<32x64xf32>
    %25 = arith.addf %21, %24 : vector<32x64xf32>
    %c16_i32 = arith.constant 16 : i32
    %26 = tpu.dynamic_rotate %18 by %c16_i32 dim 0 : vector<32x64xf32>, i32 -> vector<32x64xf32>
    %c16_i32_26 = arith.constant 16 : i32
    %27 = tpu.dynamic_rotate %25 by %c16_i32_26 dim 0 : vector<32x64xf32>, i32 -> vector<32x64xf32>
    %c0_27 = arith.constant 0 : index
    %c0_28 = arith.constant 0 : index
    %28 = vector.load %arg5[%c0_27, %c0_28] : memref<64x4xf32, #tpu.memory_space<vmem>>, vector<64x4xf32>
    %c0_29 = arith.constant 0 : index
    %c0_30 = arith.constant 0 : index
    %29 = vector.load %arg6[%c0_29, %c0_30] : memref<4x64xf32, #tpu.memory_space<vmem>>, vector<4x64xf32>
    %30 = arith.mulf %11, %18 : vector<32x64xf32>
    %cst_31 = arith.constant dense<0.000000e+00> : vector<32x4xf32>
    %31 = tpu.matmul %30, %28, %cst_31 {dimension_numbers = #tpu.dot_dimension_numbers<[1], [0], [0], [1], [0, 0, 1, 1], [], []>} : vector<32x64xf32>, vector<64x4xf32>, vector<32x4xf32> -> vector<32x4xf32>
    %cst_32 = arith.constant 2.500000e-01 : f32
    %32 = vector.broadcast %cst_32 : f32 to vector<32x4xf32>
    %33 = arith.mulf %32, %31 : vector<32x4xf32>
    %34 = arith.mulf %11, %26 : vector<32x64xf32>
    %cst_33 = arith.constant dense<0.000000e+00> : vector<32x4xf32>
    %35 = tpu.matmul %34, %28, %cst_33 {dimension_numbers = #tpu.dot_dimension_numbers<[1], [0], [0], [1], [0, 0, 1, 1], [], []>} : vector<32x64xf32>, vector<64x4xf32>, vector<32x4xf32> -> vector<32x4xf32>
    %cst_34 = arith.constant 2.500000e-01 : f32
    %36 = vector.broadcast %cst_34 : f32 to vector<32x4xf32>
    %37 = arith.mulf %36, %35 : vector<32x4xf32>
    %38 = arith.subf %37, %33 : vector<32x4xf32>
    %39 = math.exp %38 : vector<32x4xf32>
    %cst_35 = arith.constant 1.000000e+00 : f32
    %40 = vector.broadcast %cst_35 : f32 to vector<32x4xf32>
    %41 = arith.addf %40, %39 : vector<32x4xf32>
    %cst_36 = arith.constant 1.000000e+00 : f32
    %42 = vector.broadcast %cst_36 : f32 to vector<32x4xf32>
    %43 = arith.divf %42, %41 : vector<32x4xf32>
    %cst_37 = arith.constant dense<0.000000e+00> : vector<32x64xf32>
    %44 = tpu.matmul %43, %29, %cst_37 {dimension_numbers = #tpu.dot_dimension_numbers<[1], [0], [0], [1], [0, 0, 1, 1], [], []>} : vector<32x4xf32>, vector<4x64xf32>, vector<32x64xf32> -> vector<32x64xf32>
    %45 = arith.subf %25, %27 : vector<32x64xf32>
    %46 = arith.mulf %44, %45 : vector<32x64xf32>
    %47 = arith.addf %27, %46 : vector<32x64xf32>
    %48 = arith.truncf %47 : vector<32x64xf32> to vector<32x64xbf16>
    %c0_38 = arith.constant 0 : index
    %c0_39 = arith.constant 0 : index
    %c0_40 = arith.constant 0 : index
    %49 = vector.load %arg10[%c0_38, %c0_39, %c0_40] : memref<1x64x64xbf16, #tpu.memory_space<vmem>>, vector<1x64x64xbf16>
    %50 = vector.shape_cast %49 : vector<1x64x64xbf16> to vector<64x64xbf16>
    %cst_41 = arith.constant dense<0.000000e+00> : vector<32x64xf32>
    %51 = tpu.matmul %48, %50, %cst_41 {dimension_numbers = #tpu.dot_dimension_numbers<[1], [0], [0], [1], [0, 0, 1, 1], [], []>} : vector<32x64xbf16>, vector<64x64xbf16>, vector<32x64xf32> -> vector<32x64xf32>
    %c0_42 = arith.constant 0 : index
    %c0_43 = arith.constant 0 : index
    %c0_44 = arith.constant 0 : index
    %52 = vector.load %arg11[%c0_42, %c0_43, %c0_44] : memref<1x1x64xf32, #tpu.memory_space<vmem>>, vector<1x1x64xf32>
    %53 = vector.shape_cast %52 : vector<1x1x64xf32> to vector<1x64xf32>
    %54 = vector.broadcast %53 : vector<1x64xf32> to vector<32x64xf32>
    %55 = arith.addf %51, %54 : vector<32x64xf32>
    %56 = arith.addf %3, %55 : vector<32x64xf32>
    %c0_45 = arith.constant 0 : index
    %c0_46 = arith.constant 0 : index
    %c0_47 = arith.constant 0 : index
    %57 = vector.load %arg12[%c0_45, %c0_46, %c0_47] : memref<1x1x64xf32, #tpu.memory_space<vmem>>, vector<1x1x64xf32>
    %58 = vector.shape_cast %57 : vector<1x1x64xf32> to vector<1x64xf32>
    %c0_48 = arith.constant 0 : index
    %c0_49 = arith.constant 0 : index
    %c0_50 = arith.constant 0 : index
    %59 = vector.load %arg13[%c0_48, %c0_49, %c0_50] : memref<1x1x64xf32, #tpu.memory_space<vmem>>, vector<1x1x64xf32>
    %60 = vector.shape_cast %59 : vector<1x1x64xf32> to vector<1x64xf32>
    %cst_51 = arith.constant dense<0.000000e+00> : vector<32xf32>
    %61 = vector.multi_reduction <add>, %56, %cst_51 [1] : vector<32x64xf32> to vector<32xf32>
    %62 = vector.shape_cast %61 : vector<32xf32> to vector<32x1xf32>
    %cst_52 = arith.constant 6.400000e+01 : f32
    %63 = vector.broadcast %cst_52 : f32 to vector<32x1xf32>
    %64 = arith.divf %62, %63 : vector<32x1xf32>
    %65 = vector.broadcast %64 : vector<32x1xf32> to vector<32x64xf32>
    %66 = arith.subf %56, %65 : vector<32x64xf32>
    %67 = arith.mulf %66, %66 : vector<32x64xf32>
    %cst_53 = arith.constant dense<0.000000e+00> : vector<32xf32>
    %68 = vector.multi_reduction <add>, %67, %cst_53 [1] : vector<32x64xf32> to vector<32xf32>
    %69 = vector.shape_cast %68 : vector<32xf32> to vector<32x1xf32>
    %cst_54 = arith.constant 6.400000e+01 : f32
    %70 = vector.broadcast %cst_54 : f32 to vector<32x1xf32>
    %71 = arith.divf %69, %70 : vector<32x1xf32>
    %72 = vector.broadcast %64 : vector<32x1xf32> to vector<32x64xf32>
    %73 = arith.subf %56, %72 : vector<32x64xf32>
    %cst_55 = arith.constant 9.99999974E-6 : f32
    %74 = vector.broadcast %cst_55 : f32 to vector<32x1xf32>
    %75 = arith.addf %71, %74 : vector<32x1xf32>
    %76 = math.rsqrt %75 : vector<32x1xf32>
    %77 = vector.broadcast %76 : vector<32x1xf32> to vector<32x64xf32>
    %78 = arith.mulf %73, %77 : vector<32x64xf32>
    %79 = vector.broadcast %58 : vector<1x64xf32> to vector<32x64xf32>
    %80 = arith.mulf %78, %79 : vector<32x64xf32>
    %81 = vector.broadcast %60 : vector<1x64xf32> to vector<32x64xf32>
    %82 = arith.addf %80, %81 : vector<32x64xf32>
    %83 = arith.truncf %82 : vector<32x64xf32> to vector<32x64xbf16>
    %c0_56 = arith.constant 0 : index
    %c0_57 = arith.constant 0 : index
    %c0_58 = arith.constant 0 : index
    %84 = vector.load %arg14[%c0_56, %c0_57, %c0_58] : memref<1x64x2048xbf16, #tpu.memory_space<vmem>>, vector<1x64x2048xbf16>
    %85 = vector.shape_cast %84 : vector<1x64x2048xbf16> to vector<64x2048xbf16>
    %cst_59 = arith.constant dense<0.000000e+00> : vector<32x2048xf32>
    %86 = tpu.matmul %83, %85, %cst_59 {dimension_numbers = #tpu.dot_dimension_numbers<[1], [0], [0], [1], [0, 0, 1, 1], [], []>} : vector<32x64xbf16>, vector<64x2048xbf16>, vector<32x2048xf32> -> vector<32x2048xf32>
    %c0_60 = arith.constant 0 : index
    %c0_61 = arith.constant 0 : index
    %c0_62 = arith.constant 0 : index
    %87 = vector.load %arg15[%c0_60, %c0_61, %c0_62] : memref<1x1x2048xf32, #tpu.memory_space<vmem>>, vector<1x1x2048xf32>
    %88 = vector.shape_cast %87 : vector<1x1x2048xf32> to vector<1x2048xf32>
    %89 = vector.broadcast %88 : vector<1x2048xf32> to vector<32x2048xf32>
    %90 = arith.addf %86, %89 : vector<32x2048xf32>
    %cst_63 = arith.constant 0.000000e+00 : f32
    %91 = vector.broadcast %cst_63 : f32 to vector<32x2048xf32>
    %92 = arith.maximumf %90, %91 : vector<32x2048xf32>
    %93 = arith.truncf %92 : vector<32x2048xf32> to vector<32x2048xbf16>
    %c0_64 = arith.constant 0 : index
    %c0_65 = arith.constant 0 : index
    %c0_66 = arith.constant 0 : index
    %94 = vector.load %arg16[%c0_64, %c0_65, %c0_66] : memref<1x2048x64xbf16, #tpu.memory_space<vmem>>, vector<1x2048x64xbf16>
    %95 = vector.shape_cast %94 : vector<1x2048x64xbf16> to vector<2048x64xbf16>
    %cst_67 = arith.constant dense<0.000000e+00> : vector<32x64xf32>
    %96 = tpu.matmul %93, %95, %cst_67 {dimension_numbers = #tpu.dot_dimension_numbers<[1], [0], [0], [1], [0, 0, 1, 1], [], []>} : vector<32x2048xbf16>, vector<2048x64xbf16>, vector<32x64xf32> -> vector<32x64xf32>
    %c0_68 = arith.constant 0 : index
    %c0_69 = arith.constant 0 : index
    %c0_70 = arith.constant 0 : index
    %97 = vector.load %arg17[%c0_68, %c0_69, %c0_70] : memref<1x1x64xf32, #tpu.memory_space<vmem>>, vector<1x1x64xf32>
    %98 = vector.shape_cast %97 : vector<1x1x64xf32> to vector<1x64xf32>
    %99 = vector.broadcast %98 : vector<1x64xf32> to vector<32x64xf32>
    %100 = arith.addf %96, %99 : vector<32x64xf32>
    %101 = arith.addf %82, %100 : vector<32x64xf32>
    %c0_71 = arith.constant 0 : index
    %c0_72 = arith.constant 0 : index
    %c0_73 = arith.constant 0 : index
    %102 = vector.load %arg18[%c0_71, %c0_72, %c0_73] : memref<1x1x64xf32, #tpu.memory_space<vmem>>, vector<1x1x64xf32>
    %103 = vector.shape_cast %102 : vector<1x1x64xf32> to vector<1x64xf32>
    %c0_74 = arith.constant 0 : index
    %c0_75 = arith.constant 0 : index
    %c0_76 = arith.constant 0 : index
    %104 = vector.load %arg19[%c0_74, %c0_75, %c0_76] : memref<1x1x64xf32, #tpu.memory_space<vmem>>, vector<1x1x64xf32>
    %105 = vector.shape_cast %104 : vector<1x1x64xf32> to vector<1x64xf32>
    %cst_77 = arith.constant dense<0.000000e+00> : vector<32xf32>
    %106 = vector.multi_reduction <add>, %101, %cst_77 [1] : vector<32x64xf32> to vector<32xf32>
    %107 = vector.shape_cast %106 : vector<32xf32> to vector<32x1xf32>
    %cst_78 = arith.constant 6.400000e+01 : f32
    %108 = vector.broadcast %cst_78 : f32 to vector<32x1xf32>
    %109 = arith.divf %107, %108 : vector<32x1xf32>
    %110 = vector.broadcast %109 : vector<32x1xf32> to vector<32x64xf32>
    %111 = arith.subf %101, %110 : vector<32x64xf32>
    %112 = arith.mulf %111, %111 : vector<32x64xf32>
    %cst_79 = arith.constant dense<0.000000e+00> : vector<32xf32>
    %113 = vector.multi_reduction <add>, %112, %cst_79 [1] : vector<32x64xf32> to vector<32xf32>
    %114 = vector.shape_cast %113 : vector<32xf32> to vector<32x1xf32>
    %cst_80 = arith.constant 6.400000e+01 : f32
    %115 = vector.broadcast %cst_80 : f32 to vector<32x1xf32>
    %116 = arith.divf %114, %115 : vector<32x1xf32>
    %117 = vector.broadcast %109 : vector<32x1xf32> to vector<32x64xf32>
    %118 = arith.subf %101, %117 : vector<32x64xf32>
    %cst_81 = arith.constant 9.99999974E-6 : f32
    %119 = vector.broadcast %cst_81 : f32 to vector<32x1xf32>
    %120 = arith.addf %116, %119 : vector<32x1xf32>
    %121 = math.rsqrt %120 : vector<32x1xf32>
    %122 = vector.broadcast %121 : vector<32x1xf32> to vector<32x64xf32>
    %123 = arith.mulf %118, %122 : vector<32x64xf32>
    %124 = vector.broadcast %103 : vector<1x64xf32> to vector<32x64xf32>
    %125 = arith.mulf %123, %124 : vector<32x64xf32>
    %126 = vector.broadcast %105 : vector<1x64xf32> to vector<32x64xf32>
    %127 = arith.addf %125, %126 : vector<32x64xf32>
    %c0_82 = arith.constant 0 : index
    %c0_83 = arith.constant 0 : index
    %128 = vector.load %arg23[%c0_82, %c0_83] : memref<32x64xf32, #tpu.memory_space<vmem>>, vector<32x64xf32>
    tpu.vector_store %arg23[%c0_82, %c0_83], %127 {strides = array<i32>} : memref<32x64xf32, #tpu.memory_space<vmem>>, vector<32x64xf32>,
    %c2_i32 = arith.constant 2 : i32
    %129 = arith.cmpi eq, %arg0, %c2_i32 : i32
    %130 = arith.extui %129 : i1 to i32
    %c0_i32_84 = arith.constant 0 : i32
    %131 = arith.cmpi ne, %130, %c0_i32_84 : i32
    scf.if %131 {
      %c0_85 = arith.constant 0 : index
      %c0_86 = arith.constant 0 : index
      %132 = vector.load %arg7[%c0_85, %c0_86] : memref<2x32xf32, #tpu.memory_space<vmem>>, vector<2x32xf32>
      %cst_87 = arith.constant dense<0.000000e+00> : vector<2x64xf32>
      %133 = tpu.matmul %132, %127, %cst_87 {dimension_numbers = #tpu.dot_dimension_numbers<[1], [0], [0], [1], [0, 0, 1, 1], [], []>} : vector<2x32xf32>, vector<32x64xf32>, vector<2x64xf32> -> vector<2x64xf32>
      %c0_88 = arith.constant 0 : index
      %c0_89 = arith.constant 0 : index
      %134 = vector.load %arg20[%c0_88, %c0_89] : memref<64x32xf32, #tpu.memory_space<vmem>>, vector<64x32xf32>
      %cst_90 = arith.constant dense<0.000000e+00> : vector<2x32xf32>
      %135 = tpu.matmul %133, %134, %cst_90 {dimension_numbers = #tpu.dot_dimension_numbers<[1], [0], [0], [1], [0, 0, 1, 1], [], []>} : vector<2x64xf32>, vector<64x32xf32>, vector<2x32xf32> -> vector<2x32xf32>
      %c0_91 = arith.constant 0 : index
      %c0_92 = arith.constant 0 : index
      %136 = vector.load %arg21[%c0_91, %c0_92] : memref<1x32xf32, #tpu.memory_space<vmem>>, vector<1x32xf32>
      %137 = vector.broadcast %136 : vector<1x32xf32> to vector<2x32xf32>
      %138 = arith.addf %135, %137 : vector<2x32xf32>
      %c0_93 = arith.constant 0 : index
      %c0_94 = arith.constant 0 : index
      %139 = vector.load %arg22[%c0_93, %c0_94] : memref<2x32xf32, #tpu.memory_space<vmem>>, vector<2x32xf32>
      tpu.vector_store %arg22[%c0_93, %c0_94], %138 {strides = array<i32>} : memref<2x32xf32, #tpu.memory_space<vmem>>, vector<2x32xf32>,
    } else {
    }
    return
  }
  func.func @transform_0(%arg0: i32) -> (i32, i32) {
    %c0_i32 = arith.constant 0 : i32
    %c0_i32_0 = arith.constant 0 : i32
    %c0_i32_1 = arith.constant 0 : i32
    return %c0_i32, %c0_i32_0 : i32, i32
  }
  func.func @transform_1(%arg0: i32) -> (i32, i32) {
    %c0_i32 = arith.constant 0 : i32
    %c0_i32_0 = arith.constant 0 : i32
    %c0_i32_1 = arith.constant 0 : i32
    return %c0_i32, %c0_i32_0 : i32, i32
  }
  func.func @transform_2(%arg0: i32) -> (i32, i32) {
    %c0_i32 = arith.constant 0 : i32
    %c0_i32_0 = arith.constant 0 : i32
    %c0_i32_1 = arith.constant 0 : i32
    return %c0_i32, %c0_i32_0 : i32, i32
  }
  func.func @transform_3(%arg0: i32) -> (i32, i32) {
    %c0_i32 = arith.constant 0 : i32
    %c0_i32_0 = arith.constant 0 : i32
    %c0_i32_1 = arith.constant 0 : i32
    return %c0_i32, %c0_i32_0 : i32, i32
  }
  func.func @transform_4(%arg0: i32) -> (i32, i32) {
    %c0_i32 = arith.constant 0 : i32
    %c0_i32_0 = arith.constant 0 : i32
    %c0_i32_1 = arith.constant 0 : i32
    return %c0_i32, %c0_i32_0 : i32, i32
  }
  func.func @transform_5(%arg0: i32) -> (i32, i32) {
    %c0_i32 = arith.constant 0 : i32
    %c0_i32_0 = arith.constant 0 : i32
    %c0_i32_1 = arith.constant 0 : i32
    return %c0_i32, %c0_i32_0 : i32, i32
  }
  func.func @transform_6(%arg0: i32) -> (i32, i32) {
    %c0_i32 = arith.constant 0 : i32
    %c0_i32_0 = arith.constant 0 : i32
    %c0_i32_1 = arith.constant 0 : i32
    return %c0_i32, %c0_i32_0 : i32, i32
  }
  func.func @transform_7(%arg0: i32) -> (i32, i32, i32, i32) {
    %c0_i32 = arith.constant 0 : i32
    %c0_i32_0 = arith.constant 0 : i32
    %c0_i32_1 = arith.constant 0 : i32
    %c0_i32_2 = arith.constant 0 : i32
    return %arg0, %c0_i32, %c0_i32_0, %c0_i32_1 : i32, i32, i32, i32
  }
  func.func @transform_8(%arg0: i32) -> (i32, i32, i32, i32) {
    %c0_i32 = arith.constant 0 : i32
    %c0_i32_0 = arith.constant 0 : i32
    %c0_i32_1 = arith.constant 0 : i32
    %c0_i32_2 = arith.constant 0 : i32
    return %arg0, %c0_i32, %c0_i32_0, %c0_i32_1 : i32, i32, i32, i32
  }
  func.func @transform_9(%arg0: i32) -> (i32, i32, i32) {
    %c0_i32 = arith.constant 0 : i32
    %c0_i32_0 = arith.constant 0 : i32
    %c0_i32_1 = arith.constant 0 : i32
    return %arg0, %c0_i32, %c0_i32_0 : i32, i32, i32
  }
  func.func @transform_10(%arg0: i32) -> (i32, i32, i32) {
    %c0_i32 = arith.constant 0 : i32
    %c0_i32_0 = arith.constant 0 : i32
    %c0_i32_1 = arith.constant 0 : i32
    return %arg0, %c0_i32, %c0_i32_0 : i32, i32, i32
  }
  func.func @transform_11(%arg0: i32) -> (i32, i32, i32) {
    %c0_i32 = arith.constant 0 : i32
    %c0_i32_0 = arith.constant 0 : i32
    %c0_i32_1 = arith.constant 0 : i32
    return %arg0, %c0_i32, %c0_i32_0 : i32, i32, i32
  }
  func.func @transform_12(%arg0: i32) -> (i32, i32, i32) {
    %c0_i32 = arith.constant 0 : i32
    %c0_i32_0 = arith.constant 0 : i32
    %c0_i32_1 = arith.constant 0 : i32
    return %arg0, %c0_i32, %c0_i32_0 : i32, i32, i32
  }
  func.func @transform_13(%arg0: i32) -> (i32, i32, i32) {
    %c0_i32 = arith.constant 0 : i32
    %c0_i32_0 = arith.constant 0 : i32
    %c0_i32_1 = arith.constant 0 : i32
    return %arg0, %c0_i32, %c0_i32_0 : i32, i32, i32
  }
  func.func @transform_14(%arg0: i32) -> (i32, i32, i32) {
    %c0_i32 = arith.constant 0 : i32
    %c0_i32_0 = arith.constant 0 : i32
    %c0_i32_1 = arith.constant 0 : i32
    return %arg0, %c0_i32, %c0_i32_0 : i32, i32, i32
  }
  func.func @transform_15(%arg0: i32) -> (i32, i32, i32) {
    %c0_i32 = arith.constant 0 : i32
    %c0_i32_0 = arith.constant 0 : i32
    %c0_i32_1 = arith.constant 0 : i32
    return %arg0, %c0_i32, %c0_i32_0 : i32, i32, i32
  }
  func.func @transform_16(%arg0: i32) -> (i32, i32, i32) {
    %c0_i32 = arith.constant 0 : i32
    %c0_i32_0 = arith.constant 0 : i32
    %c0_i32_1 = arith.constant 0 : i32
    return %arg0, %c0_i32, %c0_i32_0 : i32, i32, i32
  }
  func.func @transform_17(%arg0: i32) -> (i32, i32, i32) {
    %c0_i32 = arith.constant 0 : i32
    %c0_i32_0 = arith.constant 0 : i32
    %c0_i32_1 = arith.constant 0 : i32
    return %arg0, %c0_i32, %c0_i32_0 : i32, i32, i32
  }
  func.func @transform_18(%arg0: i32) -> (i32, i32, i32) {
    %c0_i32 = arith.constant 0 : i32
    %c0_i32_0 = arith.constant 0 : i32
    %c0_i32_1 = arith.constant 0 : i32
    return %arg0, %c0_i32, %c0_i32_0 : i32, i32, i32
  }
  func.func @transform_19(%arg0: i32) -> (i32, i32) {
    %c0_i32 = arith.constant 0 : i32
    %c0_i32_0 = arith.constant 0 : i32
    %c0_i32_1 = arith.constant 0 : i32
    return %c0_i32, %c0_i32_0 : i32, i32
  }
  func.func @transform_20(%arg0: i32) -> (i32, i32) {
    %c0_i32 = arith.constant 0 : i32
    %c0_i32_0 = arith.constant 0 : i32
    %c0_i32_1 = arith.constant 0 : i32
    return %c0_i32, %c0_i32_0 : i32, i32
  }
  func.func @transform_21(%arg0: i32) -> (i32, i32) {
    %c0_i32 = arith.constant 0 : i32
    %c0_i32_0 = arith.constant 0 : i32
    %c0_i32_1 = arith.constant 0 : i32
    return %c0_i32, %c0_i32_0 : i32, i32
  }
}

</mosaic_0001>

<llo_original>
// kernel: vit_encoder_forward.1
$region0: #{vit_encoder_forward.1}
  #allocation0 [shape = 'u32[]', space=smem, size = 0x4, offset = 0x4, fixed_abs, tag = 'smem constant byte address 0x4 - core index']
  #allocation1 [shape = 'u32[144,128]{1,0:T(1,128)}', space=vmem, size = 0x12000, scoped, tag = 'internal scratch']
  #allocation2 [shape = 'f32[32,64]{1,0:T(8,128)}', space=vmem, size = 0x4000, scoped, tag = 'scratch operand']
  %s0 = inlined_call_operand.vmem [shape: f32[32,48], index: 0, kind: input, shape index: {}]
  %s1 = inlined_call_operand.vmem [shape: f32[48,64], index: 1, kind: input, shape index: {}]
  %s2 = inlined_call_operand.vmem [shape: f32[1,64], index: 2, kind: input, shape index: {}]
  %s3 = inlined_call_operand.vmem [shape: f32[32,64], index: 3, kind: input, shape index: {}]
  %s4 = inlined_call_operand.vmem [shape: f32[64,4], index: 4, kind: input, shape index: {}]
  %s5 = inlined_call_operand.vmem [shape: f32[4,64], index: 5, kind: input, shape index: {}]
  %s6 = inlined_call_operand.vmem [shape: f32[2,32], index: 6, kind: input, shape index: {}]
  %s7 = inlined_call_operand.vmem [shape: bf16[3,3,64,64], index: 7, kind: input, shape index: {}]
  %s8 = inlined_call_operand.vmem [shape: f32[3,3,1,64], index: 8, kind: input, shape index: {}]
  %s9 = inlined_call_operand.vmem [shape: bf16[3,64,64], index: 9, kind: input, shape index: {}]
  %s10 = inlined_call_operand.vmem [shape: f32[3,1,64], index: 10, kind: input, shape index: {}]
  %s11 = inlined_call_operand.vmem [shape: f32[3,1,64], index: 11, kind: input, shape index: {}]
  %s12 = inlined_call_operand.vmem [shape: f32[3,1,64], index: 12, kind: input, shape index: {}]
  %s13 = inlined_call_operand.vmem [shape: bf16[3,64,2048], index: 13, kind: input, shape index: {}]
  %s14 = inlined_call_operand.vmem [shape: f32[3,1,2048], index: 14, kind: input, shape index: {}]
  %s15 = inlined_call_operand.vmem [shape: bf16[3,2048,64], index: 15, kind: input, shape index: {}]
  %s16 = inlined_call_operand.vmem [shape: f32[3,1,64], index: 16, kind: input, shape index: {}]
  %s17 = inlined_call_operand.vmem [shape: f32[3,1,64], index: 17, kind: input, shape index: {}]
  %s18 = inlined_call_operand.vmem [shape: f32[3,1,64], index: 18, kind: input, shape index: {}]
  %s19 = inlined_call_operand.vmem [shape: f32[64,32], index: 19, kind: input, shape index: {}]
  %s20 = inlined_call_operand.vmem [shape: f32[1,32], index: 20, kind: input, shape index: {}]
  %s21 = inlined_call_operand.hbm [shape: f32[2,32], index: 21, kind: output, shape index: {}]
  %s22 = sld [smem:[#allocation0]]
  $region125: #{vit_encoder_forward.1} parent=0
    _
  %s24 = ssub.s32 1, %s22
  %s25 = scalar_select 0, %s24, %s22
  $region1: #{vit_encoder_forward.1} parent=0
    #allocation3 [shape = 'u8[1024]{0}', space=vmem, size = 0x400, scoped, tag = 'output window, operand 0, single buffered']
    #allocation4 [shape = 's32[2]{0}', space=sflag, size = 0x8, scoped, tag = 'scoped memory for vit_encoder_forward.1']
    %26 = vsyncpa [#allocation4], 0
    loop: start=0, step=1, limit=5
    $region2: #{vit_encoder_forward.1} parent=1 // loop_pre_header
      _
    $region3: #{vit_encoder_forward.1} parent=1 // loop_header
      %s28 = sphi 0, %s32
      %p29 = scmp.ge.s32.totalorder %s28, 5
      %s36 = sphi 0, %s36
      %s38 = sphi 0, %s36
      %s39 = sphi 0, %s38
      %s53 = sphi 0, %s39
      %s57 = sphi 0, %s57
      %s59 = sphi 0, %s57
      %s60 = sphi 0, %s59
      %s74 = sphi 0, %s60
      %s78 = sphi 0, %s78
      %s80 = sphi 0, %s78
      %s81 = sphi 0, %s80
      %s95 = sphi 0, %s81
      %s99 = sphi 0, %s99
      %s101 = sphi 0, %s99
      %s102 = sphi 0, %s101
      %s116 = sphi 0, %s102
      %s120 = sphi 0, %s120
      %s122 = sphi 0, %s120
      %s123 = sphi 0, %s122
      %s137 = sphi 0, %s123
      %s141 = sphi 0, %s141
      %s143 = sphi 0, %s141
      %s144 = sphi 0, %s143
      %s158 = sphi 0, %s144
      %s162 = sphi 0, %s162
      %s164 = sphi 0, %s162
      %s165 = sphi 0, %s164
      %s179 = sphi 0, %s165
      %s185 = sphi 0, %s187
      %s188 = sphi 0, %s185
      %s189 = sphi 0, %s188
      %s205 = sphi 0, %s189
      %s211 = sphi 0, %s213
      %s214 = sphi 0, %s211
      %s215 = sphi 0, %s214
      %s231 = sphi 0, %s215
      %s237 = sphi 0, %s239
      %s240 = sphi 0, %s237
      %s241 = sphi 0, %s240
      %s257 = sphi 0, %s241
      %s263 = sphi 0, %s265
      %s266 = sphi 0, %s263
      %s267 = sphi 0, %s266
      %s283 = sphi 0, %s267
      %s289 = sphi 0, %s291
      %s292 = sphi 0, %s289
      %s293 = sphi 0, %s292
      %s309 = sphi 0, %s293
      %s315 = sphi 0, %s317
      %s318 = sphi 0, %s315
      %s319 = sphi 0, %s318
      %s335 = sphi 0, %s319
      %s341 = sphi 0, %s343
      %s344 = sphi 0, %s341
      %s345 = sphi 0, %s344
      %s361 = sphi 0, %s345
      %s367 = sphi 0, %s369
      %s370 = sphi 0, %s367
      %s371 = sphi 0, %s370
      %s387 = sphi 0, %s371
      %s393 = sphi 0, %s395
      %s396 = sphi 0, %s393
      %s397 = sphi 0, %s396
      %s413 = sphi 0, %s397
      %s419 = sphi 0, %s421
      %s422 = sphi 0, %s419
      %s423 = sphi 0, %s422
      %s439 = sphi 0, %s423
      %s445 = sphi 0, %s447
      %s448 = sphi 0, %s445
      %s449 = sphi 0, %s448
      %s465 = sphi 0, %s449
      %s471 = sphi 0, %s473
      %s474 = sphi 0, %s471
      %s475 = sphi 0, %s474
      %s491 = sphi 0, %s475
      %s495 = sphi 0, %s495
      %s497 = sphi 0, %s495
      %s498 = sphi 0, %s497
      %s512 = sphi 0, %s498
      %s516 = sphi 0, %s516
      %s518 = sphi 0, %s516
      %s519 = sphi 0, %s518
      %s533 = sphi 0, %s519
      %s537 = sphi 0, %s537
      %s539 = sphi 0, %s537
      %s540 = sphi 0, %s539
      %s554 = sphi 0, %s540
    $region4: #{vit_encoder_forward.1} parent=1 // loop_header_branch
      %31 = sbr.rel (%p29) target = $region8
    $region5: #{vit_encoder_forward.1} parent=1 // loop_body
      %s33 = ssub.s32 %s28, 1
      %s34 = ssub.s32 %s28, 2
      %s35 = sadd.s32 %s28, 1
      %s37 = sadd.s32 %s36, 1
      %p40 = scmp.eq.s32.totalorder %s28, 2
      %p41 = scmp.ne.s32.totalorder %s36, %s38
      %p42 = scmp.eq.s32.totalorder %s28, 0
      %p43 = por %p41, %p42
      %p44 = scmp.ne.s32.totalorder %s36, %s38
      %p45 = scmp.eq.s32.totalorder %s33, 2
      %p46 = por %p44, %p45
      %p47 = scmp.ne.s32.totalorder %s38, %s39
      %p48 = scmp.eq.s32.totalorder %s33, 0
      %p49 = por %p47, %p48
      %p50 = scmp.ne.s32.totalorder %s38, %s39
      %p51 = scmp.eq.s32.totalorder %s34, 2
      %p52 = por %p50, %p51
      %p54 = scmp.ne.s32.totalorder %s39, %s53
      %p55 = scmp.eq.s32.totalorder %s34, 0
      %p56 = por %p54, %p55
      %s58 = sadd.s32 %s57, 1
      %p61 = scmp.eq.s32.totalorder %s28, 2
      %p62 = scmp.ne.s32.totalorder %s57, %s59
      %p63 = scmp.eq.s32.totalorder %s28, 0
      %p64 = por %p62, %p63
      %p65 = scmp.ne.s32.totalorder %s57, %s59
      %p66 = scmp.eq.s32.totalorder %s33, 2
      %p67 = por %p65, %p66
      %p68 = scmp.ne.s32.totalorder %s59, %s60
      %p69 = scmp.eq.s32.totalorder %s33, 0
      %p70 = por %p68, %p69
      %p71 = scmp.ne.s32.totalorder %s59, %s60
      %p72 = scmp.eq.s32.totalorder %s34, 2
      %p73 = por %p71, %p72
      %p75 = scmp.ne.s32.totalorder %s60, %s74
      %p76 = scmp.eq.s32.totalorder %s34, 0
      %p77 = por %p75, %p76
      %s79 = sadd.s32 %s78, 1
      %p82 = scmp.eq.s32.totalorder %s28, 2
      %p83 = scmp.ne.s32.totalorder %s78, %s80
      %p84 = scmp.eq.s32.totalorder %s28, 0
      %p85 = por %p83, %p84
      %p86 = scmp.ne.s32.totalorder %s78, %s80
      %p87 = scmp.eq.s32.totalorder %s33, 2
      %p88 = por %p86, %p87
      %p89 = scmp.ne.s32.totalorder %s80, %s81
      %p90 = scmp.eq.s32.totalorder %s33, 0
      %p91 = por %p89, %p90
      %p92 = scmp.ne.s32.totalorder %s80, %s81
      %p93 = scmp.eq.s32.totalorder %s34, 2
      %p94 = por %p92, %p93
      %p96 = scmp.ne.s32.totalorder %s81, %s95
      %p97 = scmp.eq.s32.totalorder %s34, 0
      %p98 = por %p96, %p97
      %s100 = sadd.s32 %s99, 1
      %p103 = scmp.eq.s32.totalorder %s28, 2
      %p104 = scmp.ne.s32.totalorder %s99, %s101
      %p105 = scmp.eq.s32.totalorder %s28, 0
      %p106 = por %p104, %p105
      %p107 = scmp.ne.s32.totalorder %s99, %s101
      %p108 = scmp.eq.s32.totalorder %s33, 2
      %p109 = por %p107, %p108
      %p110 = scmp.ne.s32.totalorder %s101, %s102
      %p111 = scmp.eq.s32.totalorder %s33, 0
      %p112 = por %p110, %p111
      %p113 = scmp.ne.s32.totalorder %s101, %s102
      %p114 = scmp.eq.s32.totalorder %s34, 2
      %p115 = por %p113, %p114
      %p117 = scmp.ne.s32.totalorder %s102, %s116
      %p118 = scmp.eq.s32.totalorder %s34, 0
      %p119 = por %p117, %p118
      %s121 = sadd.s32 %s120, 1
      %p124 = scmp.eq.s32.totalorder %s28, 2
      %p125 = scmp.ne.s32.totalorder %s120, %s122
      %p126 = scmp.eq.s32.totalorder %s28, 0
      %p127 = por %p125, %p126
      %p128 = scmp.ne.s32.totalorder %s120, %s122
      %p129 = scmp.eq.s32.totalorder %s33, 2
      %p130 = por %p128, %p129
      %p131 = scmp.ne.s32.totalorder %s122, %s123
      %p132 = scmp.eq.s32.totalorder %s33, 0
      %p133 = por %p131, %p132
      %p134 = scmp.ne.s32.totalorder %s122, %s123
      %p135 = scmp.eq.s32.totalorder %s34, 2
      %p136 = por %p134, %p135
      %p138 = scmp.ne.s32.totalorder %s123, %s137
      %p139 = scmp.eq.s32.totalorder %s34, 0
      %p140 = por %p138, %p139
      %s142 = sadd.s32 %s141, 1
      %p145 = scmp.eq.s32.totalorder %s28, 2
      %p146 = scmp.ne.s32.totalorder %s141, %s143
      %p147 = scmp.eq.s32.totalorder %s28, 0
      %p148 = por %p146, %p147
      %p149 = scmp.ne.s32.totalorder %s141, %s143
      %p150 = scmp.eq.s32.totalorder %s33, 2
      %p151 = por %p149, %p150
      %p152 = scmp.ne.s32.totalorder %s143, %s144
      %p153 = scmp.eq.s32.totalorder %s33, 0
      %p154 = por %p152, %p153
      %p155 = scmp.ne.s32.totalorder %s143, %s144
      %p156 = scmp.eq.s32.totalorder %s34, 2
      %p157 = por %p155, %p156
      %p159 = scmp.ne.s32.totalorder %s144, %s158
      %p160 = scmp.eq.s32.totalorder %s34, 0
      %p161 = por %p159, %p160
      %s163 = sadd.s32 %s162, 1
      %p166 = scmp.eq.s32.totalorder %s28, 2
      %p167 = scmp.ne.s32.totalorder %s162, %s164
      %p168 = scmp.eq.s32.totalorder %s28, 0
      %p169 = por %p167, %p168
      %p170 = scmp.ne.s32.totalorder %s162, %s164
      %p171 = scmp.eq.s32.totalorder %s33, 2
      %p172 = por %p170, %p171
      %p173 = scmp.ne.s32.totalorder %s164, %s165
      %p174 = scmp.eq.s32.totalorder %s33, 0
      %p175 = por %p173, %p174
      %p176 = scmp.ne.s32.totalorder %s164, %s165
      %p177 = scmp.eq.s32.totalorder %s34, 2
      %p178 = por %p176, %p177
      %p180 = scmp.ne.s32.totalorder %s165, %s179
      %p181 = scmp.eq.s32.totalorder %s34, 0
      %p182 = por %p180, %p181
      %s183 = ssub.s32 %s28, %s35
      %p184 = scmp.eq.s32.totalorder %s183, 0
      %s186 = sadd.s32 %s185, 1
      %s187 = scalar_select %p184, %s185, %s186
      %p190 = pneg %p184
      %p191 = scmp.eq.s32.totalorder %s28, 2
      %p192 = por %p190, %p191
      %p193 = scmp.ne.s32.totalorder %s185, %s188
      %p194 = scmp.eq.s32.totalorder %s28, 0
      %p195 = por %p193, %p194
      %p196 = scmp.ne.s32.totalorder %s185, %s188
      %p197 = scmp.eq.s32.totalorder %s33, 2
      %p198 = por %p196, %p197
      %p199 = scmp.ne.s32.totalorder %s188, %s189
      %p200 = scmp.eq.s32.totalorder %s33, 0
      %p201 = por %p199, %p200
      %p202 = scmp.ne.s32.totalorder %s188, %s189
      %p203 = scmp.eq.s32.totalorder %s34, 2
      %p204 = por %p202, %p203
      %p206 = scmp.ne.s32.totalorder %s189, %s205
      %p207 = scmp.eq.s32.totalorder %s34, 0
      %p208 = por %p206, %p207
      %s209 = ssub.s32 %s28, %s35
      %p210 = scmp.eq.s32.totalorder %s209, 0
      %s212 = sadd.s32 %s211, 1
      %s213 = scalar_select %p210, %s211, %s212
      %p216 = pneg %p210
      %p217 = scmp.eq.s32.totalorder %s28, 2
      %p218 = por %p216, %p217
      %p219 = scmp.ne.s32.totalorder %s211, %s214
      %p220 = scmp.eq.s32.totalorder %s28, 0
      %p221 = por %p219, %p220
      %p222 = scmp.ne.s32.totalorder %s211, %s214
      %p223 = scmp.eq.s32.totalorder %s33, 2
      %p224 = por %p222, %p223
      %p225 = scmp.ne.s32.totalorder %s214, %s215
      %p226 = scmp.eq.s32.totalorder %s33, 0
      %p227 = por %p225, %p226
      %p228 = scmp.ne.s32.totalorder %s214, %s215
      %p229 = scmp.eq.s32.totalorder %s34, 2
      %p230 = por %p228, %p229
      %p232 = scmp.ne.s32.totalorder %s215, %s231
      %p233 = scmp.eq.s32.totalorder %s34, 0
      %p234 = por %p232, %p233
      %s235 = ssub.s32 %s28, %s35
      %p236 = scmp.eq.s32.totalorder %s235, 0
      %s238 = sadd.s32 %s237, 1
      %s239 = scalar_select %p236, %s237, %s238
      %p242 = pneg %p236
      %p243 = scmp.eq.s32.totalorder %s28, 2
      %p244 = por %p242, %p243
      %p245 = scmp.ne.s32.totalorder %s237, %s240
      %p246 = scmp.eq.s32.totalorder %s28, 0
      %p247 = por %p245, %p246
      %p248 = scmp.ne.s32.totalorder %s237, %s240
      %p249 = scmp.eq.s32.totalorder %s33, 2
      %p250 = por %p248, %p249
      %p251 = scmp.ne.s32.totalorder %s240, %s241
      %p252 = scmp.eq.s32.totalorder %s33, 0
      %p253 = por %p251, %p252
      %p254 = scmp.ne.s32.totalorder %s240, %s241
      %p255 = scmp.eq.s32.totalorder %s34, 2
      %p256 = por %p254, %p255
      %p258 = scmp.ne.s32.totalorder %s241, %s257
      %p259 = scmp.eq.s32.totalorder %s34, 0
      %p260 = por %p258, %p259
      %s261 = ssub.s32 %s28, %s35
      %p262 = scmp.eq.s32.totalorder %s261, 0
      %s264 = sadd.s32 %s263, 1
      %s265 = scalar_select %p262, %s263, %s264
      %p268 = pneg %p262
      %p269 = scmp.eq.s32.totalorder %s28, 2
      %p270 = por %p268, %p269
      %p271 = scmp.ne.s32.totalorder %s263, %s266
      %p272 = scmp.eq.s32.totalorder %s28, 0
      %p273 = por %p271, %p272
      %p274 = scmp.ne.s32.totalorder %s263, %s266
      %p275 = scmp.eq.s32.totalorder %s33, 2
      %p276 = por %p274, %p275
      %p277 = scmp.ne.s32.totalorder %s266, %s267
      %p278 = scmp.eq.s32.totalorder %s33, 0
      %p279 = por %p277, %p278
      %p280 = scmp.ne.s32.totalorder %s266, %s267
      %p281 = scmp.eq.s32.totalorder %s34, 2
      %p282 = por %p280, %p281
      %p284 = scmp.ne.s32.totalorder %s267, %s283
      %p285 = scmp.eq.s32.totalorder %s34, 0
      %p286 = por %p284, %p285
      %s287 = ssub.s32 %s28, %s35
      %p288 = scmp.eq.s32.totalorder %s287, 0
      %s290 = sadd.s32 %s289, 1
      %s291 = scalar_select %p288, %s289, %s290
      %p294 = pneg %p288
      %p295 = scmp.eq.s32.totalorder %s28, 2
      %p296 = por %p294, %p295
      %p297 = scmp.ne.s32.totalorder %s289, %s292
      %p298 = scmp.eq.s32.totalorder %s28, 0
      %p299 = por %p297, %p298
      %p300 = scmp.ne.s32.totalorder %s289, %s292
      %p301 = scmp.eq.s32.totalorder %s33, 2
      %p302 = por %p300, %p301
      %p303 = scmp.ne.s32.totalorder %s292, %s293
      %p304 = scmp.eq.s32.totalorder %s33, 0
      %p305 = por %p303, %p304
      %p306 = scmp.ne.s32.totalorder %s292, %s293
      %p307 = scmp.eq.s32.totalorder %s34, 2
      %p308 = por %p306, %p307
      %p310 = scmp.ne.s32.totalorder %s293, %s309
      %p311 = scmp.eq.s32.totalorder %s34, 0
      %p312 = por %p310, %p311
      %s313 = ssub.s32 %s28, %s35
      %p314 = scmp.eq.s32.totalorder %s313, 0
      %s316 = sadd.s32 %s315, 1
      %s317 = scalar_select %p314, %s315, %s316
      %p320 = pneg %p314
      %p321 = scmp.eq.s32.totalorder %s28, 2
      %p322 = por %p320, %p321
      %p323 = scmp.ne.s32.totalorder %s315, %s318
      %p324 = scmp.eq.s32.totalorder %s28, 0
      %p325 = por %p323, %p324
      %p326 = scmp.ne.s32.totalorder %s315, %s318
      %p327 = scmp.eq.s32.totalorder %s33, 2
      %p328 = por %p326, %p327
      %p329 = scmp.ne.s32.totalorder %s318, %s319
      %p330 = scmp.eq.s32.totalorder %s33, 0
      %p331 = por %p329, %p330
      %p332 = scmp.ne.s32.totalorder %s318, %s319
      %p333 = scmp.eq.s32.totalorder %s34, 2
      %p334 = por %p332, %p333
      %p336 = scmp.ne.s32.totalorder %s319, %s335
      %p337 = scmp.eq.s32.totalorder %s34, 0
      %p338 = por %p336, %p337
      %s339 = ssub.s32 %s28, %s35
      %p340 = scmp.eq.s32.totalorder %s339, 0
      %s342 = sadd.s32 %s341, 1
      %s343 = scalar_select %p340, %s341, %s342
      %p346 = pneg %p340
      %p347 = scmp.eq.s32.totalorder %s28, 2
      %p348 = por %p346, %p347
      %p349 = scmp.ne.s32.totalorder %s341, %s344
      %p350 = scmp.eq.s32.totalorder %s28, 0
      %p351 = por %p349, %p350
      %p352 = scmp.ne.s32.totalorder %s341, %s344
      %p353 = scmp.eq.s32.totalorder %s33, 2
      %p354 = por %p352, %p353
      %p355 = scmp.ne.s32.totalorder %s344, %s345
      %p356 = scmp.eq.s32.totalorder %s33, 0
      %p357 = por %p355, %p356
      %p358 = scmp.ne.s32.totalorder %s344, %s345
      %p359 = scmp.eq.s32.totalorder %s34, 2
      %p360 = por %p358, %p359
      %p362 = scmp.ne.s32.totalorder %s345, %s361
      %p363 = scmp.eq.s32.totalorder %s34, 0
      %p364 = por %p362, %p363
      %s365 = ssub.s32 %s28, %s35
      %p366 = scmp.eq.s32.totalorder %s365, 0
      %s368 = sadd.s32 %s367, 1
      %s369 = scalar_select %p366, %s367, %s368
      %p372 = pneg %p366
      %p373 = scmp.eq.s32.totalorder %s28, 2
      %p374 = por %p372, %p373
      %p375 = scmp.ne.s32.totalorder %s367, %s370
      %p376 = scmp.eq.s32.totalorder %s28, 0
      %p377 = por %p375, %p376
      %p378 = scmp.ne.s32.totalorder %s367, %s370
      %p379 = scmp.eq.s32.totalorder %s33, 2
      %p380 = por %p378, %p379
      %p381 = scmp.ne.s32.totalorder %s370, %s371
      %p382 = scmp.eq.s32.totalorder %s33, 0
      %p383 = por %p381, %p382
      %p384 = scmp.ne.s32.totalorder %s370, %s371
      %p385 = scmp.eq.s32.totalorder %s34, 2
      %p386 = por %p384, %p385
      %p388 = scmp.ne.s32.totalorder %s371, %s387
      %p389 = scmp.eq.s32.totalorder %s34, 0
      %p390 = por %p388, %p389
      %s391 = ssub.s32 %s28, %s35
      %p392 = scmp.eq.s32.totalorder %s391, 0
      %s394 = sadd.s32 %s393, 1
      %s395 = scalar_select %p392, %s393, %s394
      %p398 = pneg %p392
      %p399 = scmp.eq.s32.totalorder %s28, 2
      %p400 = por %p398, %p399
      %p401 = scmp.ne.s32.totalorder %s393, %s396
      %p402 = scmp.eq.s32.totalorder %s28, 0
      %p403 = por %p401, %p402
      %p404 = scmp.ne.s32.totalorder %s393, %s396
      %p405 = scmp.eq.s32.totalorder %s33, 2
      %p406 = por %p404, %p405
      %p407 = scmp.ne.s32.totalorder %s396, %s397
      %p408 = scmp.eq.s32.totalorder %s33, 0
      %p409 = por %p407, %p408
      %p410 = scmp.ne.s32.totalorder %s396, %s397
      %p411 = scmp.eq.s32.totalorder %s34, 2
      %p412 = por %p410, %p411
      %p414 = scmp.ne.s32.totalorder %s397, %s413
      %p415 = scmp.eq.s32.totalorder %s34, 0
      %p416 = por %p414, %p415
      %s417 = ssub.s32 %s28, %s35
      %p418 = scmp.eq.s32.totalorder %s417, 0
      %s420 = sadd.s32 %s419, 1
      %s421 = scalar_select %p418, %s419, %s420
      %p424 = pneg %p418
      %p425 = scmp.eq.s32.totalorder %s28, 2
      %p426 = por %p424, %p425
      %p427 = scmp.ne.s32.totalorder %s419, %s422
      %p428 = scmp.eq.s32.totalorder %s28, 0
      %p429 = por %p427, %p428
      %p430 = scmp.ne.s32.totalorder %s419, %s422
      %p431 = scmp.eq.s32.totalorder %s33, 2
      %p432 = por %p430, %p431
      %p433 = scmp.ne.s32.totalorder %s422, %s423
      %p434 = scmp.eq.s32.totalorder %s33, 0
      %p435 = por %p433, %p434
      %p436 = scmp.ne.s32.totalorder %s422, %s423
      %p437 = scmp.eq.s32.totalorder %s34, 2
      %p438 = por %p436, %p437
      %p440 = scmp.ne.s32.totalorder %s423, %s439
      %p441 = scmp.eq.s32.totalorder %s34, 0
      %p442 = por %p440, %p441
      %s443 = ssub.s32 %s28, %s35
      %p444 = scmp.eq.s32.totalorder %s443, 0
      %s446 = sadd.s32 %s445, 1
      %s447 = scalar_select %p444, %s445, %s446
      %p450 = pneg %p444
      %p451 = scmp.eq.s32.totalorder %s28, 2
      %p452 = por %p450, %p451
      %p453 = scmp.ne.s32.totalorder %s445, %s448
      %p454 = scmp.eq.s32.totalorder %s28, 0
      %p455 = por %p453, %p454
      %p456 = scmp.ne.s32.totalorder %s445, %s448
      %p457 = scmp.eq.s32.totalorder %s33, 2
      %p458 = por %p456, %p457
      %p459 = scmp.ne.s32.totalorder %s448, %s449
      %p460 = scmp.eq.s32.totalorder %s33, 0
      %p461 = por %p459, %p460
      %p462 = scmp.ne.s32.totalorder %s448, %s449
      %p463 = scmp.eq.s32.totalorder %s34, 2
      %p464 = por %p462, %p463
      %p466 = scmp.ne.s32.totalorder %s449, %s465
      %p467 = scmp.eq.s32.totalorder %s34, 0
      %p468 = por %p466, %p467
      %s469 = ssub.s32 %s28, %s35
      %p470 = scmp.eq.s32.totalorder %s469, 0
      %s472 = sadd.s32 %s471, 1
      %s473 = scalar_select %p470, %s471, %s472
      %p476 = pneg %p470
      %p477 = scmp.eq.s32.totalorder %s28, 2
      %p478 = por %p476, %p477
      %p479 = scmp.ne.s32.totalorder %s471, %s474
      %p480 = scmp.eq.s32.totalorder %s28, 0
      %p481 = por %p479, %p480
      %p482 = scmp.ne.s32.totalorder %s471, %s474
      %p483 = scmp.eq.s32.totalorder %s33, 2
      %p484 = por %p482, %p483
      %p485 = scmp.ne.s32.totalorder %s474, %s475
      %p486 = scmp.eq.s32.totalorder %s33, 0
      %p487 = por %p485, %p486
      %p488 = scmp.ne.s32.totalorder %s474, %s475
      %p489 = scmp.eq.s32.totalorder %s34, 2
      %p490 = por %p488, %p489
      %p492 = scmp.ne.s32.totalorder %s475, %s491
      %p493 = scmp.eq.s32.totalorder %s34, 0
      %p494 = por %p492, %p493
      %s496 = sadd.s32 %s495, 1
      %p499 = scmp.eq.s32.totalorder %s28, 2
      %p500 = scmp.ne.s32.totalorder %s495, %s497
      %p501 = scmp.eq.s32.totalorder %s28, 0
      %p502 = por %p500, %p501
      %p503 = scmp.ne.s32.totalorder %s495, %s497
      %p504 = scmp.eq.s32.totalorder %s33, 2
      %p505 = por %p503, %p504
      %p506 = scmp.ne.s32.totalorder %s497, %s498
      %p507 = scmp.eq.s32.totalorder %s33, 0
      %p508 = por %p506, %p507
      %p509 = scmp.ne.s32.totalorder %s497, %s498
      %p510 = scmp.eq.s32.totalorder %s34, 2
      %p511 = por %p509, %p510
      %p513 = scmp.ne.s32.totalorder %s498, %s512
      %p514 = scmp.eq.s32.totalorder %s34, 0
      %p515 = por %p513, %p514
      %s517 = sadd.s32 %s516, 1
      %p520 = scmp.eq.s32.totalorder %s28, 2
      %p521 = scmp.ne.s32.totalorder %s516, %s518
      %p522 = scmp.eq.s32.totalorder %s28, 0
      %p523 = por %p521, %p522
      %p524 = scmp.ne.s32.totalorder %s516, %s518
      %p525 = scmp.eq.s32.totalorder %s33, 2
      %p526 = por %p524, %p525
      %p527 = scmp.ne.s32.totalorder %s518, %s519
      %p528 = scmp.eq.s32.totalorder %s33, 0
      %p529 = por %p527, %p528
      %p530 = scmp.ne.s32.totalorder %s518, %s519
      %p531 = scmp.eq.s32.totalorder %s34, 2
      %p532 = por %p530, %p531
      %p534 = scmp.ne.s32.totalorder %s519, %s533
      %p535 = scmp.eq.s32.totalorder %s34, 0
      %p536 = por %p534, %p535
      %s538 = sadd.s32 %s537, 1
      %p541 = scmp.eq.s32.totalorder %s28, 2
      %p542 = scmp.ne.s32.totalorder %s537, %s539
      %p543 = scmp.eq.s32.totalorder %s28, 0
      %p544 = por %p542, %p543
      %p545 = scmp.ne.s32.totalorder %s537, %s539
      %p546 = scmp.eq.s32.totalorder %s33, 2
      %p547 = por %p545, %p546
      %p548 = scmp.ne.s32.totalorder %s539, %s540
      %p549 = scmp.eq.s32.totalorder %s33, 0
      %p550 = por %p548, %p549
      %p551 = scmp.ne.s32.totalorder %s539, %s540
      %p552 = scmp.eq.s32.totalorder %s34, 2
      %p553 = por %p551, %p552
      %p555 = scmp.ne.s32.totalorder %s540, %s554
      %p556 = scmp.eq.s32.totalorder %s34, 0
      %p557 = por %p555, %p556
      %p558 = scmp.le.s32.totalorder 1, %s28
      %p559 = scmp.lt.s32.totalorder %s28, 4
      %p560 = pnand %p558, %p559
      %p561 = pneg %p560
      // Predicated region
      $region9: #{vit_encoder_forward.1} parent=5 // pred_check
        _
      $region10: #{vit_encoder_forward.1} parent=5 // pred_check_branch
        %563 = sbr.rel (%p560) target = $region12
      $region11: #{vit_encoder_forward.1} parent=5 // pred_region
        %s564 = ssub.s32 %s28, 1
        // Predicated region
        $region13: #{vit_encoder_forward.1} parent=11 // pred_check
          %p565 = pneg %p49
        $region14: #{vit_encoder_forward.1} parent=11 // pred_check_branch
          %567 = sbr.rel (%p565) target = $region16
        $region15: #{vit_encoder_forward.1} parent=11 // pred_region
          _
        $region16: #{vit_encoder_forward.1} parent=11 // pred_fallthru
          _
        // Predicated region
        $region17: #{vit_encoder_forward.1} parent=11 // pred_check
          %p568 = pneg %p70
        $region18: #{vit_encoder_forward.1} parent=11 // pred_check_branch
          %570 = sbr.rel (%p568) target = $region20
        $region19: #{vit_encoder_forward.1} parent=11 // pred_region
          _
        $region20: #{vit_encoder_forward.1} parent=11 // pred_fallthru
          _
        // Predicated region
        $region21: #{vit_encoder_forward.1} parent=11 // pred_check
          %p571 = pneg %p91
        $region22: #{vit_encoder_forward.1} parent=11 // pred_check_branch
          %573 = sbr.rel (%p571) target = $region24
        $region23: #{vit_encoder_forward.1} parent=11 // pred_region
          _
        $region24: #{vit_encoder_forward.1} parent=11 // pred_fallthru
          _
        // Predicated region
        $region25: #{vit_encoder_forward.1} parent=11 // pred_check
          %p574 = pneg %p112
        $region26: #{vit_encoder_forward.1} parent=11 // pred_check_branch
          %576 = sbr.rel (%p574) target = $region28
        $region27: #{vit_encoder_forward.1} parent=11 // pred_region
          _
        $region28: #{vit_encoder_forward.1} parent=11 // pred_fallthru
          _
        // Predicated region
        $region29: #{vit_encoder_forward.1} parent=11 // pred_check
          %p577 = pneg %p133
        $region30: #{vit_encoder_forward.1} parent=11 // pred_check_branch
          %579 = sbr.rel (%p577) target = $region32
        $region31: #{vit_encoder_forward.1} parent=11 // pred_region
          _
        $region32: #{vit_encoder_forward.1} parent=11 // pred_fallthru
          _
        // Predicated region
        $region33: #{vit_encoder_forward.1} parent=11 // pred_check
          %p580 = pneg %p154
        $region34: #{vit_encoder_forward.1} parent=11 // pred_check_branch
          %582 = sbr.rel (%p580) target = $region36
        $region35: #{vit_encoder_forward.1} parent=11 // pred_region
          _
        $region36: #{vit_encoder_forward.1} parent=11 // pred_fallthru
          _
        // Predicated region
        $region37: #{vit_encoder_forward.1} parent=11 // pred_check
          %p583 = pneg %p175
        $region38: #{vit_encoder_forward.1} parent=11 // pred_check_branch
          %585 = sbr.rel (%p583) target = $region40
        $region39: #{vit_encoder_forward.1} parent=11 // pred_region
          _
        $region40: #{vit_encoder_forward.1} parent=11 // pred_fallthru
          _
        // Predicated region
        $region41: #{vit_encoder_forward.1} parent=11 // pred_check
          %p586 = pneg %p508
        $region42: #{vit_encoder_forward.1} parent=11 // pred_check_branch
          %588 = sbr.rel (%p586) target = $region44
        $region43: #{vit_encoder_forward.1} parent=11 // pred_region
          _
        $region44: #{vit_encoder_forward.1} parent=11 // pred_fallthru
          _
        // Predicated region
        $region45: #{vit_encoder_forward.1} parent=11 // pred_check
          %p589 = pneg %p529
        $region46: #{vit_encoder_forward.1} parent=11 // pred_check_branch
          %591 = sbr.rel (%p589) target = $region48
        $region47: #{vit_encoder_forward.1} parent=11 // pred_region
          _
        $region48: #{vit_encoder_forward.1} parent=11 // pred_fallthru
          _
      $region12: #{vit_encoder_forward.1} parent=5 // pred_fallthru
        _
      %p592 = scmp.lt.s32.totalorder %s28, 3
      // Predicated region
      $region49: #{vit_encoder_forward.1} parent=5 // pred_check
        %p593 = pneg %p592
      $region50: #{vit_encoder_forward.1} parent=5 // pred_check_branch
        %595 = sbr.rel (%p593) target = $region52
      $region51: #{vit_encoder_forward.1} parent=5 // pred_region
        // Predicated region
        $region53: #{vit_encoder_forward.1} parent=51 // pred_check
          %p596 = pneg %p195
        $region54: #{vit_encoder_forward.1} parent=51 // pred_check_branch
          %598 = sbr.rel (%p596) target = $region56
        $region55: #{vit_encoder_forward.1} parent=51 // pred_region
          %p599 = scmp.lt.s32.totalorder %s28, 2
          %s600 = scalar_select %p599, %s28, 2
          %s601 = smul.addr %s600, 24
          %s602 = smul.addr %s601, 4
          %s603 = scalar_lea.vmem %s7, %s602
        $region56: #{vit_encoder_forward.1} parent=51 // pred_fallthru
          _
        // Predicated region
        $region57: #{vit_encoder_forward.1} parent=51 // pred_check
          %p604 = pneg %p221
        $region58: #{vit_encoder_forward.1} parent=51 // pred_check_branch
          %606 = sbr.rel (%p604) target = $region60
        $region59: #{vit_encoder_forward.1} parent=51 // pred_region
          %p607 = scmp.lt.s32.totalorder %s28, 2
          %s608 = scalar_select %p607, %s28, 2
          %s609 = smul.addr %s608, 3
          %s610 = scalar_lea.vmem %s8, %s609
        $region60: #{vit_encoder_forward.1} parent=51 // pred_fallthru
          _
        // Predicated region
        $region61: #{vit_encoder_forward.1} parent=51 // pred_check
          %p611 = pneg %p247
        $region62: #{vit_encoder_forward.1} parent=51 // pred_check_branch
          %613 = sbr.rel (%p611) target = $region64
        $region63: #{vit_encoder_forward.1} parent=51 // pred_region
          %p614 = scmp.lt.s32.totalorder %s28, 2
          %s615 = scalar_select %p614, %s28, 2
          %s616 = smul.addr %s615, 8
          %s617 = smul.addr %s616, 4
          %s618 = scalar_lea.vmem %s9, %s617
        $region64: #{vit_encoder_forward.1} parent=51 // pred_fallthru
          _
        // Predicated region
        $region65: #{vit_encoder_forward.1} parent=51 // pred_check
          %p619 = pneg %p273
        $region66: #{vit_encoder_forward.1} parent=51 // pred_check_branch
          %621 = sbr.rel (%p619) target = $region68
        $region67: #{vit_encoder_forward.1} parent=51 // pred_region
          %p622 = scmp.lt.s32.totalorder %s28, 2
          %s623 = scalar_select %p622, %s28, 2
          %s624 = scalar_lea.vmem %s10, %s623
        $region68: #{vit_encoder_forward.1} parent=51 // pred_fallthru
          _
        // Predicated region
        $region69: #{vit_encoder_forward.1} parent=51 // pred_check
          %p625 = pneg %p299
        $region70: #{vit_encoder_forward.1} parent=51 // pred_check_branch
          %627 = sbr.rel (%p625) target = $region72
        $region71: #{vit_encoder_forward.1} parent=51 // pred_region
          %p628 = scmp.lt.s32.totalorder %s28, 2
          %s629 = scalar_select %p628, %s28, 2
          %s630 = scalar_lea.vmem %s11, %s629
        $region72: #{vit_encoder_forward.1} parent=51 // pred_fallthru
          _
        // Predicated region
        $region73: #{vit_encoder_forward.1} parent=51 // pred_check
          %p631 = pneg %p325
        $region74: #{vit_encoder_forward.1} parent=51 // pred_check_branch
          %633 = sbr.rel (%p631) target = $region76
        $region75: #{vit_encoder_forward.1} parent=51 // pred_region
          %p634 = scmp.lt.s32.totalorder %s28, 2
          %s635 = scalar_select %p634, %s28, 2
          %s636 = scalar_lea.vmem %s12, %s635
        $region76: #{vit_encoder_forward.1} parent=51 // pred_fallthru
          _
        // Predicated region
        $region77: #{vit_encoder_forward.1} parent=51 // pred_check
          %p637 = pneg %p351
        $region78: #{vit_encoder_forward.1} parent=51 // pred_check_branch
          %639 = sbr.rel (%p637) target = $region80
        $region79: #{vit_encoder_forward.1} parent=51 // pred_region
          %p640 = scmp.lt.s32.totalorder %s28, 2
          %s641 = scalar_select %p640, %s28, 2
          %s642 = smul.addr %s641, 128
          %s643 = smul.addr %s642, 4
          %s644 = scalar_lea.vmem %s13, %s643
        $region80: #{vit_encoder_forward.1} parent=51 // pred_fallthru
          _
        // Predicated region
        $region81: #{vit_encoder_forward.1} parent=51 // pred_check
          %p645 = pneg %p377
        $region82: #{vit_encoder_forward.1} parent=51 // pred_check_branch
          %647 = sbr.rel (%p645) target = $region84
        $region83: #{vit_encoder_forward.1} parent=51 // pred_region
          %p648 = scmp.lt.s32.totalorder %s28, 2
          %s649 = scalar_select %p648, %s28, 2
          %s650 = smul.addr %s649, 16
          %s651 = scalar_lea.vmem %s14, %s650
        $region84: #{vit_encoder_forward.1} parent=51 // pred_fallthru
          _
        // Predicated region
        $region85: #{vit_encoder_forward.1} parent=51 // pred_check
          %p652 = pneg %p403
        $region86: #{vit_encoder_forward.1} parent=51 // pred_check_branch
          %654 = sbr.rel (%p652) target = $region88
        $region87: #{vit_encoder_forward.1} parent=51 // pred_region
          %p655 = scmp.lt.s32.totalorder %s28, 2
          %s656 = scalar_select %p655, %s28, 2
          %s657 = smul.addr %s656, 256
          %s658 = smul.addr %s657, 4
          %s659 = scalar_lea.vmem %s15, %s658
        $region88: #{vit_encoder_forward.1} parent=51 // pred_fallthru
          _
        // Predicated region
        $region89: #{vit_encoder_forward.1} parent=51 // pred_check
          %p660 = pneg %p429
        $region90: #{vit_encoder_forward.1} parent=51 // pred_check_branch
          %662 = sbr.rel (%p660) target = $region92
        $region91: #{vit_encoder_forward.1} parent=51 // pred_region
          %p663 = scmp.lt.s32.totalorder %s28, 2
          %s664 = scalar_select %p663, %s28, 2
          %s665 = scalar_lea.vmem %s16, %s664
        $region92: #{vit_encoder_forward.1} parent=51 // pred_fallthru
          _
        // Predicated region
        $region93: #{vit_encoder_forward.1} parent=51 // pred_check
          %p666 = pneg %p455
        $region94: #{vit_encoder_forward.1} parent=51 // pred_check_branch
          %668 = sbr.rel (%p666) target = $region96
        $region95: #{vit_encoder_forward.1} parent=51 // pred_region
          %p669 = scmp.lt.s32.totalorder %s28, 2
          %s670 = scalar_select %p669, %s28, 2
          %s671 = scalar_lea.vmem %s17, %s670
        $region96: #{vit_encoder_forward.1} parent=51 // pred_fallthru
          _
        // Predicated region
        $region97: #{vit_encoder_forward.1} parent=51 // pred_check
          %p672 = pneg %p481
        $region98: #{vit_encoder_forward.1} parent=51 // pred_check_branch
          %674 = sbr.rel (%p672) target = $region100
        $region99: #{vit_encoder_forward.1} parent=51 // pred_region
          %p675 = scmp.lt.s32.totalorder %s28, 2
          %s676 = scalar_select %p675, %s28, 2
          %s677 = scalar_lea.vmem %s18, %s676
        $region100: #{vit_encoder_forward.1} parent=51 // pred_fallthru
          _
      $region52: #{vit_encoder_forward.1} parent=5 // pred_fallthru
        _
      %p678 = scmp.le.s32.totalorder 1, %s28
      %p679 = scmp.lt.s32.totalorder %s28, 4
      %p680 = pnand %p678, %p679
      %p681 = pneg %p680
      // Predicated region
      $region101: #{vit_encoder_forward.1} parent=5 // pred_check
        _
      $region102: #{vit_encoder_forward.1} parent=5 // pred_check_branch
        %683 = sbr.rel (%p680) target = $region104
      $region103: #{vit_encoder_forward.1} parent=5 // pred_region
        %s684 = ssub.s32 %s28, 1
        %p685 = pneg %p49
        %p686 = pneg %p46
        %p687 = pneg %p70
        %p688 = pneg %p67
        %p689 = pneg %p91
        %p690 = pneg %p88
        %p691 = pneg %p112
        %p692 = pneg %p109
        %p693 = pneg %p133
        %p694 = pneg %p130
        %p695 = pneg %p154
        %p696 = pneg %p151
        %p697 = pneg %p175
        %p698 = pneg %p172
        %p699 = scmp.lt.s32.totalorder %s33, 2
        %s700 = scalar_select %p699, %s33, 2
        %s701 = smul.addr %s700, 24
        %s702 = smul.addr %s701, 4
        %s703 = scalar_lea.vmem %s7, %s702
        %p704 = pneg %p201
        %p705 = pneg %p198
        %p706 = scmp.lt.s32.totalorder %s33, 2
        %s707 = scalar_select %p706, %s33, 2
        %s708 = smul.addr %s707, 3
        %s709 = scalar_lea.vmem %s8, %s708
        %p710 = pneg %p227
        %p711 = pneg %p224
        %p712 = scmp.lt.s32.totalorder %s33, 2
        %s713 = scalar_select %p712, %s33, 2
        %s714 = smul.addr %s713, 8
        %s715 = smul.addr %s714, 4
        %s716 = scalar_lea.vmem %s9, %s715
        %p717 = pneg %p253
        %p718 = pneg %p250
        %p719 = scmp.lt.s32.totalorder %s33, 2
        %s720 = scalar_select %p719, %s33, 2
        %s721 = scalar_lea.vmem %s10, %s720
        %p722 = pneg %p279
        %p723 = pneg %p276
        %p724 = scmp.lt.s32.totalorder %s33, 2
        %s725 = scalar_select %p724, %s33, 2
        %s726 = scalar_lea.vmem %s11, %s725
        %p727 = pneg %p305
        %p728 = pneg %p302
        %p729 = scmp.lt.s32.totalorder %s33, 2
        %s730 = scalar_select %p729, %s33, 2
        %s731 = scalar_lea.vmem %s12, %s730
        %p732 = pneg %p331
        %p733 = pneg %p328
        %p734 = scmp.lt.s32.totalorder %s33, 2
        %s735 = scalar_select %p734, %s33, 2
        %s736 = smul.addr %s735, 128
        %s737 = smul.addr %s736, 4
        %s738 = scalar_lea.vmem %s13, %s737
        %p739 = pneg %p357
        %p740 = pneg %p354
        %p741 = scmp.lt.s32.totalorder %s33, 2
        %s742 = scalar_select %p741, %s33, 2
        %s743 = smul.addr %s742, 16
        %s744 = scalar_lea.vmem %s14, %s743
        %p745 = pneg %p383
        %p746 = pneg %p380
        %p747 = scmp.lt.s32.totalorder %s33, 2
        %s748 = scalar_select %p747, %s33, 2
        %s749 = smul.addr %s748, 256
        %s750 = smul.addr %s749, 4
        %s751 = scalar_lea.vmem %s15, %s750
        %p752 = pneg %p409
        %p753 = pneg %p406
        %p754 = scmp.lt.s32.totalorder %s33, 2
        %s755 = scalar_select %p754, %s33, 2
        %s756 = scalar_lea.vmem %s16, %s755
        %p757 = pneg %p435
        %p758 = pneg %p432
        %p759 = scmp.lt.s32.totalorder %s33, 2
        %s760 = scalar_select %p759, %s33, 2
        %s761 = scalar_lea.vmem %s17, %s760
        %p762 = pneg %p461
        %p763 = pneg %p458
        %p764 = scmp.lt.s32.totalorder %s33, 2
        %s765 = scalar_select %p764, %s33, 2
        %s766 = scalar_lea.vmem %s18, %s765
        %p767 = pneg %p487
        %p768 = pneg %p484
        %p769 = pneg %p508
        %p770 = pneg %p505
        %p771 = pneg %p529
        %p772 = pneg %p526
        %p773 = pneg %p550
        %p774 = pneg %p547
        %p775 = scmp.lt.s32.totalorder %s33, 2
        %s776 = scalar_select %p775, %s33, 2
        %s777 = smul.addr %s776, 24
        %s778 = smul.addr %s777, 4
        %s779 = scalar_lea.vmem %s7, %s778
        %p780 = scmp.lt.s32.totalorder %s33, 2
        %s781 = scalar_select %p780, %s33, 2
        %s782 = smul.addr %s781, 3
        %s783 = scalar_lea.vmem %s8, %s782
        %p784 = scmp.lt.s32.totalorder %s33, 2
        %s785 = scalar_select %p784, %s33, 2
        %s786 = smul.addr %s785, 8
        %s787 = smul.addr %s786, 4
        %s788 = scalar_lea.vmem %s9, %s787
        %p789 = scmp.lt.s32.totalorder %s33, 2
        %s790 = scalar_select %p789, %s33, 2
        %s791 = scalar_lea.vmem %s10, %s790
        %p792 = scmp.lt.s32.totalorder %s33, 2
        %s793 = scalar_select %p792, %s33, 2
        %s794 = scalar_lea.vmem %s11, %s793
        %p795 = scmp.lt.s32.totalorder %s33, 2
        %s796 = scalar_select %p795, %s33, 2
        %s797 = scalar_lea.vmem %s12, %s796
        %p798 = scmp.lt.s32.totalorder %s33, 2
        %s799 = scalar_select %p798, %s33, 2
        %s800 = smul.addr %s799, 128
        %s801 = smul.addr %s800, 4
        %s802 = scalar_lea.vmem %s13, %s801
        %p803 = scmp.lt.s32.totalorder %s33, 2
        %s804 = scalar_select %p803, %s33, 2
        %s805 = smul.addr %s804, 16
        %s806 = scalar_lea.vmem %s14, %s805
        %p807 = scmp.lt.s32.totalorder %s33, 2
        %s808 = scalar_select %p807, %s33, 2
        %s809 = smul.addr %s808, 256
        %s810 = smul.addr %s809, 4
        %s811 = scalar_lea.vmem %s15, %s810
        %p812 = scmp.lt.s32.totalorder %s33, 2
        %s813 = scalar_select %p812, %s33, 2
        %s814 = scalar_lea.vmem %s16, %s813
        %p815 = scmp.lt.s32.totalorder %s33, 2
        %s816 = scalar_select %p815, %s33, 2
        %s817 = scalar_lea.vmem %s17, %s816
        %p818 = scmp.lt.s32.totalorder %s33, 2
        %s819 = scalar_select %p818, %s33, 2
        %s820 = scalar_lea.vmem %s18, %s819
        %p822 = scmp.eq.s32.totalorder %s33, 0
        // Predicated region
        $region105: #{vit_encoder_forward.1} parent=103 // pred_check
          %p823 = pneg %p822
        $region106: #{vit_encoder_forward.1} parent=103 // pred_check_branch
          %825 = sbr.rel (%p823) target = $region108
        $region107: #{vit_encoder_forward.1} parent=103 // pred_region
          %v826 = vld [vmem:[%s0] sm:$0xff]
          %v827 = vld [vmem:[%s0 + $0x8] sm:$0xff]
          %v828 = vld [vmem:[%s0 + $0x10] sm:$0xff]
          %v829 = vld [vmem:[%s0 + $0x18] sm:$0xff]
          %v830 = vld [vmem:[%s1] sm:$0xff]
          %v831 = vld [vmem:[%s1 + $0x8] sm:$0xff]
          %v832 = vld [vmem:[%s1 + $0x10] sm:$0xff]
          %v833 = vld [vmem:[%s1 + $0x18] sm:$0xff]
          %v834 = vld [vmem:[%s1 + $0x20] sm:$0xff]
          %v835 = vld [vmem:[%s1 + $0x28] sm:$0xff]
          %v836 = vld [vmem:[%s2] sm:$0x1]
          %v838 = vlaneseq
          %v839 = vshrl.u32 %v838, 7
          %v840 = vsub.s32 0, %v839
          %v841 = vrot.slane %v836, %v840
          %vm843 = vcmask 392192
          %v845 = vsel %vm843, %v826, 0
          %v848 = vsel %vm843, %v827, 0
          %v851 = vsel %vm843, %v828, 0
          %v854 = vsel %vm843, %v829, 0
          %856 = vmatprep.subr.mxu0 0.0
          %857 = vmatpush1.msra.mxu0 0.0
          %858 = vmatprep.subr.mxu0 0.0
          %859 = vmatpush1.msra.mxu0 0.0
          %860 = vmatprep.subr.mxu0 0.0
          %861 = vmatpush1.msra.mxu0 0.0
          %862 = vmatprep.subr.mxu0 0.0
          %863 = vmatpush1.msra.mxu0 0.0
          %864 = vmatprep.subr.mxu0 0.0
          %865 = vmatpush1.msra.mxu0 0.0
          %866 = vmatprep.subr.mxu0 0.0
          %867 = vmatpush1.msra.mxu0 0.0
          %868 = vmatprep.subr.mxu0 0.0
          %869 = vmatpush1.msra.mxu0 0.0
          %870 = vmatprep.subr.mxu0 0.0
          %871 = vmatpush1.msra.mxu0 0.0
          %872 = vmatprep.subr.mxu0 0.0
          %873 = vmatpush1.msra.mxu0 0.0
          %874 = vmatprep.subr.mxu0 0.0
          %875 = vmatpush1.msra.mxu0 0.0
          %876 = vmatprep.subr.mxu0 0.0
          %877 = vmatpush1.msra.mxu0 %v835
          %878 = vmatprep.subr.mxu0 0.0
          %879 = vmatpush1.msra.mxu0 %v834
          %880 = vmatprep.subr.mxu0 0.0
          %881 = vmatpush1.msra.mxu0 %v833
          %882 = vmatprep.subr.mxu0 0.0
          %883 = vmatpush1.msra.mxu0 %v832
          %884 = vmatprep.subr.mxu0 0.0
          %885 = vmatpush1.msra.mxu0 %v831
          %886 = vmatprep.subr.mxu0 0.0
          %887 = vmatpush1.msra.mxu0 %v830
          %888 = vmatprep.subr.mxu0 0.0
          %889 = vmatpush2.msra.mxu0 0.0
          %890 = vmatprep.subr.mxu0 0.0
          %891 = vmatpush2.msra.mxu0 0.0
          %892 = vmatprep.subr.mxu0 0.0
          %893 = vmatpush2.msra.mxu0 0.0
          %894 = vmatprep.subr.mxu0 0.0
          %895 = vmatpush2.msra.mxu0 0.0
          %896 = vmatprep.subr.mxu0 0.0
          %897 = vmatpush2.msra.mxu0 0.0
          %898 = vmatprep.subr.mxu0 0.0
          %899 = vmatpush2.msra.mxu0 0.0
          %900 = vmatprep.subr.mxu0 0.0
          %901 = vmatpush2.msra.mxu0 0.0
          %902 = vmatprep.subr.mxu0 0.0
          %903 = vmatpush2.msra.mxu0 0.0
          %904 = vmatprep.subr.mxu0 0.0
          %905 = vmatpush2.msra.mxu0 0.0
          %906 = vmatprep.subr.mxu0 0.0
          %907 = vmatpush2.msra.mxu0 0.0
          %908 = vmatprep.subr.mxu0 0.0
          %909 = vmatpush2.msra.mxu0 0.0
          %910 = vmatprep.subr.mxu0 0.0
          %911 = vmatpush2.msra.mxu0 0.0
          %912 = vmatprep.subr.mxu0 0.0
          %913 = vmatpush2.msra.mxu0 0.0
          %914 = vmatprep.subr.mxu0 0.0
          %915 = vmatpush2.msra.mxu0 0.0
          %916 = vmatprep.subr.mxu0 0.0
          %917 = vmatpush2.msra.mxu0 0.0
          %918 = vmatprep.subr.mxu0 0.0
          %919 = vmatpush2.msra.mxu0 0.0
          %920 = vmatprep.mubr.f32.mxu0 0.0
          %921 = vmatmul.mubr.f32.gmra.mxu0 %v845
          %v922 = vpop.f32.mrf.mxu0
          %v923 = vadd.f32 %v841, %v922
          %v924 = vpop.f32.mrf.mxu0
          %925 = vmatprep.mubr.f32.mxu0 0.0
          %926 = vmatmul.mubr.f32.gmra.mxu0 %v848
          %v927 = vpop.f32.mrf.mxu0
          %v928 = vadd.f32 %v841, %v927
          %v929 = vpop.f32.mrf.mxu0
          %930 = vmatprep.mubr.f32.mxu0 0.0
          %931 = vmatmul.mubr.f32.gmra.mxu0 %v851
          %v932 = vpop.f32.mrf.mxu0
          %v933 = vadd.f32 %v841, %v932
          %v934 = vpop.f32.mrf.mxu0
          %935 = vmatprep.mubr.f32.mxu0 0.0
          %936 = vmatmul.mubr.f32.gmra.mxu0 %v854
          %v937 = vpop.f32.mrf.mxu0
          %v938 = vadd.f32 %v841, %v937
          %v939 = vpop.f32.mrf.mxu0
          %940 = vdwg.mxu0
          %v941 = vld [vmem:[%s3] sm:$0xff]
          %v942 = vld [vmem:[%s3 + $0x8] sm:$0xff]
          %v943 = vld [vmem:[%s3 + $0x10] sm:$0xff]
          %v944 = vld [vmem:[%s3 + $0x18] sm:$0xff]
          %v945 = vadd.f32 %v923, %v941
          %v946 = vadd.f32 %v928, %v942
          %v947 = vadd.f32 %v933, %v943
          %v948 = vadd.f32 %v938, %v944
          %vm949 = vcmask 523264
          %950 = vst.msk [vmem:[#allocation2] sm:$0xff] %vm949, %v945
          %951 = vst.msk [vmem:[#allocation2 + $0x8] sm:$0xff] %vm949, %v946
          %952 = vst.msk [vmem:[#allocation2 + $0x10] sm:$0xff] %vm949, %v947
          %953 = vst.msk [vmem:[#allocation2 + $0x18] sm:$0xff] %vm949, %v948
        $region108: #{vit_encoder_forward.1} parent=103 // pred_fallthru
          _
        %v954 = vld [vmem:[#allocation2] sm:$0xff]
        %v955 = vld [vmem:[#allocation2 + $0x8] sm:$0xff]
        %v956 = vld [vmem:[#allocation2 + $0x10] sm:$0xff]
        %v957 = vld [vmem:[#allocation2 + $0x18] sm:$0xff]
        %v958 = vpack.c.bf16 %v955, %v954
        %v959 = vpack.c.bf16 %v957, %v956
        %v960 = vld [vmem:[%s779] sm:$0xf]
        %v961 = vld [vmem:[%s779 + $0x4] sm:$0xf]
        %v962 = vld [vmem:[%s779 + $0x8] sm:$0xf]
        %v963 = vld [vmem:[%s779 + $0xc] sm:$0xf]
        %v964 = vld [vmem:[%s779 + $0x10] sm:$0xf]
        %v965 = vld [vmem:[%s779 + $0x14] sm:$0xf]
        %v966 = vld [vmem:[%s779 + $0x18] sm:$0xf]
        %v967 = vld [vmem:[%s779 + $0x1c] sm:$0xf]
        %v968 = vld [vmem:[%s783] sm:$0x1]
        %v970 = vlaneseq
        %v971 = vshrl.u32 %v970, 7
        %v972 = vsub.s32 0, %v971
        %v973 = vrot.slane %v968, %v972
        %v983 = vunpack.c.l.b16 %v960
        %v984 = vunpack.c.l.b16 %v961
        %v985 = vunpack.c.l.b16 %v962
        %v986 = vunpack.c.l.b16 %v963
        %v987 = vunpack.c.l.b16 %v964
        %v988 = vunpack.c.l.b16 %v965
        %v989 = vunpack.c.l.b16 %v966
        %v990 = vunpack.c.l.b16 %v967
        %v991 = vpack.c.b16 %v984, %v983
        %v992 = vpack.c.b16 %v986, %v985
        %v993 = vpack.c.b16 %v988, %v987
        %v994 = vpack.c.b16 %v990, %v989
        %vm999 = vcmask 523264
        %v1001 = vsel %vm999, %v958, 0
        %v1004 = vsel %vm999, %v959, 0
        %1006 = vmatprep.subr.bf16.mxu0 0
        %1007 = vmatpush1.bf16.msra.mxu0 0
        %1008 = vmatprep.subr.bf16.mxu0 0
        %1009 = vmatpush1.bf16.msra.mxu0 0
        %1010 = vmatprep.subr.bf16.mxu0 0
        %1011 = vmatpush1.bf16.msra.mxu0 0
        %1012 = vmatprep.subr.bf16.mxu0 0
        %1013 = vmatpush1.bf16.msra.mxu0 0
        %1014 = vmatprep.subr.bf16.mxu0 0
        %1015 = vmatpush1.bf16.msra.mxu0 %v994
        %1016 = vmatprep.subr.bf16.mxu0 0
        %1017 = vmatpush1.bf16.msra.mxu0 %v993
        %1018 = vmatprep.subr.bf16.mxu0 0
        %1019 = vmatpush1.bf16.msra.mxu0 %v992
        %1020 = vmatprep.subr.bf16.mxu0 0
        %1021 = vmatpush1.bf16.msra.mxu0 %v991
        %1022 = vmatprep.subr.bf16.mxu0 0
        %1023 = vmatpush2.bf16.msra.mxu0 0
        %1024 = vmatprep.subr.bf16.mxu0 0
        %1025 = vmatpush2.bf16.msra.mxu0 0
        %1026 = vmatprep.subr.bf16.mxu0 0
        %1027 = vmatpush2.bf16.msra.mxu0 0
        %1028 = vmatprep.subr.bf16.mxu0 0
        %1029 = vmatpush2.bf16.msra.mxu0 0
        %1030 = vmatprep.subr.bf16.mxu0 0
        %1031 = vmatpush2.bf16.msra.mxu0 0
        %1032 = vmatprep.subr.bf16.mxu0 0
        %1033 = vmatpush2.bf16.msra.mxu0 0
        %1034 = vmatprep.subr.bf16.mxu0 0
        %1035 = vmatpush2.bf16.msra.mxu0 0
        %1036 = vmatprep.subr.bf16.mxu0 0
        %1037 = vmatpush2.bf16.msra.mxu0 0
        %1038 = vmatprep.mubr.bf16.mxu0 0
        %1039 = vmatmul.mubr.bf16.gmra.mxu0 %v1001
        %v1040 = vpop.f32.mrf.mxu0
        %v1041 = vadd.f32 %v973, %v1040
        %v1042 = vpop.f32.mrf.mxu0
        %v1043 = vpop.f32.mrf.mxu0
        %v1044 = vadd.f32 %v973, %v1043
        %v1045 = vpop.f32.mrf.mxu0
        %1046 = vmatprep.mubr.bf16.mxu0 0
        %1047 = vmatmul.mubr.bf16.gmra.mxu0 %v1004
        %v1048 = vpop.f32.mrf.mxu0
        %v1049 = vadd.f32 %v973, %v1048
        %v1050 = vpop.f32.mrf.mxu0
        %v1051 = vpop.f32.mrf.mxu0
        %v1052 = vadd.f32 %v973, %v1051
        %v1053 = vpop.f32.mrf.mxu0
        %1054 = vdwg.mxu0
        %s1055 = scalar_lea.vmem %s779, 32
        %v1056 = vld [vmem:[%s1055] sm:$0xf]
        %v1057 = vld [vmem:[%s1055 + $0x4] sm:$0xf]
        %v1058 = vld [vmem:[%s1055 + $0x8] sm:$0xf]
        %v1059 = vld [vmem:[%s1055 + $0xc] sm:$0xf]
        %v1060 = vld [vmem:[%s1055 + $0x10] sm:$0xf]
        %v1061 = vld [vmem:[%s1055 + $0x14] sm:$0xf]
        %v1062 = vld [vmem:[%s1055 + $0x18] sm:$0xf]
        %v1063 = vld [vmem:[%s1055 + $0x1c] sm:$0xf]
        %s1064 = scalar_lea.vmem %s783, 1
        %v1065 = vld [vmem:[%s1064] sm:$0x1]
        %v1067 = vlaneseq
        %v1068 = vshrl.u32 %v1067, 7
        %v1069 = vsub.s32 0, %v1068
        %v1070 = vrot.slane %v1065, %v1069
        %v1080 = vunpack.c.l.b16 %v1056
        %v1081 = vunpack.c.l.b16 %v1057
        %v1082 = vunpack.c.l.b16 %v1058
        %v1083 = vunpack.c.l.b16 %v1059
        %v1084 = vunpack.c.l.b16 %v1060
        %v1085 = vunpack.c.l.b16 %v1061
        %v1086 = vunpack.c.l.b16 %v1062
        %v1087 = vunpack.c.l.b16 %v1063
        %v1088 = vpack.c.b16 %v1081, %v1080
        %v1089 = vpack.c.b16 %v1083, %v1082
        %v1090 = vpack.c.b16 %v1085, %v1084
        %v1091 = vpack.c.b16 %v1087, %v1086
        %1096 = vmatprep.subr.bf16.mxu0 0
        %1097 = vmatpush1.bf16.msra.mxu0 0
        %1098 = vmatprep.subr.bf16.mxu0 0
        %1099 = vmatpush1.bf16.msra.mxu0 0
        %1100 = vmatprep.subr.bf16.mxu0 0
        %1101 = vmatpush1.bf16.msra.mxu0 0
        %1102 = vmatprep.subr.bf16.mxu0 0
        %1103 = vmatpush1.bf16.msra.mxu0 0
        %1104 = vmatprep.subr.bf16.mxu0 0
        %1105 = vmatpush1.bf16.msra.mxu0 %v1091
        %1106 = vmatprep.subr.bf16.mxu0 0
        %1107 = vmatpush1.bf16.msra.mxu0 %v1090
        %1108 = vmatprep.subr.bf16.mxu0 0
        %1109 = vmatpush1.bf16.msra.mxu0 %v1089
        %1110 = vmatprep.subr.bf16.mxu0 0
        %1111 = vmatpush1.bf16.msra.mxu0 %v1088
        %1112 = vmatprep.subr.bf16.mxu0 0
        %1113 = vmatpush2.bf16.msra.mxu0 0
        %1114 = vmatprep.subr.bf16.mxu0 0
        %1115 = vmatpush2.bf16.msra.mxu0 0
        %1116 = vmatprep.subr.bf16.mxu0 0
        %1117 = vmatpush2.bf16.msra.mxu0 0
        %1118 = vmatprep.subr.bf16.mxu0 0
        %1119 = vmatpush2.bf16.msra.mxu0 0
        %1120 = vmatprep.subr.bf16.mxu0 0
        %1121 = vmatpush2.bf16.msra.mxu0 0
        %1122 = vmatprep.subr.bf16.mxu0 0
        %1123 = vmatpush2.bf16.msra.mxu0 0
        %1124 = vmatprep.subr.bf16.mxu0 0
        %1125 = vmatpush2.bf16.msra.mxu0 0
        %1126 = vmatprep.subr.bf16.mxu0 0
        %1127 = vmatpush2.bf16.msra.mxu0 0
        %1128 = vmatprep.mubr.bf16.mxu0 0
        %1129 = vmatmul.mubr.bf16.gmra.mxu0 %v1001
        %v1130 = vpop.f32.mrf.mxu0
        %v1131 = vadd.f32 %v1070, %v1130
        %v1132 = vpop.f32.mrf.mxu0
        %v1133 = vpop.f32.mrf.mxu0
        %v1134 = vadd.f32 %v1070, %v1133
        %v1135 = vpop.f32.mrf.mxu0
        %1136 = vmatprep.mubr.bf16.mxu0 0
        %1137 = vmatmul.mubr.bf16.gmra.mxu0 %v1004
        %v1138 = vpop.f32.mrf.mxu0
        %v1139 = vadd.f32 %v1070, %v1138
        %v1140 = vpop.f32.mrf.mxu0
        %v1141 = vpop.f32.mrf.mxu0
        %v1142 = vadd.f32 %v1070, %v1141
        %v1143 = vpop.f32.mrf.mxu0
        %1144 = vdwg.mxu0
        %s1145 = scalar_lea.vmem %s779, 64
        %v1146 = vld [vmem:[%s1145] sm:$0xf]
        %v1147 = vld [vmem:[%s1145 + $0x4] sm:$0xf]
        %v1148 = vld [vmem:[%s1145 + $0x8] sm:$0xf]
        %v1149 = vld [vmem:[%s1145 + $0xc] sm:$0xf]
        %v1150 = vld [vmem:[%s1145 + $0x10] sm:$0xf]
        %v1151 = vld [vmem:[%s1145 + $0x14] sm:$0xf]
        %v1152 = vld [vmem:[%s1145 + $0x18] sm:$0xf]
        %v1153 = vld [vmem:[%s1145 + $0x1c] sm:$0xf]
        %s1154 = scalar_lea.vmem %s783, 2
        %v1155 = vld [vmem:[%s1154] sm:$0x1]
        %v1157 = vlaneseq
        %v1158 = vshrl.u32 %v1157, 7
        %v1159 = vsub.s32 0, %v1158
        %v1160 = vrot.slane %v1155, %v1159
        %v1170 = vunpack.c.l.b16 %v1146
        %v1171 = vunpack.c.l.b16 %v1147
        %v1172 = vunpack.c.l.b16 %v1148
        %v1173 = vunpack.c.l.b16 %v1149
        %v1174 = vunpack.c.l.b16 %v1150
        %v1175 = vunpack.c.l.b16 %v1151
        %v1176 = vunpack.c.l.b16 %v1152
        %v1177 = vunpack.c.l.b16 %v1153
        %v1178 = vpack.c.b16 %v1171, %v1170
        %v1179 = vpack.c.b16 %v1173, %v1172
        %v1180 = vpack.c.b16 %v1175, %v1174
        %v1181 = vpack.c.b16 %v1177, %v1176
        %1186 = vmatprep.subr.bf16.mxu0 0
        %1187 = vmatpush1.bf16.msra.mxu0 0
        %1188 = vmatprep.subr.bf16.mxu0 0
        %1189 = vmatpush1.bf16.msra.mxu0 0
        %1190 = vmatprep.subr.bf16.mxu0 0
        %1191 = vmatpush1.bf16.msra.mxu0 0
        %1192 = vmatprep.subr.bf16.mxu0 0
        %1193 = vmatpush1.bf16.msra.mxu0 0
        %1194 = vmatprep.subr.bf16.mxu0 0
        %1195 = vmatpush1.bf16.msra.mxu0 %v1181
        %1196 = vmatprep.subr.bf16.mxu0 0
        %1197 = vmatpush1.bf16.msra.mxu0 %v1180
        %1198 = vmatprep.subr.bf16.mxu0 0
        %1199 = vmatpush1.bf16.msra.mxu0 %v1179
        %1200 = vmatprep.subr.bf16.mxu0 0
        %1201 = vmatpush1.bf16.msra.mxu0 %v1178
        %1202 = vmatprep.subr.bf16.mxu0 0
        %1203 = vmatpush2.bf16.msra.mxu0 0
        %1204 = vmatprep.subr.bf16.mxu0 0
        %1205 = vmatpush2.bf16.msra.mxu0 0
        %1206 = vmatprep.subr.bf16.mxu0 0
        %1207 = vmatpush2.bf16.msra.mxu0 0
        %1208 = vmatprep.subr.bf16.mxu0 0
        %1209 = vmatpush2.bf16.msra.mxu0 0
        %1210 = vmatprep.subr.bf16.mxu0 0
        %1211 = vmatpush2.bf16.msra.mxu0 0
        %1212 = vmatprep.subr.bf16.mxu0 0
        %1213 = vmatpush2.bf16.msra.mxu0 0
        %1214 = vmatprep.subr.bf16.mxu0 0
        %1215 = vmatpush2.bf16.msra.mxu0 0
        %1216 = vmatprep.subr.bf16.mxu0 0
        %1217 = vmatpush2.bf16.msra.mxu0 0
        %1218 = vmatprep.mubr.bf16.mxu0 0
        %1219 = vmatmul.mubr.bf16.gmra.mxu0 %v1001
        %v1220 = vpop.f32.mrf.mxu0
        %v1221 = vadd.f32 %v1160, %v1220
        %v1222 = vpop.f32.mrf.mxu0
        %v1223 = vpop.f32.mrf.mxu0
        %v1224 = vadd.f32 %v1160, %v1223
        %v1225 = vpop.f32.mrf.mxu0
        %1226 = vmatprep.mubr.bf16.mxu0 0
        %1227 = vmatmul.mubr.bf16.gmra.mxu0 %v1004
        %v1228 = vpop.f32.mrf.mxu0
        %v1229 = vadd.f32 %v1160, %v1228
        %v1230 = vpop.f32.mrf.mxu0
        %v1231 = vpop.f32.mrf.mxu0
        %v1232 = vadd.f32 %v1160, %v1231
        %v1233 = vpop.f32.mrf.mxu0
        %1234 = vdwg.mxu0
        %v1235 = vld [vmem:[%s4] sm:$0xff]
        %v1236 = vld [vmem:[%s4 + $0x8] sm:$0xff]
        %v1237 = vld [vmem:[%s4 + $0x10] sm:$0xff]
        %v1238 = vld [vmem:[%s4 + $0x18] sm:$0xff]
        %v1239 = vld [vmem:[%s4 + $0x20] sm:$0xff]
        %v1240 = vld [vmem:[%s4 + $0x28] sm:$0xff]
        %v1241 = vld [vmem:[%s4 + $0x30] sm:$0xff]
        %v1242 = vld [vmem:[%s4 + $0x38] sm:$0xff]
        %v1243 = vld [vmem:[%s5] sm:$0xf]
        %v1244 = vmul.f32 %v1041, %v1131
        %v1245 = vmul.f32 %v1044, %v1134
        %v1246 = vmul.f32 %v1049, %v1139
        %v1247 = vmul.f32 %v1052, %v1142
        %v1249 = vsel %vm999, %v1244, 0
        %v1252 = vsel %vm999, %v1245, 0
        %v1255 = vsel %vm999, %v1246, 0
        %v1258 = vsel %vm999, %v1247, 0
        %1260 = vmatprep.subr.mxu0 0.0
        %1261 = vmatpush1.msra.mxu0 0.0
        %1262 = vmatprep.subr.mxu0 0.0
        %1263 = vmatpush1.msra.mxu0 0.0
        %1264 = vmatprep.subr.mxu0 0.0
        %1265 = vmatpush1.msra.mxu0 0.0
        %1266 = vmatprep.subr.mxu0 0.0
        %1267 = vmatpush1.msra.mxu0 0.0
        %1268 = vmatprep.subr.mxu0 0.0
        %1269 = vmatpush1.msra.mxu0 0.0
        %1270 = vmatprep.subr.mxu0 0.0
        %1271 = vmatpush1.msra.mxu0 0.0
        %1272 = vmatprep.subr.mxu0 0.0
        %1273 = vmatpush1.msra.mxu0 0.0
        %1274 = vmatprep.subr.mxu0 0.0
        %1275 = vmatpush1.msra.mxu0 0.0
        %1276 = vmatprep.subr.mxu0 0.0
        %1277 = vmatpush1.msra.mxu0 %v1242
        %1278 = vmatprep.subr.mxu0 0.0
        %1279 = vmatpush1.msra.mxu0 %v1241
        %1280 = vmatprep.subr.mxu0 0.0
        %1281 = vmatpush1.msra.mxu0 %v1240
        %1282 = vmatprep.subr.mxu0 0.0
        %1283 = vmatpush1.msra.mxu0 %v1239
        %1284 = vmatprep.subr.mxu0 0.0
        %1285 = vmatpush1.msra.mxu0 %v1238
        %1286 = vmatprep.subr.mxu0 0.0
        %1287 = vmatpush1.msra.mxu0 %v1237
        %1288 = vmatprep.subr.mxu0 0.0
        %1289 = vmatpush1.msra.mxu0 %v1236
        %1290 = vmatprep.subr.mxu0 0.0
        %1291 = vmatpush1.msra.mxu0 %v1235
        %1292 = vmatprep.subr.mxu0 0.0
        %1293 = vmatpush2.msra.mxu0 0.0
        %1294 = vmatprep.subr.mxu0 0.0
        %1295 = vmatpush2.msra.mxu0 0.0
        %1296 = vmatprep.subr.mxu0 0.0
        %1297 = vmatpush2.msra.mxu0 0.0
        %1298 = vmatprep.subr.mxu0 0.0
        %1299 = vmatpush2.msra.mxu0 0.0
        %1300 = vmatprep.subr.mxu0 0.0
        %1301 = vmatpush2.msra.mxu0 0.0
        %1302 = vmatprep.subr.mxu0 0.0
        %1303 = vmatpush2.msra.mxu0 0.0
        %1304 = vmatprep.subr.mxu0 0.0
        %1305 = vmatpush2.msra.mxu0 0.0
        %1306 = vmatprep.subr.mxu0 0.0
        %1307 = vmatpush2.msra.mxu0 0.0
        %1308 = vmatprep.subr.mxu0 0.0
        %1309 = vmatpush2.msra.mxu0 0.0
        %1310 = vmatprep.subr.mxu0 0.0
        %1311 = vmatpush2.msra.mxu0 0.0
        %1312 = vmatprep.subr.mxu0 0.0
        %1313 = vmatpush2.msra.mxu0 0.0
        %1314 = vmatprep.subr.mxu0 0.0
        %1315 = vmatpush2.msra.mxu0 0.0
        %1316 = vmatprep.subr.mxu0 0.0
        %1317 = vmatpush2.msra.mxu0 0.0
        %1318 = vmatprep.subr.mxu0 0.0
        %1319 = vmatpush2.msra.mxu0 0.0
        %1320 = vmatprep.subr.mxu0 0.0
        %1321 = vmatpush2.msra.mxu0 0.0
        %1322 = vmatprep.subr.mxu0 0.0
        %1323 = vmatpush2.msra.mxu0 0.0
        %1324 = vmatprep.mubr.f32.mxu0 0.0
        %1325 = vmatmul.mubr.f32.gmra.mxu0 %v1249
        %v1326 = vpop.f32.mrf.mxu0
        %v1327 = vadd.f32 0.0, %v1326
        %v1328 = vpop.f32.mrf.mxu0
        %1329 = vmatprep.mubr.f32.mxu0 0.0
        %1330 = vmatmul.mubr.f32.gmra.mxu0 %v1252
        %v1331 = vpop.f32.mrf.mxu0
        %v1332 = vadd.f32 0.0, %v1331
        %v1333 = vpop.f32.mrf.mxu0
        %1334 = vmatprep.mubr.f32.mxu0 0.0
        %1335 = vmatmul.mubr.f32.gmra.mxu0 %v1255
        %v1336 = vpop.f32.mrf.mxu0
        %v1337 = vadd.f32 0.0, %v1336
        %v1338 = vpop.f32.mrf.mxu0
        %1339 = vmatprep.mubr.f32.mxu0 0.0
        %1340 = vmatmul.mubr.f32.gmra.mxu0 %v1258
        %v1341 = vpop.f32.mrf.mxu0
        %v1342 = vadd.f32 0.0, %v1341
        %v1343 = vpop.f32.mrf.mxu0
        %1344 = vdwg.mxu0
        %v1345 = vmul.f32 %v1327, 0.25
        %v1346 = vmul.f32 %v1332, 0.25
        %v1347 = vmul.f32 %v1337, 0.25
        %v1348 = vmul.f32 %v1342, 0.25
        %v1349 = vmul.f32 %v1041, %v1139
        %v1350 = vmul.f32 %v1044, %v1142
        %v1351 = vmul.f32 %v1049, %v1131
        %v1352 = vmul.f32 %v1052, %v1134
        %v1354 = vsel %vm999, %v1349, 0
        %v1357 = vsel %vm999, %v1350, 0
        %v1360 = vsel %vm999, %v1351, 0
        %v1363 = vsel %vm999, %v1352, 0
        %1365 = vmatprep.subr.mxu0 0.0
        %1366 = vmatpush1.msra.mxu0 0.0
        %1367 = vmatprep.subr.mxu0 0.0
        %1368 = vmatpush1.msra.mxu0 0.0
        %1369 = vmatprep.subr.mxu0 0.0
        %1370 = vmatpush1.msra.mxu0 0.0
        %1371 = vmatprep.subr.mxu0 0.0
        %1372 = vmatpush1.msra.mxu0 0.0
        %1373 = vmatprep.subr.mxu0 0.0
        %1374 = vmatpush1.msra.mxu0 0.0
        %1375 = vmatprep.subr.mxu0 0.0
        %1376 = vmatpush1.msra.mxu0 0.0
        %1377 = vmatprep.subr.mxu0 0.0
        %1378 = vmatpush1.msra.mxu0 0.0
        %1379 = vmatprep.subr.mxu0 0.0
        %1380 = vmatpush1.msra.mxu0 0.0
        %1381 = vmatprep.subr.mxu0 0.0
        %1382 = vmatpush1.msra.mxu0 %v1242
        %1383 = vmatprep.subr.mxu0 0.0
        %1384 = vmatpush1.msra.mxu0 %v1241
        %1385 = vmatprep.subr.mxu0 0.0
        %1386 = vmatpush1.msra.mxu0 %v1240
        %1387 = vmatprep.subr.mxu0 0.0
        %1388 = vmatpush1.msra.mxu0 %v1239
        %1389 = vmatprep.subr.mxu0 0.0
        %1390 = vmatpush1.msra.mxu0 %v1238
        %1391 = vmatprep.subr.mxu0 0.0
        %1392 = vmatpush1.msra.mxu0 %v1237
        %1393 = vmatprep.subr.mxu0 0.0
        %1394 = vmatpush1.msra.mxu0 %v1236
        %1395 = vmatprep.subr.mxu0 0.0
        %1396 = vmatpush1.msra.mxu0 %v1235
        %1397 = vmatprep.subr.mxu0 0.0
        %1398 = vmatpush2.msra.mxu0 0.0
        %1399 = vmatprep.subr.mxu0 0.0
        %1400 = vmatpush2.msra.mxu0 0.0
        %1401 = vmatprep.subr.mxu0 0.0
        %1402 = vmatpush2.msra.mxu0 0.0
        %1403 = vmatprep.subr.mxu0 0.0
        %1404 = vmatpush2.msra.mxu0 0.0
        %1405 = vmatprep.subr.mxu0 0.0
        %1406 = vmatpush2.msra.mxu0 0.0
        %1407 = vmatprep.subr.mxu0 0.0
        %1408 = vmatpush2.msra.mxu0 0.0
        %1409 = vmatprep.subr.mxu0 0.0
        %1410 = vmatpush2.msra.mxu0 0.0
        %1411 = vmatprep.subr.mxu0 0.0
        %1412 = vmatpush2.msra.mxu0 0.0
        %1413 = vmatprep.subr.mxu0 0.0
        %1414 = vmatpush2.msra.mxu0 0.0
        %1415 = vmatprep.subr.mxu0 0.0
        %1416 = vmatpush2.msra.mxu0 0.0
        %1417 = vmatprep.subr.mxu0 0.0
        %1418 = vmatpush2.msra.mxu0 0.0
        %1419 = vmatprep.subr.mxu0 0.0
        %1420 = vmatpush2.msra.mxu0 0.0
        %1421 = vmatprep.subr.mxu0 0.0
        %1422 = vmatpush2.msra.mxu0 0.0
        %1423 = vmatprep.subr.mxu0 0.0
        %1424 = vmatpush2.msra.mxu0 0.0
        %1425 = vmatprep.subr.mxu0 0.0
        %1426 = vmatpush2.msra.mxu0 0.0
        %1427 = vmatprep.subr.mxu0 0.0
        %1428 = vmatpush2.msra.mxu0 0.0
        %1429 = vmatprep.mubr.f32.mxu0 0.0
        %1430 = vmatmul.mubr.f32.gmra.mxu0 %v1354
        %v1431 = vpop.f32.mrf.mxu0
        %v1432 = vadd.f32 0.0, %v1431
        %v1433 = vpop.f32.mrf.mxu0
        %1434 = vmatprep.mubr.f32.mxu0 0.0
        %1435 = vmatmul.mubr.f32.gmra.mxu0 %v1357
        %v1436 = vpop.f32.mrf.mxu0
        %v1437 = vadd.f32 0.0, %v1436
        %v1438 = vpop.f32.mrf.mxu0
        %1439 = vmatprep.mubr.f32.mxu0 0.0
        %1440 = vmatmul.mubr.f32.gmra.mxu0 %v1360
        %v1441 = vpop.f32.mrf.mxu0
        %v1442 = vadd.f32 0.0, %v1441
        %v1443 = vpop.f32.mrf.mxu0
        %1444 = vmatprep.mubr.f32.mxu0 0.0
        %1445 = vmatmul.mubr.f32.gmra.mxu0 %v1363
        %v1446 = vpop.f32.mrf.mxu0
        %v1447 = vadd.f32 0.0, %v1446
        %v1448 = vpop.f32.mrf.mxu0
        %1449 = vdwg.mxu0
        %v1450 = vmul.f32 %v1432, 0.25
        %v1451 = vmul.f32 %v1437, 0.25
        %v1452 = vmul.f32 %v1442, 0.25
        %v1453 = vmul.f32 %v1447, 0.25
        %v1454 = vsub.f32 %v1450, %v1345
        %v1455 = vsub.f32 %v1451, %v1346
        %v1456 = vsub.f32 %v1452, %v1347
        %v1457 = vsub.f32 %v1453, %v1348
        %v1458 = vmul.f32 %v1454, 1.442695
        %v1459 = vpow.pop %v1458
        %v1460 = vmul.f32 %v1455, 1.442695
        %v1461 = vpow.pop %v1460
        %v1462 = vmul.f32 %v1456, 1.442695
        %v1463 = vpow.pop %v1462
        %v1464 = vmul.f32 %v1457, 1.442695
        %v1465 = vpow.pop %v1464
        %v1466 = vadd.f32 %v1459, 1.0
        %v1467 = vadd.f32 %v1461, 1.0
        %v1468 = vadd.f32 %v1463, 1.0
        %v1469 = vadd.f32 %v1465, 1.0
        %v1470 = vrcp.pop %v1466
        %v1471 = vmul.f32 1.0, %v1470
        %v1472 = vrcp.pop %v1467
        %v1473 = vmul.f32 1.0, %v1472
        %v1474 = vrcp.pop %v1468
        %v1475 = vmul.f32 1.0, %v1474
        %v1476 = vrcp.pop %v1469
        %v1477 = vmul.f32 1.0, %v1476
        %vm1478 = vcmask 31744
        %v1480 = vsel %vm1478, %v1471, 0
        %v1483 = vsel %vm1478, %v1473, 0
        %v1486 = vsel %vm1478, %v1475, 0
        %v1489 = vsel %vm1478, %v1477, 0
        %vm1491 = vcmask 1043456
        %v1493 = vsel %vm1491, %v1243, 0
        %1495 = vmatprep.subr.mxu0 0.0
        %1496 = vmatpush1.msra.mxu0 0.0
        %1497 = vmatprep.subr.mxu0 0.0
        %1498 = vmatpush1.msra.mxu0 0.0
        %1499 = vmatprep.subr.mxu0 0.0
        %1500 = vmatpush1.msra.mxu0 0.0
        %1501 = vmatprep.subr.mxu0 0.0
        %1502 = vmatpush1.msra.mxu0 0.0
        %1503 = vmatprep.subr.mxu0 0.0
        %1504 = vmatpush1.msra.mxu0 0.0
        %1505 = vmatprep.subr.mxu0 0.0
        %1506 = vmatpush1.msra.mxu0 0.0
        %1507 = vmatprep.subr.mxu0 0.0
        %1508 = vmatpush1.msra.mxu0 0.0
        %1509 = vmatprep.subr.mxu0 0.0
        %1510 = vmatpush1.msra.mxu0 0.0
        %1511 = vmatprep.subr.mxu0 0.0
        %1512 = vmatpush1.msra.mxu0 0.0
        %1513 = vmatprep.subr.mxu0 0.0
        %1514 = vmatpush1.msra.mxu0 0.0
        %1515 = vmatprep.subr.mxu0 0.0
        %1516 = vmatpush1.msra.mxu0 0.0
        %1517 = vmatprep.subr.mxu0 0.0
        %1518 = vmatpush1.msra.mxu0 0.0
        %1519 = vmatprep.subr.mxu0 0.0
        %1520 = vmatpush1.msra.mxu0 0.0
        %1521 = vmatprep.subr.mxu0 0.0
        %1522 = vmatpush1.msra.mxu0 0.0
        %1523 = vmatprep.subr.mxu0 0.0
        %1524 = vmatpush1.msra.mxu0 0.0
        %1525 = vmatprep.subr.mxu0 0.0
        %1526 = vmatpush1.msra.mxu0 %v1493
        %1527 = vmatprep.subr.mxu0 0.0
        %1528 = vmatpush2.msra.mxu0 0.0
        %1529 = vmatprep.subr.mxu0 0.0
        %1530 = vmatpush2.msra.mxu0 0.0
        %1531 = vmatprep.subr.mxu0 0.0
        %1532 = vmatpush2.msra.mxu0 0.0
        %1533 = vmatprep.subr.mxu0 0.0
        %1534 = vmatpush2.msra.mxu0 0.0
        %1535 = vmatprep.subr.mxu0 0.0
        %1536 = vmatpush2.msra.mxu0 0.0
        %1537 = vmatprep.subr.mxu0 0.0
        %1538 = vmatpush2.msra.mxu0 0.0
        %1539 = vmatprep.subr.mxu0 0.0
        %1540 = vmatpush2.msra.mxu0 0.0
        %1541 = vmatprep.subr.mxu0 0.0
        %1542 = vmatpush2.msra.mxu0 0.0
        %1543 = vmatprep.subr.mxu0 0.0
        %1544 = vmatpush2.msra.mxu0 0.0
        %1545 = vmatprep.subr.mxu0 0.0
        %1546 = vmatpush2.msra.mxu0 0.0
        %1547 = vmatprep.subr.mxu0 0.0
        %1548 = vmatpush2.msra.mxu0 0.0
        %1549 = vmatprep.subr.mxu0 0.0
        %1550 = vmatpush2.msra.mxu0 0.0
        %1551 = vmatprep.subr.mxu0 0.0
        %1552 = vmatpush2.msra.mxu0 0.0
        %1553 = vmatprep.subr.mxu0 0.0
        %1554 = vmatpush2.msra.mxu0 0.0
        %1555 = vmatprep.subr.mxu0 0.0
        %1556 = vmatpush2.msra.mxu0 0.0
        %1557 = vmatprep.subr.mxu0 0.0
        %1558 = vmatpush2.msra.mxu0 0.0
        %1559 = vmatprep.mubr.f32.mxu0 0.0
        %1560 = vmatmul.mubr.f32.gmra.mxu0 %v1480
        %v1561 = vpop.f32.mrf.mxu0
        %v1562 = vadd.f32 0.0, %v1561
        %v1563 = vpop.f32.mrf.mxu0
        %1564 = vmatprep.mubr.f32.mxu0 0.0
        %1565 = vmatmul.mubr.f32.gmra.mxu0 %v1483
        %v1566 = vpop.f32.mrf.mxu0
        %v1567 = vadd.f32 0.0, %v1566
        %v1568 = vpop.f32.mrf.mxu0
        %1569 = vmatprep.mubr.f32.mxu0 0.0
        %1570 = vmatmul.mubr.f32.gmra.mxu0 %v1486
        %v1571 = vpop.f32.mrf.mxu0
        %v1572 = vadd.f32 0.0, %v1571
        %v1573 = vpop.f32.mrf.mxu0
        %1574 = vmatprep.mubr.f32.mxu0 0.0
        %1575 = vmatmul.mubr.f32.gmra.mxu0 %v1489
        %v1576 = vpop.f32.mrf.mxu0
        %v1577 = vadd.f32 0.0, %v1576
        %v1578 = vpop.f32.mrf.mxu0
        %1579 = vdwg.mxu0
        %v1580 = vsub.f32 %v1221, %v1229
        %v1581 = vsub.f32 %v1224, %v1232
        %v1582 = vsub.f32 %v1229, %v1221
        %v1583 = vsub.f32 %v1232, %v1224
        %v1584 = vmul.f32 %v1562, %v1580
        %v1585 = vmul.f32 %v1567, %v1581
        %v1586 = vmul.f32 %v1572, %v1582
        %v1587 = vmul.f32 %v1577, %v1583
        %v1588 = vadd.f32 %v1229, %v1584
        %v1589 = vadd.f32 %v1232, %v1585
        %v1590 = vadd.f32 %v1221, %v1586
        %v1591 = vadd.f32 %v1224, %v1587
        %v1592 = vpack.c.bf16 %v1589, %v1588
        %v1593 = vpack.c.bf16 %v1591, %v1590
        %v1594 = vld [vmem:[%s788] sm:$0xf]
        %v1595 = vld [vmem:[%s788 + $0x4] sm:$0xf]
        %v1596 = vld [vmem:[%s788 + $0x8] sm:$0xf]
        %v1597 = vld [vmem:[%s788 + $0xc] sm:$0xf]
        %v1598 = vld [vmem:[%s788 + $0x10] sm:$0xf]
        %v1599 = vld [vmem:[%s788 + $0x14] sm:$0xf]
        %v1600 = vld [vmem:[%s788 + $0x18] sm:$0xf]
        %v1601 = vld [vmem:[%s788 + $0x1c] sm:$0xf]
        %v1602 = vld [vmem:[%s791] sm:$0x1]
        %v1604 = vlaneseq
        %v1605 = vshrl.u32 %v1604, 7
        %v1606 = vsub.s32 0, %v1605
        %v1607 = vrot.slane %v1602, %v1606
        %v1617 = vunpack.c.l.b16 %v1594
        %v1618 = vunpack.c.l.b16 %v1595
        %v1619 = vunpack.c.l.b16 %v1596
        %v1620 = vunpack.c.l.b16 %v1597
        %v1621 = vunpack.c.l.b16 %v1598
        %v1622 = vunpack.c.l.b16 %v1599
        %v1623 = vunpack.c.l.b16 %v1600
        %v1624 = vunpack.c.l.b16 %v1601
        %v1625 = vpack.c.b16 %v1618, %v1617
        %v1626 = vpack.c.b16 %v1620, %v1619
        %v1627 = vpack.c.b16 %v1622, %v1621
        %v1628 = vpack.c.b16 %v1624, %v1623
        %v1634 = vsel %vm999, %v1592, 0
        %v1637 = vsel %vm999, %v1593, 0
        %1639 = vmatprep.subr.bf16.mxu0 0
        %1640 = vmatpush1.bf16.msra.mxu0 0
        %1641 = vmatprep.subr.bf16.mxu0 0
        %1642 = vmatpush1.bf16.msra.mxu0 0
        %1643 = vmatprep.subr.bf16.mxu0 0
        %1644 = vmatpush1.bf16.msra.mxu0 0
        %1645 = vmatprep.subr.bf16.mxu0 0
        %1646 = vmatpush1.bf16.msra.mxu0 0
        %1647 = vmatprep.subr.bf16.mxu0 0
        %1648 = vmatpush1.bf16.msra.mxu0 %v1628
        %1649 = vmatprep.subr.bf16.mxu0 0
        %1650 = vmatpush1.bf16.msra.mxu0 %v1627
        %1651 = vmatprep.subr.bf16.mxu0 0
        %1652 = vmatpush1.bf16.msra.mxu0 %v1626
        %1653 = vmatprep.subr.bf16.mxu0 0
        %1654 = vmatpush1.bf16.msra.mxu0 %v1625
        %1655 = vmatprep.subr.bf16.mxu0 0
        %1656 = vmatpush2.bf16.msra.mxu0 0
        %1657 = vmatprep.subr.bf16.mxu0 0
        %1658 = vmatpush2.bf16.msra.mxu0 0
        %1659 = vmatprep.subr.bf16.mxu0 0
        %1660 = vmatpush2.bf16.msra.mxu0 0
        %1661 = vmatprep.subr.bf16.mxu0 0
        %1662 = vmatpush2.bf16.msra.mxu0 0
        %1663 = vmatprep.subr.bf16.mxu0 0
        %1664 = vmatpush2.bf16.msra.mxu0 0
        %1665 = vmatprep.subr.bf16.mxu0 0
        %1666 = vmatpush2.bf16.msra.mxu0 0
        %1667 = vmatprep.subr.bf16.mxu0 0
        %1668 = vmatpush2.bf16.msra.mxu0 0
        %1669 = vmatprep.subr.bf16.mxu0 0
        %1670 = vmatpush2.bf16.msra.mxu0 0
        %1671 = vmatprep.mubr.bf16.mxu0 0
        %1672 = vmatmul.mubr.bf16.gmra.mxu0 %v1634
        %v1673 = vpop.f32.mrf.mxu0
        %v1674 = vadd.f32 %v1607, %v1673
        %v1675 = vpop.f32.mrf.mxu0
        %v1676 = vpop.f32.mrf.mxu0
        %v1677 = vadd.f32 %v1607, %v1676
        %v1678 = vpop.f32.mrf.mxu0
        %1679 = vmatprep.mubr.bf16.mxu0 0
        %1680 = vmatmul.mubr.bf16.gmra.mxu0 %v1637
        %v1681 = vpop.f32.mrf.mxu0
        %v1682 = vadd.f32 %v1607, %v1681
        %v1683 = vpop.f32.mrf.mxu0
        %v1684 = vpop.f32.mrf.mxu0
        %v1685 = vadd.f32 %v1607, %v1684
        %v1686 = vpop.f32.mrf.mxu0
        %1687 = vdwg.mxu0
        %v1688 = vadd.f32 %v954, %v1674
        %v1689 = vadd.f32 %v955, %v1677
        %v1690 = vadd.f32 %v956, %v1682
        %v1691 = vadd.f32 %v957, %v1685
        %v1692 = vld [vmem:[%s794] sm:$0x1]
        %v1693 = vld [vmem:[%s797] sm:$0x1]
        %v1694 = vsel %vm999, %v1688, 0.0
        %1695 = vadd.xlane.f32.xlu0 %v1694
        %v1696 = vpop.xlane.xlu0 %1695
        %v1697 = vsel %vm999, %v1689, 0.0
        %1698 = vadd.xlane.f32.xlu0 %v1697
        %v1699 = vpop.xlane.xlu0 %1698
        %v1700 = vsel %vm999, %v1690, 0.0
        %1701 = vadd.xlane.f32.xlu0 %v1700
        %v1702 = vpop.xlane.xlu0 %1701
        %v1703 = vsel %vm999, %v1691, 0.0
        %1704 = vadd.xlane.f32.xlu0 %v1703
        %v1705 = vpop.xlane.xlu0 %1704
        %v1706 = vrcp.pop 64.0
        %v1707 = vmul.f32 %v1696, %v1706
        %v1708 = vmul.f32 %v1699, %v1706
        %v1709 = vmul.f32 %v1702, %v1706
        %v1710 = vmul.f32 %v1705, %v1706
        %v1711 = vsub.f32 %v1688, %v1707
        %v1712 = vsub.f32 %v1689, %v1708
        %v1713 = vsub.f32 %v1690, %v1709
        %v1714 = vsub.f32 %v1691, %v1710
        %v1715 = vmul.f32 %v1711, %v1711
        %v1716 = vmul.f32 %v1712, %v1712
        %v1717 = vmul.f32 %v1713, %v1713
        %v1718 = vmul.f32 %v1714, %v1714
        %v1719 = vsel %vm999, %v1715, 0.0
        %1720 = vadd.xlane.f32.xlu0 %v1719
        %v1721 = vpop.xlane.xlu0 %1720
        %v1722 = vsel %vm999, %v1716, 0.0
        %1723 = vadd.xlane.f32.xlu0 %v1722
        %v1724 = vpop.xlane.xlu0 %1723
        %v1725 = vsel %vm999, %v1717, 0.0
        %1726 = vadd.xlane.f32.xlu0 %v1725
        %v1727 = vpop.xlane.xlu0 %1726
        %v1728 = vsel %vm999, %v1718, 0.0
        %1729 = vadd.xlane.f32.xlu0 %v1728
        %v1730 = vpop.xlane.xlu0 %1729
        %v1731 = vmul.f32 %v1721, %v1706
        %v1732 = vmul.f32 %v1724, %v1706
        %v1733 = vmul.f32 %v1727, %v1706
        %v1734 = vmul.f32 %v1730, %v1706
        %v1735 = vadd.f32 %v1731, 1e-05
        %v1736 = vadd.f32 %v1732, 1e-05
        %v1737 = vadd.f32 %v1733, 1e-05
        %v1738 = vadd.f32 %v1734, 1e-05
        %v1739 = vrsqrt.pop %v1735
        %v1740 = vrsqrt.pop %v1736
        %v1741 = vrsqrt.pop %v1737
        %v1742 = vrsqrt.pop %v1738
        %v1743 = vmul.f32 %v1711, %v1739
        %v1744 = vmul.f32 %v1712, %v1740
        %v1745 = vmul.f32 %v1713, %v1741
        %v1746 = vmul.f32 %v1714, %v1742
        %v1748 = vlaneseq
        %v1749 = vshrl.u32 %v1748, 7
        %v1750 = vsub.s32 0, %v1749
        %v1751 = vrot.slane %v1692, %v1750
        %v1753 = vmul.f32 %v1743, %v1751
        %v1754 = vmul.f32 %v1744, %v1751
        %v1755 = vmul.f32 %v1745, %v1751
        %v1756 = vmul.f32 %v1746, %v1751
        %v1758 = vlaneseq
        %v1759 = vshrl.u32 %v1758, 7
        %v1760 = vsub.s32 0, %v1759
        %v1761 = vrot.slane %v1693, %v1760
        %v1763 = vadd.f32 %v1753, %v1761
        %v1764 = vadd.f32 %v1754, %v1761
        %v1765 = vadd.f32 %v1755, %v1761
        %v1766 = vadd.f32 %v1756, %v1761
        %v1767 = vpack.c.bf16 %v1764, %v1763
        %v1768 = vpack.c.bf16 %v1766, %v1765
        %v1769 = vld [vmem:[%s802] sm:$0xff]
        %v1770 = vld [vmem:[%s802 + $0x8] sm:$0xff]
        %v1771 = vld [vmem:[%s802 + $0x10] sm:$0xff]
        %v1772 = vld [vmem:[%s802 + $0x18] sm:$0xff]
        %v1773 = vld [vmem:[%s802 + $0x20] sm:$0xff]
        %v1774 = vld [vmem:[%s802 + $0x28] sm:$0xff]
        %v1775 = vld [vmem:[%s802 + $0x30] sm:$0xff]
        %v1776 = vld [vmem:[%s802 + $0x38] sm:$0xff]
        %v1777 = vld [vmem:[%s802 + $0x40] sm:$0xff]
        %v1778 = vld [vmem:[%s802 + $0x48] sm:$0xff]
        %v1779 = vld [vmem:[%s802 + $0x50] sm:$0xff]
        %v1780 = vld [vmem:[%s802 + $0x58] sm:$0xff]
        %v1781 = vld [vmem:[%s802 + $0x60] sm:$0xff]
        %v1782 = vld [vmem:[%s802 + $0x68] sm:$0xff]
        %v1783 = vld [vmem:[%s802 + $0x70] sm:$0xff]
        %v1784 = vld [vmem:[%s802 + $0x78] sm:$0xff]
        %v1785 = vld [vmem:[%s802 + $0x80] sm:$0xff]
        %v1786 = vld [vmem:[%s802 + $0x88] sm:$0xff]
        %v1787 = vld [vmem:[%s802 + $0x90] sm:$0xff]
        %v1788 = vld [vmem:[%s802 + $0x98] sm:$0xff]
        %v1789 = vld [vmem:[%s802 + $0xa0] sm:$0xff]
        %v1790 = vld [vmem:[%s802 + $0xa8] sm:$0xff]
        %v1791 = vld [vmem:[%s802 + $0xb0] sm:$0xff]
        %v1792 = vld [vmem:[%s802 + $0xb8] sm:$0xff]
        %v1793 = vld [vmem:[%s802 + $0xc0] sm:$0xff]
        %v1794 = vld [vmem:[%s802 + $0xc8] sm:$0xff]
        %v1795 = vld [vmem:[%s802 + $0xd0] sm:$0xff]
        %v1796 = vld [vmem:[%s802 + $0xd8] sm:$0xff]
        %v1797 = vld [vmem:[%s802 + $0xe0] sm:$0xff]
        %v1798 = vld [vmem:[%s802 + $0xe8] sm:$0xff]
        %v1799 = vld [vmem:[%s802 + $0xf0] sm:$0xff]
        %v1800 = vld [vmem:[%s802 + $0xf8] sm:$0xff]
        %v1801 = vld [vmem:[%s802 + $0x100] sm:$0xff]
        %v1802 = vld [vmem:[%s802 + $0x108] sm:$0xff]
        %v1803 = vld [vmem:[%s802 + $0x110] sm:$0xff]
        %v1804 = vld [vmem:[%s802 + $0x118] sm:$0xff]
        %v1805 = vld [vmem:[%s802 + $0x120] sm:$0xff]
        %v1806 = vld [vmem:[%s802 + $0x128] sm:$0xff]
        %v1807 = vld [vmem:[%s802 + $0x130] sm:$0xff]
        %v1808 = vld [vmem:[%s802 + $0x138] sm:$0xff]
        %v1809 = vld [vmem:[%s802 + $0x140] sm:$0xff]
        %v1810 = vld [vmem:[%s802 + $0x148] sm:$0xff]
        %v1811 = vld [vmem:[%s802 + $0x150] sm:$0xff]
        %v1812 = vld [vmem:[%s802 + $0x158] sm:$0xff]
        %v1813 = vld [vmem:[%s802 + $0x160] sm:$0xff]
        %v1814 = vld [vmem:[%s802 + $0x168] sm:$0xff]
        %v1815 = vld [vmem:[%s802 + $0x170] sm:$0xff]
        %v1816 = vld [vmem:[%s802 + $0x178] sm:$0xff]
        %v1817 = vld [vmem:[%s802 + $0x180] sm:$0xff]
        %v1818 = vld [vmem:[%s802 + $0x188] sm:$0xff]
        %v1819 = vld [vmem:[%s802 + $0x190] sm:$0xff]
        %v1820 = vld [vmem:[%s802 + $0x198] sm:$0xff]
        %v1821 = vld [vmem:[%s802 + $0x1a0] sm:$0xff]
        %v1822 = vld [vmem:[%s802 + $0x1a8] sm:$0xff]
        %v1823 = vld [vmem:[%s802 + $0x1b0] sm:$0xff]
        %v1824 = vld [vmem:[%s802 + $0x1b8] sm:$0xff]
        %v1825 = vld [vmem:[%s802 + $0x1c0] sm:$0xff]
        %v1826 = vld [vmem:[%s802 + $0x1c8] sm:$0xff]
        %v1827 = vld [vmem:[%s802 + $0x1d0] sm:$0xff]
        %v1828 = vld [vmem:[%s802 + $0x1d8] sm:$0xff]
        %v1829 = vld [vmem:[%s802 + $0x1e0] sm:$0xff]
        %v1830 = vld [vmem:[%s802 + $0x1e8] sm:$0xff]
        %v1831 = vld [vmem:[%s802 + $0x1f0] sm:$0xff]
        %v1832 = vld [vmem:[%s802 + $0x1f8] sm:$0xff]
        %v1833 = vld [vmem:[%s806] sm:$0xff]
        %v1834 = vld [vmem:[%s806 + $0x8] sm:$0xff]
        %v1837 = vlaneseq
        %v1838 = vshrl.u32 %v1837, 7
        %v1839 = vsub.s32 0, %v1838
        %v1840 = vrot.slane %v1833, %v1839
        %v1841 = vlaneseq
        %v1842 = vshrl.u32 %v1841, 7
        %v1843 = vsub.s32 1, %v1842
        %v1844 = vrot.slane %v1833, %v1843
        %v1845 = vlaneseq
        %v1846 = vshrl.u32 %v1845, 7
        %v1847 = vsub.s32 2, %v1846
        %v1848 = vrot.slane %v1833, %v1847
        %v1849 = vlaneseq
        %v1850 = vshrl.u32 %v1849, 7
        %v1851 = vsub.s32 3, %v1850
        %v1852 = vrot.slane %v1833, %v1851
        %v1853 = vlaneseq
        %v1854 = vshrl.u32 %v1853, 7
        %v1855 = vsub.s32 4, %v1854
        %v1856 = vrot.slane %v1833, %v1855
        %v1857 = vlaneseq
        %v1858 = vshrl.u32 %v1857, 7
        %v1859 = vsub.s32 5, %v1858
        %v1860 = vrot.slane %v1833, %v1859
        %v1861 = vlaneseq
        %v1862 = vshrl.u32 %v1861, 7
        %v1863 = vsub.s32 6, %v1862
        %v1864 = vrot.slane %v1833, %v1863
        %v1865 = vlaneseq
        %v1866 = vshrl.u32 %v1865, 7
        %v1867 = vsub.s32 7, %v1866
        %v1868 = vrot.slane %v1833, %v1867
        %v1869 = vlaneseq
        %v1870 = vshrl.u32 %v1869, 7
        %v1871 = vsub.s32 0, %v1870
        %v1872 = vrot.slane %v1834, %v1871
        %v1873 = vlaneseq
        %v1874 = vshrl.u32 %v1873, 7
        %v1875 = vsub.s32 1, %v1874
        %v1876 = vrot.slane %v1834, %v1875
        %v1877 = vlaneseq
        %v1878 = vshrl.u32 %v1877, 7
        %v1879 = vsub.s32 2, %v1878
        %v1880 = vrot.slane %v1834, %v1879
        %v1881 = vlaneseq
        %v1882 = vshrl.u32 %v1881, 7
        %v1883 = vsub.s32 3, %v1882
        %v1884 = vrot.slane %v1834, %v1883
        %v1885 = vlaneseq
        %v1886 = vshrl.u32 %v1885, 7
        %v1887 = vsub.s32 4, %v1886
        %v1888 = vrot.slane %v1834, %v1887
        %v1889 = vlaneseq
        %v1890 = vshrl.u32 %v1889, 7
        %v1891 = vsub.s32 5, %v1890
        %v1892 = vrot.slane %v1834, %v1891
        %v1893 = vlaneseq
        %v1894 = vshrl.u32 %v1893, 7
        %v1895 = vsub.s32 6, %v1894
        %v1896 = vrot.slane %v1834, %v1895
        %v1897 = vlaneseq
        %v1898 = vshrl.u32 %v1897, 7
        %v1899 = vsub.s32 7, %v1898
        %v1900 = vrot.slane %v1834, %v1899
        %v1981 = vunpack.c.l.b16 %v1769
        %v1982 = vunpack.c.h.b16 %v1769
        %v1983 = vunpack.c.l.b16 %v1770
        %v1984 = vunpack.c.h.b16 %v1770
        %v1985 = vunpack.c.l.b16 %v1771
        %v1986 = vunpack.c.h.b16 %v1771
        %v1987 = vunpack.c.l.b16 %v1772
        %v1988 = vunpack.c.h.b16 %v1772
        %v1989 = vunpack.c.l.b16 %v1773
        %v1990 = vunpack.c.h.b16 %v1773
        %v1991 = vunpack.c.l.b16 %v1774
        %v1992 = vunpack.c.h.b16 %v1774
        %v1993 = vunpack.c.l.b16 %v1775
        %v1994 = vunpack.c.h.b16 %v1775
        %v1995 = vunpack.c.l.b16 %v1776
        %v1996 = vunpack.c.h.b16 %v1776
        %v1997 = vunpack.c.l.b16 %v1777
        %v1998 = vunpack.c.h.b16 %v1777
        %v1999 = vunpack.c.l.b16 %v1778
        %v2000 = vunpack.c.h.b16 %v1778
        %v2001 = vunpack.c.l.b16 %v1779
        %v2002 = vunpack.c.h.b16 %v1779
        %v2003 = vunpack.c.l.b16 %v1780
        %v2004 = vunpack.c.h.b16 %v1780
        %v2005 = vunpack.c.l.b16 %v1781
        %v2006 = vunpack.c.h.b16 %v1781
        %v2007 = vunpack.c.l.b16 %v1782
        %v2008 = vunpack.c.h.b16 %v1782
        %v2009 = vunpack.c.l.b16 %v1783
        %v2010 = vunpack.c.h.b16 %v1783
        %v2011 = vunpack.c.l.b16 %v1784
        %v2012 = vunpack.c.h.b16 %v1784
        %v2013 = vunpack.c.l.b16 %v1785
        %v2014 = vunpack.c.h.b16 %v1785
        %v2015 = vunpack.c.l.b16 %v1786
        %v2016 = vunpack.c.h.b16 %v1786
        %v2017 = vunpack.c.l.b16 %v1787
        %v2018 = vunpack.c.h.b16 %v1787
        %v2019 = vunpack.c.l.b16 %v1788
        %v2020 = vunpack.c.h.b16 %v1788
        %v2021 = vunpack.c.l.b16 %v1789
        %v2022 = vunpack.c.h.b16 %v1789
        %v2023 = vunpack.c.l.b16 %v1790
        %v2024 = vunpack.c.h.b16 %v1790
        %v2025 = vunpack.c.l.b16 %v1791
        %v2026 = vunpack.c.h.b16 %v1791
        %v2027 = vunpack.c.l.b16 %v1792
        %v2028 = vunpack.c.h.b16 %v1792
        %v2029 = vunpack.c.l.b16 %v1793
        %v2030 = vunpack.c.h.b16 %v1793
        %v2031 = vunpack.c.l.b16 %v1794
        %v2032 = vunpack.c.h.b16 %v1794
        %v2033 = vunpack.c.l.b16 %v1795
        %v2034 = vunpack.c.h.b16 %v1795
        %v2035 = vunpack.c.l.b16 %v1796
        %v2036 = vunpack.c.h.b16 %v1796
        %v2037 = vunpack.c.l.b16 %v1797
        %v2038 = vunpack.c.h.b16 %v1797
        %v2039 = vunpack.c.l.b16 %v1798
        %v2040 = vunpack.c.h.b16 %v1798
        %v2041 = vunpack.c.l.b16 %v1799
        %v2042 = vunpack.c.h.b16 %v1799
        %v2043 = vunpack.c.l.b16 %v1800
        %v2044 = vunpack.c.h.b16 %v1800
        %v2045 = vunpack.c.l.b16 %v1801
        %v2046 = vunpack.c.h.b16 %v1801
        %v2047 = vunpack.c.l.b16 %v1802
        %v2048 = vunpack.c.h.b16 %v1802
        %v2049 = vunpack.c.l.b16 %v1803
        %v2050 = vunpack.c.h.b16 %v1803
        %v2051 = vunpack.c.l.b16 %v1804
        %v2052 = vunpack.c.h.b16 %v1804
        %v2053 = vunpack.c.l.b16 %v1805
        %v2054 = vunpack.c.h.b16 %v1805
        %v2055 = vunpack.c.l.b16 %v1806
        %v2056 = vunpack.c.h.b16 %v1806
        %v2057 = vunpack.c.l.b16 %v1807
        %v2058 = vunpack.c.h.b16 %v1807
        %v2059 = vunpack.c.l.b16 %v1808
        %v2060 = vunpack.c.h.b16 %v1808
        %v2061 = vunpack.c.l.b16 %v1809
        %v2062 = vunpack.c.h.b16 %v1809
        %v2063 = vunpack.c.l.b16 %v1810
        %v2064 = vunpack.c.h.b16 %v1810
        %v2065 = vunpack.c.l.b16 %v1811
        %v2066 = vunpack.c.h.b16 %v1811
        %v2067 = vunpack.c.l.b16 %v1812
        %v2068 = vunpack.c.h.b16 %v1812
        %v2069 = vunpack.c.l.b16 %v1813
        %v2070 = vunpack.c.h.b16 %v1813
        %v2071 = vunpack.c.l.b16 %v1814
        %v2072 = vunpack.c.h.b16 %v1814
        %v2073 = vunpack.c.l.b16 %v1815
        %v2074 = vunpack.c.h.b16 %v1815
        %v2075 = vunpack.c.l.b16 %v1816
        %v2076 = vunpack.c.h.b16 %v1816
        %v2077 = vunpack.c.l.b16 %v1817
        %v2078 = vunpack.c.h.b16 %v1817
        %v2079 = vunpack.c.l.b16 %v1818
        %v2080 = vunpack.c.h.b16 %v1818
        %v2081 = vunpack.c.l.b16 %v1819
        %v2082 = vunpack.c.h.b16 %v1819
        %v2083 = vunpack.c.l.b16 %v1820
        %v2084 = vunpack.c.h.b16 %v1820
        %v2085 = vunpack.c.l.b16 %v1821
        %v2086 = vunpack.c.h.b16 %v1821
        %v2087 = vunpack.c.l.b16 %v1822
        %v2088 = vunpack.c.h.b16 %v1822
        %v2089 = vunpack.c.l.b16 %v1823
        %v2090 = vunpack.c.h.b16 %v1823
        %v2091 = vunpack.c.l.b16 %v1824
        %v2092 = vunpack.c.h.b16 %v1824
        %v2093 = vunpack.c.l.b16 %v1825
        %v2094 = vunpack.c.h.b16 %v1825
        %v2095 = vunpack.c.l.b16 %v1826
        %v2096 = vunpack.c.h.b16 %v1826
        %v2097 = vunpack.c.l.b16 %v1827
        %v2098 = vunpack.c.h.b16 %v1827
        %v2099 = vunpack.c.l.b16 %v1828
        %v2100 = vunpack.c.h.b16 %v1828
        %v2101 = vunpack.c.l.b16 %v1829
        %v2102 = vunpack.c.h.b16 %v1829
        %v2103 = vunpack.c.l.b16 %v1830
        %v2104 = vunpack.c.h.b16 %v1830
        %v2105 = vunpack.c.l.b16 %v1831
        %v2106 = vunpack.c.h.b16 %v1831
        %v2107 = vunpack.c.l.b16 %v1832
        %v2108 = vunpack.c.h.b16 %v1832
        %v2109 = vpack.c.b16 %v1997, %v1981
        %v2110 = vpack.c.b16 %v1998, %v1982
        %v2111 = vpack.c.b16 %v1999, %v1983
        %v2112 = vpack.c.b16 %v2000, %v1984
        %v2113 = vpack.c.b16 %v2001, %v1985
        %v2114 = vpack.c.b16 %v2002, %v1986
        %v2115 = vpack.c.b16 %v2003, %v1987
        %v2116 = vpack.c.b16 %v2004, %v1988
        %v2117 = vpack.c.b16 %v2005, %v1989
        %v2118 = vpack.c.b16 %v2006, %v1990
        %v2119 = vpack.c.b16 %v2007, %v1991
        %v2120 = vpack.c.b16 %v2008, %v1992
        %v2121 = vpack.c.b16 %v2009, %v1993
        %v2122 = vpack.c.b16 %v2010, %v1994
        %v2123 = vpack.c.b16 %v2011, %v1995
        %v2124 = vpack.c.b16 %v2012, %v1996
        %v2125 = vpack.c.b16 %v2029, %v2013
        %v2126 = vpack.c.b16 %v2030, %v2014
        %v2127 = vpack.c.b16 %v2031, %v2015
        %v2128 = vpack.c.b16 %v2032, %v2016
        %v2129 = vpack.c.b16 %v2033, %v2017
        %v2130 = vpack.c.b16 %v2034, %v2018
        %v2131 = vpack.c.b16 %v2035, %v2019
        %v2132 = vpack.c.b16 %v2036, %v2020
        %v2133 = vpack.c.b16 %v2037, %v2021
        %v2134 = vpack.c.b16 %v2038, %v2022
        %v2135 = vpack.c.b16 %v2039, %v2023
        %v2136 = vpack.c.b16 %v2040, %v2024
        %v2137 = vpack.c.b16 %v2041, %v2025
        %v2138 = vpack.c.b16 %v2042, %v2026
        %v2139 = vpack.c.b16 %v2043, %v2027
        %v2140 = vpack.c.b16 %v2044, %v2028
        %v2141 = vpack.c.b16 %v2061, %v2045
        %v2142 = vpack.c.b16 %v2062, %v2046
        %v2143 = vpack.c.b16 %v2063, %v2047
        %v2144 = vpack.c.b16 %v2064, %v2048
        %v2145 = vpack.c.b16 %v2065, %v2049
        %v2146 = vpack.c.b16 %v2066, %v2050
        %v2147 = vpack.c.b16 %v2067, %v2051
        %v2148 = vpack.c.b16 %v2068, %v2052
        %v2149 = vpack.c.b16 %v2069, %v2053
        %v2150 = vpack.c.b16 %v2070, %v2054
        %v2151 = vpack.c.b16 %v2071, %v2055
        %v2152 = vpack.c.b16 %v2072, %v2056
        %v2153 = vpack.c.b16 %v2073, %v2057
        %v2154 = vpack.c.b16 %v2074, %v2058
        %v2155 = vpack.c.b16 %v2075, %v2059
        %v2156 = vpack.c.b16 %v2076, %v2060
        %v2157 = vpack.c.b16 %v2093, %v2077
        %v2158 = vpack.c.b16 %v2094, %v2078
        %v2159 = vpack.c.b16 %v2095, %v2079
        %v2160 = vpack.c.b16 %v2096, %v2080
        %v2161 = vpack.c.b16 %v2097, %v2081
        %v2162 = vpack.c.b16 %v2098, %v2082
        %v2163 = vpack.c.b16 %v2099, %v2083
        %v2164 = vpack.c.b16 %v2100, %v2084
        %v2165 = vpack.c.b16 %v2101, %v2085
        %v2166 = vpack.c.b16 %v2102, %v2086
        %v2167 = vpack.c.b16 %v2103, %v2087
        %v2168 = vpack.c.b16 %v2104, %v2088
        %v2169 = vpack.c.b16 %v2105, %v2089
        %v2170 = vpack.c.b16 %v2106, %v2090
        %v2171 = vpack.c.b16 %v2107, %v2091
        %v2172 = vpack.c.b16 %v2108, %v2092
        %v2238 = vsel %vm999, %v1767, 0
        %v2241 = vsel %vm999, %v1768, 0
        %2243 = vmatprep.subr.bf16.mxu0 0
        %2244 = vmatpush1.bf16.msra.mxu0 0
        %2245 = vmatprep.subr.bf16.mxu0 0
        %2246 = vmatpush1.bf16.msra.mxu0 0
        %2247 = vmatprep.subr.bf16.mxu0 0
        %2248 = vmatpush1.bf16.msra.mxu0 0
        %2249 = vmatprep.subr.bf16.mxu0 0
        %2250 = vmatpush1.bf16.msra.mxu0 0
        %2251 = vmatprep.subr.bf16.mxu0 %v2158
        %2252 = vmatpush1.bf16.msra.mxu0 %v2157
        %2253 = vmatprep.subr.bf16.mxu0 %v2142
        %2254 = vmatpush1.bf16.msra.mxu0 %v2141
        %2255 = vmatprep.subr.bf16.mxu0 %v2126
        %2256 = vmatpush1.bf16.msra.mxu0 %v2125
        %2257 = vmatprep.subr.bf16.mxu0 %v2110
        %2258 = vmatpush1.bf16.msra.mxu0 %v2109
        %2259 = vmatprep.subr.bf16.mxu0 0
        %2260 = vmatpush2.bf16.msra.mxu0 0
        %2261 = vmatprep.subr.bf16.mxu0 0
        %2262 = vmatpush2.bf16.msra.mxu0 0
        %2263 = vmatprep.subr.bf16.mxu0 0
        %2264 = vmatpush2.bf16.msra.mxu0 0
        %2265 = vmatprep.subr.bf16.mxu0 0
        %2266 = vmatpush2.bf16.msra.mxu0 0
        %2267 = vmatprep.subr.bf16.mxu0 0
        %2268 = vmatpush2.bf16.msra.mxu0 0
        %2269 = vmatprep.subr.bf16.mxu0 0
        %2270 = vmatpush2.bf16.msra.mxu0 0
        %2271 = vmatprep.subr.bf16.mxu0 0
        %2272 = vmatpush2.bf16.msra.mxu0 0
        %2273 = vmatprep.subr.bf16.mxu0 0
        %2274 = vmatpush2.bf16.msra.mxu0 0
        %2275 = vmatprep.mubr.bf16.mxu0 0
        %2276 = vmatmul.mubr.bf16.gmra.mxu0 %v2238
        %v2277 = vpop.f32.mrf.mxu0
        %v2278 = vadd.f32 %v1840, %v2277
        %v2279 = vpop.f32.mrf.mxu0
        %v2280 = vadd.f32 %v1844, %v2279
        %v2281 = vpop.f32.mrf.mxu0
        %v2282 = vadd.f32 %v1840, %v2281
        %v2283 = vpop.f32.mrf.mxu0
        %v2284 = vadd.f32 %v1844, %v2283
        %2285 = vmatprep.mubr.bf16.mxu0 0
        %2286 = vmatmul.mubr.bf16.gmra.mxu0 %v2241
        %v2287 = vpop.f32.mrf.mxu0
        %v2288 = vadd.f32 %v1840, %v2287
        %v2289 = vpop.f32.mrf.mxu0
        %v2290 = vadd.f32 %v1844, %v2289
        %v2291 = vpop.f32.mrf.mxu0
        %v2292 = vadd.f32 %v1840, %v2291
        %v2293 = vpop.f32.mrf.mxu0
        %v2294 = vadd.f32 %v1844, %v2293
        %2295 = vdwg.mxu0
        %2296 = vmatprep.subr.bf16.mxu0 0
        %2297 = vmatpush1.bf16.msra.mxu0 0
        %2298 = vmatprep.subr.bf16.mxu0 0
        %2299 = vmatpush1.bf16.msra.mxu0 0
        %2300 = vmatprep.subr.bf16.mxu0 0
        %2301 = vmatpush1.bf16.msra.mxu0 0
        %2302 = vmatprep.subr.bf16.mxu0 0
        %2303 = vmatpush1.bf16.msra.mxu0 0
        %2304 = vmatprep.subr.bf16.mxu0 %v2160
        %2305 = vmatpush1.bf16.msra.mxu0 %v2159
        %2306 = vmatprep.subr.bf16.mxu0 %v2144
        %2307 = vmatpush1.bf16.msra.mxu0 %v2143
        %2308 = vmatprep.subr.bf16.mxu0 %v2128
        %2309 = vmatpush1.bf16.msra.mxu0 %v2127
        %2310 = vmatprep.subr.bf16.mxu0 %v2112
        %2311 = vmatpush1.bf16.msra.mxu0 %v2111
        %2312 = vmatprep.subr.bf16.mxu0 0
        %2313 = vmatpush2.bf16.msra.mxu0 0
        %2314 = vmatprep.subr.bf16.mxu0 0
        %2315 = vmatpush2.bf16.msra.mxu0 0
        %2316 = vmatprep.subr.bf16.mxu0 0
        %2317 = vmatpush2.bf16.msra.mxu0 0
        %2318 = vmatprep.subr.bf16.mxu0 0
        %2319 = vmatpush2.bf16.msra.mxu0 0
        %2320 = vmatprep.subr.bf16.mxu0 0
        %2321 = vmatpush2.bf16.msra.mxu0 0
        %2322 = vmatprep.subr.bf16.mxu0 0
        %2323 = vmatpush2.bf16.msra.mxu0 0
        %2324 = vmatprep.subr.bf16.mxu0 0
        %2325 = vmatpush2.bf16.msra.mxu0 0
        %2326 = vmatprep.subr.bf16.mxu0 0
        %2327 = vmatpush2.bf16.msra.mxu0 0
        %2328 = vmatprep.mubr.bf16.mxu0 0
        %2329 = vmatmul.mubr.bf16.gmra.mxu0 %v2238
        %v2330 = vpop.f32.mrf.mxu0
        %v2331 = vadd.f32 %v1848, %v2330
        %v2332 = vpop.f32.mrf.mxu0
        %v2333 = vadd.f32 %v1852, %v2332
        %v2334 = vpop.f32.mrf.mxu0
        %v2335 = vadd.f32 %v1848, %v2334
        %v2336 = vpop.f32.mrf.mxu0
        %v2337 = vadd.f32 %v1852, %v2336
        %2338 = vmatprep.mubr.bf16.mxu0 0
        %2339 = vmatmul.mubr.bf16.gmra.mxu0 %v2241
        %v2340 = vpop.f32.mrf.mxu0
        %v2341 = vadd.f32 %v1848, %v2340
        %v2342 = vpop.f32.mrf.mxu0
        %v2343 = vadd.f32 %v1852, %v2342
        %v2344 = vpop.f32.mrf.mxu0
        %v2345 = vadd.f32 %v1848, %v2344
        %v2346 = vpop.f32.mrf.mxu0
        %v2347 = vadd.f32 %v1852, %v2346
        %2348 = vdwg.mxu0
        %2349 = vmatprep.subr.bf16.mxu0 0
        %2350 = vmatpush1.bf16.msra.mxu0 0
        %2351 = vmatprep.subr.bf16.mxu0 0
        %2352 = vmatpush1.bf16.msra.mxu0 0
        %2353 = vmatprep.subr.bf16.mxu0 0
        %2354 = vmatpush1.bf16.msra.mxu0 0
        %2355 = vmatprep.subr.bf16.mxu0 0
        %2356 = vmatpush1.bf16.msra.mxu0 0
        %2357 = vmatprep.subr.bf16.mxu0 %v2162
        %2358 = vmatpush1.bf16.msra.mxu0 %v2161
        %2359 = vmatprep.subr.bf16.mxu0 %v2146
        %2360 = vmatpush1.bf16.msra.mxu0 %v2145
        %2361 = vmatprep.subr.bf16.mxu0 %v2130
        %2362 = vmatpush1.bf16.msra.mxu0 %v2129
        %2363 = vmatprep.subr.bf16.mxu0 %v2114
        %2364 = vmatpush1.bf16.msra.mxu0 %v2113
        %2365 = vmatprep.subr.bf16.mxu0 0
        %2366 = vmatpush2.bf16.msra.mxu0 0
        %2367 = vmatprep.subr.bf16.mxu0 0
        %2368 = vmatpush2.bf16.msra.mxu0 0
        %2369 = vmatprep.subr.bf16.mxu0 0
        %2370 = vmatpush2.bf16.msra.mxu0 0
        %2371 = vmatprep.subr.bf16.mxu0 0
        %2372 = vmatpush2.bf16.msra.mxu0 0
        %2373 = vmatprep.subr.bf16.mxu0 0
        %2374 = vmatpush2.bf16.msra.mxu0 0
        %2375 = vmatprep.subr.bf16.mxu0 0
        %2376 = vmatpush2.bf16.msra.mxu0 0
        %2377 = vmatprep.subr.bf16.mxu0 0
        %2378 = vmatpush2.bf16.msra.mxu0 0
        %2379 = vmatprep.subr.bf16.mxu0 0
        %2380 = vmatpush2.bf16.msra.mxu0 0
        %2381 = vmatprep.mubr.bf16.mxu0 0
        %2382 = vmatmul.mubr.bf16.gmra.mxu0 %v2238
        %v2383 = vpop.f32.mrf.mxu0
        %v2384 = vadd.f32 %v1856, %v2383
        %v2385 = vpop.f32.mrf.mxu0
        %v2386 = vadd.f32 %v1860, %v2385
        %v2387 = vpop.f32.mrf.mxu0
        %v2388 = vadd.f32 %v1856, %v2387
        %v2389 = vpop.f32.mrf.mxu0
        %v2390 = vadd.f32 %v1860, %v2389
        %2391 = vmatprep.mubr.bf16.mxu0 0
        %2392 = vmatmul.mubr.bf16.gmra.mxu0 %v2241
        %v2393 = vpop.f32.mrf.mxu0
        %v2394 = vadd.f32 %v1856, %v2393
        %v2395 = vpop.f32.mrf.mxu0
        %v2396 = vadd.f32 %v1860, %v2395
        %v2397 = vpop.f32.mrf.mxu0
        %v2398 = vadd.f32 %v1856, %v2397
        %v2399 = vpop.f32.mrf.mxu0
        %v2400 = vadd.f32 %v1860, %v2399
        %2401 = vdwg.mxu0
        %2402 = vmatprep.subr.bf16.mxu0 0
        %2403 = vmatpush1.bf16.msra.mxu0 0
        %2404 = vmatprep.subr.bf16.mxu0 0
        %2405 = vmatpush1.bf16.msra.mxu0 0
        %2406 = vmatprep.subr.bf16.mxu0 0
        %2407 = vmatpush1.bf16.msra.mxu0 0
        %2408 = vmatprep.subr.bf16.mxu0 0
        %2409 = vmatpush1.bf16.msra.mxu0 0
        %2410 = vmatprep.subr.bf16.mxu0 %v2164
        %2411 = vmatpush1.bf16.msra.mxu0 %v2163
        %2412 = vmatprep.subr.bf16.mxu0 %v2148
        %2413 = vmatpush1.bf16.msra.mxu0 %v2147
        %2414 = vmatprep.subr.bf16.mxu0 %v2132
        %2415 = vmatpush1.bf16.msra.mxu0 %v2131
        %2416 = vmatprep.subr.bf16.mxu0 %v2116
        %2417 = vmatpush1.bf16.msra.mxu0 %v2115
        %2418 = vmatprep.subr.bf16.mxu0 0
        %2419 = vmatpush2.bf16.msra.mxu0 0
        %2420 = vmatprep.subr.bf16.mxu0 0
        %2421 = vmatpush2.bf16.msra.mxu0 0
        %2422 = vmatprep.subr.bf16.mxu0 0
        %2423 = vmatpush2.bf16.msra.mxu0 0
        %2424 = vmatprep.subr.bf16.mxu0 0
        %2425 = vmatpush2.bf16.msra.mxu0 0
        %2426 = vmatprep.subr.bf16.mxu0 0
        %2427 = vmatpush2.bf16.msra.mxu0 0
        %2428 = vmatprep.subr.bf16.mxu0 0
        %2429 = vmatpush2.bf16.msra.mxu0 0
        %2430 = vmatprep.subr.bf16.mxu0 0
        %2431 = vmatpush2.bf16.msra.mxu0 0
        %2432 = vmatprep.subr.bf16.mxu0 0
        %2433 = vmatpush2.bf16.msra.mxu0 0
        %2434 = vmatprep.mubr.bf16.mxu0 0
        %2435 = vmatmul.mubr.bf16.gmra.mxu0 %v2238
        %v2436 = vpop.f32.mrf.mxu0
        %v2437 = vadd.f32 %v1864, %v2436
        %v2438 = vpop.f32.mrf.mxu0
        %v2439 = vadd.f32 %v1868, %v2438
        %v2440 = vpop.f32.mrf.mxu0
        %v2441 = vadd.f32 %v1864, %v2440
        %v2442 = vpop.f32.mrf.mxu0
        %v2443 = vadd.f32 %v1868, %v2442
        %2444 = vmatprep.mubr.bf16.mxu0 0
        %2445 = vmatmul.mubr.bf16.gmra.mxu0 %v2241
        %v2446 = vpop.f32.mrf.mxu0
        %v2447 = vadd.f32 %v1864, %v2446
        %v2448 = vpop.f32.mrf.mxu0
        %v2449 = vadd.f32 %v1868, %v2448
        %v2450 = vpop.f32.mrf.mxu0
        %v2451 = vadd.f32 %v1864, %v2450
        %v2452 = vpop.f32.mrf.mxu0
        %v2453 = vadd.f32 %v1868, %v2452
        %2454 = vdwg.mxu0
        %2455 = vmatprep.subr.bf16.mxu0 0
        %2456 = vmatpush1.bf16.msra.mxu0 0
        %2457 = vmatprep.subr.bf16.mxu0 0
        %2458 = vmatpush1.bf16.msra.mxu0 0
        %2459 = vmatprep.subr.bf16.mxu0 0
        %2460 = vmatpush1.bf16.msra.mxu0 0
        %2461 = vmatprep.subr.bf16.mxu0 0
        %2462 = vmatpush1.bf16.msra.mxu0 0
        %2463 = vmatprep.subr.bf16.mxu0 %v2166
        %2464 = vmatpush1.bf16.msra.mxu0 %v2165
        %2465 = vmatprep.subr.bf16.mxu0 %v2150
        %2466 = vmatpush1.bf16.msra.mxu0 %v2149
        %2467 = vmatprep.subr.bf16.mxu0 %v2134
        %2468 = vmatpush1.bf16.msra.mxu0 %v2133
        %2469 = vmatprep.subr.bf16.mxu0 %v2118
        %2470 = vmatpush1.bf16.msra.mxu0 %v2117
        %2471 = vmatprep.subr.bf16.mxu0 0
        %2472 = vmatpush2.bf16.msra.mxu0 0
        %2473 = vmatprep.subr.bf16.mxu0 0
        %2474 = vmatpush2.bf16.msra.mxu0 0
        %2475 = vmatprep.subr.bf16.mxu0 0
        %2476 = vmatpush2.bf16.msra.mxu0 0
        %2477 = vmatprep.subr.bf16.mxu0 0
        %2478 = vmatpush2.bf16.msra.mxu0 0
        %2479 = vmatprep.subr.bf16.mxu0 0
        %2480 = vmatpush2.bf16.msra.mxu0 0
        %2481 = vmatprep.subr.bf16.mxu0 0
        %2482 = vmatpush2.bf16.msra.mxu0 0
        %2483 = vmatprep.subr.bf16.mxu0 0
        %2484 = vmatpush2.bf16.msra.mxu0 0
        %2485 = vmatprep.subr.bf16.mxu0 0
        %2486 = vmatpush2.bf16.msra.mxu0 0
        %2487 = vmatprep.mubr.bf16.mxu0 0
        %2488 = vmatmul.mubr.bf16.gmra.mxu0 %v2238
        %v2489 = vpop.f32.mrf.mxu0
        %v2490 = vadd.f32 %v1872, %v2489
        %v2491 = vpop.f32.mrf.mxu0
        %v2492 = vadd.f32 %v1876, %v2491
        %v2493 = vpop.f32.mrf.mxu0
        %v2494 = vadd.f32 %v1872, %v2493
        %v2495 = vpop.f32.mrf.mxu0
        %v2496 = vadd.f32 %v1876, %v2495
        %2497 = vmatprep.mubr.bf16.mxu0 0
        %2498 = vmatmul.mubr.bf16.gmra.mxu0 %v2241
        %v2499 = vpop.f32.mrf.mxu0
        %v2500 = vadd.f32 %v1872, %v2499
        %v2501 = vpop.f32.mrf.mxu0
        %v2502 = vadd.f32 %v1876, %v2501
        %v2503 = vpop.f32.mrf.mxu0
        %v2504 = vadd.f32 %v1872, %v2503
        %v2505 = vpop.f32.mrf.mxu0
        %v2506 = vadd.f32 %v1876, %v2505
        %2507 = vdwg.mxu0
        %2508 = vmatprep.subr.bf16.mxu0 0
        %2509 = vmatpush1.bf16.msra.mxu0 0
        %2510 = vmatprep.subr.bf16.mxu0 0
        %2511 = vmatpush1.bf16.msra.mxu0 0
        %2512 = vmatprep.subr.bf16.mxu0 0
        %2513 = vmatpush1.bf16.msra.mxu0 0
        %2514 = vmatprep.subr.bf16.mxu0 0
        %2515 = vmatpush1.bf16.msra.mxu0 0
        %2516 = vmatprep.subr.bf16.mxu0 %v2168
        %2517 = vmatpush1.bf16.msra.mxu0 %v2167
        %2518 = vmatprep.subr.bf16.mxu0 %v2152
        %2519 = vmatpush1.bf16.msra.mxu0 %v2151
        %2520 = vmatprep.subr.bf16.mxu0 %v2136
        %2521 = vmatpush1.bf16.msra.mxu0 %v2135
        %2522 = vmatprep.subr.bf16.mxu0 %v2120
        %2523 = vmatpush1.bf16.msra.mxu0 %v2119
        %2524 = vmatprep.subr.bf16.mxu0 0
        %2525 = vmatpush2.bf16.msra.mxu0 0
        %2526 = vmatprep.subr.bf16.mxu0 0
        %2527 = vmatpush2.bf16.msra.mxu0 0
        %2528 = vmatprep.subr.bf16.mxu0 0
        %2529 = vmatpush2.bf16.msra.mxu0 0
        %2530 = vmatprep.subr.bf16.mxu0 0
        %2531 = vmatpush2.bf16.msra.mxu0 0
        %2532 = vmatprep.subr.bf16.mxu0 0
        %2533 = vmatpush2.bf16.msra.mxu0 0
        %2534 = vmatprep.subr.bf16.mxu0 0
        %2535 = vmatpush2.bf16.msra.mxu0 0
        %2536 = vmatprep.subr.bf16.mxu0 0
        %2537 = vmatpush2.bf16.msra.mxu0 0
        %2538 = vmatprep.subr.bf16.mxu0 0
        %2539 = vmatpush2.bf16.msra.mxu0 0
        %2540 = vmatprep.mubr.bf16.mxu0 0
        %2541 = vmatmul.mubr.bf16.gmra.mxu0 %v2238
        %v2542 = vpop.f32.mrf.mxu0
        %v2543 = vadd.f32 %v1880, %v2542
        %v2544 = vpop.f32.mrf.mxu0
        %v2545 = vadd.f32 %v1884, %v2544
        %v2546 = vpop.f32.mrf.mxu0
        %v2547 = vadd.f32 %v1880, %v2546
        %v2548 = vpop.f32.mrf.mxu0
        %v2549 = vadd.f32 %v1884, %v2548
        %2550 = vmatprep.mubr.bf16.mxu0 0
        %2551 = vmatmul.mubr.bf16.gmra.mxu0 %v2241
        %v2552 = vpop.f32.mrf.mxu0
        %v2553 = vadd.f32 %v1880, %v2552
        %v2554 = vpop.f32.mrf.mxu0
        %v2555 = vadd.f32 %v1884, %v2554
        %v2556 = vpop.f32.mrf.mxu0
        %v2557 = vadd.f32 %v1880, %v2556
        %v2558 = vpop.f32.mrf.mxu0
        %v2559 = vadd.f32 %v1884, %v2558
        %2560 = vdwg.mxu0
        %2561 = vmatprep.subr.bf16.mxu0 0
        %2562 = vmatpush1.bf16.msra.mxu0 0
        %2563 = vmatprep.subr.bf16.mxu0 0
        %2564 = vmatpush1.bf16.msra.mxu0 0
        %2565 = vmatprep.subr.bf16.mxu0 0
        %2566 = vmatpush1.bf16.msra.mxu0 0
        %2567 = vmatprep.subr.bf16.mxu0 0
        %2568 = vmatpush1.bf16.msra.mxu0 0
        %2569 = vmatprep.subr.bf16.mxu0 %v2170
        %2570 = vmatpush1.bf16.msra.mxu0 %v2169
        %2571 = vmatprep.subr.bf16.mxu0 %v2154
        %2572 = vmatpush1.bf16.msra.mxu0 %v2153
        %2573 = vmatprep.subr.bf16.mxu0 %v2138
        %2574 = vmatpush1.bf16.msra.mxu0 %v2137
        %2575 = vmatprep.subr.bf16.mxu0 %v2122
        %2576 = vmatpush1.bf16.msra.mxu0 %v2121
        %2577 = vmatprep.subr.bf16.mxu0 0
        %2578 = vmatpush2.bf16.msra.mxu0 0
        %2579 = vmatprep.subr.bf16.mxu0 0
        %2580 = vmatpush2.bf16.msra.mxu0 0
        %2581 = vmatprep.subr.bf16.mxu0 0
        %2582 = vmatpush2.bf16.msra.mxu0 0
        %2583 = vmatprep.subr.bf16.mxu0 0
        %2584 = vmatpush2.bf16.msra.mxu0 0
        %2585 = vmatprep.subr.bf16.mxu0 0
        %2586 = vmatpush2.bf16.msra.mxu0 0
        %2587 = vmatprep.subr.bf16.mxu0 0
        %2588 = vmatpush2.bf16.msra.mxu0 0
        %2589 = vmatprep.subr.bf16.mxu0 0
        %2590 = vmatpush2.bf16.msra.mxu0 0
        %2591 = vmatprep.subr.bf16.mxu0 0
        %2592 = vmatpush2.bf16.msra.mxu0 0
        %2593 = vmatprep.mubr.bf16.mxu0 0
        %2594 = vmatmul.mubr.bf16.gmra.mxu0 %v2238
        %v2595 = vpop.f32.mrf.mxu0
        %v2596 = vadd.f32 %v1888, %v2595
        %v2597 = vpop.f32.mrf.mxu0
        %v2598 = vadd.f32 %v1892, %v2597
        %v2599 = vpop.f32.mrf.mxu0
        %v2600 = vadd.f32 %v1888, %v2599
        %v2601 = vpop.f32.mrf.mxu0
        %v2602 = vadd.f32 %v1892, %v2601
        %2603 = vmatprep.mubr.bf16.mxu0 0
        %2604 = vmatmul.mubr.bf16.gmra.mxu0 %v2241
        %v2605 = vpop.f32.mrf.mxu0
        %v2606 = vadd.f32 %v1888, %v2605
        %v2607 = vpop.f32.mrf.mxu0
        %v2608 = vadd.f32 %v1892, %v2607
        %v2609 = vpop.f32.mrf.mxu0
        %v2610 = vadd.f32 %v1888, %v2609
        %v2611 = vpop.f32.mrf.mxu0
        %v2612 = vadd.f32 %v1892, %v2611
        %2613 = vdwg.mxu0
        %2614 = vmatprep.subr.bf16.mxu0 0
        %2615 = vmatpush1.bf16.msra.mxu0 0
        %2616 = vmatprep.subr.bf16.mxu0 0
        %2617 = vmatpush1.bf16.msra.mxu0 0
        %2618 = vmatprep.subr.bf16.mxu0 0
        %2619 = vmatpush1.bf16.msra.mxu0 0
        %2620 = vmatprep.subr.bf16.mxu0 0
        %2621 = vmatpush1.bf16.msra.mxu0 0
        %2622 = vmatprep.subr.bf16.mxu0 %v2172
        %2623 = vmatpush1.bf16.msra.mxu0 %v2171
        %2624 = vmatprep.subr.bf16.mxu0 %v2156
        %2625 = vmatpush1.bf16.msra.mxu0 %v2155
        %2626 = vmatprep.subr.bf16.mxu0 %v2140
        %2627 = vmatpush1.bf16.msra.mxu0 %v2139
        %2628 = vmatprep.subr.bf16.mxu0 %v2124
        %2629 = vmatpush1.bf16.msra.mxu0 %v2123
        %2630 = vmatprep.subr.bf16.mxu0 0
        %2631 = vmatpush2.bf16.msra.mxu0 0
        %2632 = vmatprep.subr.bf16.mxu0 0
        %2633 = vmatpush2.bf16.msra.mxu0 0
        %2634 = vmatprep.subr.bf16.mxu0 0
        %2635 = vmatpush2.bf16.msra.mxu0 0
        %2636 = vmatprep.subr.bf16.mxu0 0
        %2637 = vmatpush2.bf16.msra.mxu0 0
        %2638 = vmatprep.subr.bf16.mxu0 0
        %2639 = vmatpush2.bf16.msra.mxu0 0
        %2640 = vmatprep.subr.bf16.mxu0 0
        %2641 = vmatpush2.bf16.msra.mxu0 0
        %2642 = vmatprep.subr.bf16.mxu0 0
        %2643 = vmatpush2.bf16.msra.mxu0 0
        %2644 = vmatprep.subr.bf16.mxu0 0
        %2645 = vmatpush2.bf16.msra.mxu0 0
        %2646 = vmatprep.mubr.bf16.mxu0 0
        %2647 = vmatmul.mubr.bf16.gmra.mxu0 %v2238
        %v2648 = vpop.f32.mrf.mxu0
        %v2649 = vadd.f32 %v1896, %v2648
        %v2650 = vpop.f32.mrf.mxu0
        %v2651 = vadd.f32 %v1900, %v2650
        %v2652 = vpop.f32.mrf.mxu0
        %v2653 = vadd.f32 %v1896, %v2652
        %v2654 = vpop.f32.mrf.mxu0
        %v2655 = vadd.f32 %v1900, %v2654
        %2656 = vmatprep.mubr.bf16.mxu0 0
        %2657 = vmatmul.mubr.bf16.gmra.mxu0 %v2241
        %v2658 = vpop.f32.mrf.mxu0
        %v2659 = vadd.f32 %v1896, %v2658
        %v2660 = vpop.f32.mrf.mxu0
        %v2661 = vadd.f32 %v1900, %v2660
        %v2662 = vpop.f32.mrf.mxu0
        %v2663 = vadd.f32 %v1896, %v2662
        %v2664 = vpop.f32.mrf.mxu0
        %v2665 = vadd.f32 %v1900, %v2664
        %2666 = vdwg.mxu0
        %v2667 = vmax.f32 %v2278, 0.0
        %v2668 = vmax.f32 %v2280, 0.0
        %v2669 = vmax.f32 %v2331, 0.0
        %v2670 = vmax.f32 %v2333, 0.0
        %v2671 = vmax.f32 %v2384, 0.0
        %v2672 = vmax.f32 %v2386, 0.0
        %v2673 = vmax.f32 %v2437, 0.0
        %v2674 = vmax.f32 %v2439, 0.0
        %v2675 = vmax.f32 %v2490, 0.0
        %v2676 = vmax.f32 %v2492, 0.0
        %v2677 = vmax.f32 %v2543, 0.0
        %v2678 = vmax.f32 %v2545, 0.0
        %v2679 = vmax.f32 %v2596, 0.0
        %v2680 = vmax.f32 %v2598, 0.0
        %v2681 = vmax.f32 %v2649, 0.0
        %v2682 = vmax.f32 %v2651, 0.0
        %v2683 = vmax.f32 %v2282, 0.0
        %v2684 = vmax.f32 %v2284, 0.0
        %v2685 = vmax.f32 %v2335, 0.0
        %v2686 = vmax.f32 %v2337, 0.0
        %v2687 = vmax.f32 %v2388, 0.0
        %v2688 = vmax.f32 %v2390, 0.0
        %v2689 = vmax.f32 %v2441, 0.0
        %v2690 = vmax.f32 %v2443, 0.0
        %v2691 = vmax.f32 %v2494, 0.0
        %v2692 = vmax.f32 %v2496, 0.0
        %v2693 = vmax.f32 %v2547, 0.0
        %v2694 = vmax.f32 %v2549, 0.0
        %v2695 = vmax.f32 %v2600, 0.0
        %v2696 = vmax.f32 %v2602, 0.0
        %v2697 = vmax.f32 %v2653, 0.0
        %v2698 = vmax.f32 %v2655, 0.0
        %v2699 = vmax.f32 %v2288, 0.0
        %v2700 = vmax.f32 %v2290, 0.0
        %v2701 = vmax.f32 %v2341, 0.0
        %v2702 = vmax.f32 %v2343, 0.0
        %v2703 = vmax.f32 %v2394, 0.0
        %v2704 = vmax.f32 %v2396, 0.0
        %v2705 = vmax.f32 %v2447, 0.0
        %v2706 = vmax.f32 %v2449, 0.0
        %v2707 = vmax.f32 %v2500, 0.0
        %v2708 = vmax.f32 %v2502, 0.0
        %v2709 = vmax.f32 %v2553, 0.0
        %v2710 = vmax.f32 %v2555, 0.0
        %v2711 = vmax.f32 %v2606, 0.0
        %v2712 = vmax.f32 %v2608, 0.0
        %v2713 = vmax.f32 %v2659, 0.0
        %v2714 = vmax.f32 %v2661, 0.0
        %v2715 = vmax.f32 %v2292, 0.0
        %v2716 = vmax.f32 %v2294, 0.0
        %v2717 = vmax.f32 %v2345, 0.0
        %v2718 = vmax.f32 %v2347, 0.0
        %v2719 = vmax.f32 %v2398, 0.0
        %v2720 = vmax.f32 %v2400, 0.0
        %v2721 = vmax.f32 %v2451, 0.0
        %v2722 = vmax.f32 %v2453, 0.0
        %v2723 = vmax.f32 %v2504, 0.0
        %v2724 = vmax.f32 %v2506, 0.0
        %v2725 = vmax.f32 %v2557, 0.0
        %v2726 = vmax.f32 %v2559, 0.0
        %v2727 = vmax.f32 %v2610, 0.0
        %v2728 = vmax.f32 %v2612, 0.0
        %v2729 = vmax.f32 %v2663, 0.0
        %v2730 = vmax.f32 %v2665, 0.0
        %v2731 = vpack.c.bf16 %v2683, %v2667
        %v2732 = vpack.c.bf16 %v2684, %v2668
        %v2733 = vpack.c.bf16 %v2685, %v2669
        %v2734 = vpack.c.bf16 %v2686, %v2670
        %v2735 = vpack.c.bf16 %v2687, %v2671
        %v2736 = vpack.c.bf16 %v2688, %v2672
        %v2737 = vpack.c.bf16 %v2689, %v2673
        %v2738 = vpack.c.bf16 %v2690, %v2674
        %v2739 = vpack.c.bf16 %v2691, %v2675
        %v2740 = vpack.c.bf16 %v2692, %v2676
        %v2741 = vpack.c.bf16 %v2693, %v2677
        %v2742 = vpack.c.bf16 %v2694, %v2678
        %v2743 = vpack.c.bf16 %v2695, %v2679
        %v2744 = vpack.c.bf16 %v2696, %v2680
        %v2745 = vpack.c.bf16 %v2697, %v2681
        %v2746 = vpack.c.bf16 %v2698, %v2682
        %v2747 = vpack.c.bf16 %v2715, %v2699
        %v2748 = vpack.c.bf16 %v2716, %v2700
        %v2749 = vpack.c.bf16 %v2717, %v2701
        %v2750 = vpack.c.bf16 %v2718, %v2702
        %v2751 = vpack.c.bf16 %v2719, %v2703
        %v2752 = vpack.c.bf16 %v2720, %v2704
        %v2753 = vpack.c.bf16 %v2721, %v2705
        %v2754 = vpack.c.bf16 %v2722, %v2706
        %v2755 = vpack.c.bf16 %v2723, %v2707
        %v2756 = vpack.c.bf16 %v2724, %v2708
        %v2757 = vpack.c.bf16 %v2725, %v2709
        %v2758 = vpack.c.bf16 %v2726, %v2710
        %v2759 = vpack.c.bf16 %v2727, %v2711
        %v2760 = vpack.c.bf16 %v2728, %v2712
        %v2761 = vpack.c.bf16 %v2729, %v2713
        %v2762 = vpack.c.bf16 %v2730, %v2714
        %v2763 = vld [vmem:[%s811] sm:$0xf]
        %v2764 = vld [vmem:[%s811 + $0x4] sm:$0xf]
        %v2765 = vld [vmem:[%s811 + $0x8] sm:$0xf]
        %v2766 = vld [vmem:[%s811 + $0xc] sm:$0xf]
        %v2767 = vld [vmem:[%s811 + $0x10] sm:$0xf]
        %v2768 = vld [vmem:[%s811 + $0x14] sm:$0xf]
        %v2769 = vld [vmem:[%s811 + $0x18] sm:$0xf]
        %v2770 = vld [vmem:[%s811 + $0x1c] sm:$0xf]
        %v2771 = vld [vmem:[%s811 + $0x20] sm:$0xf]
        %v2772 = vld [vmem:[%s811 + $0x24] sm:$0xf]
        %v2773 = vld [vmem:[%s811 + $0x28] sm:$0xf]
        %v2774 = vld [vmem:[%s811 + $0x2c] sm:$0xf]
        %v2775 = vld [vmem:[%s811 + $0x30] sm:$0xf]
        %v2776 = vld [vmem:[%s811 + $0x34] sm:$0xf]
        %v2777 = vld [vmem:[%s811 + $0x38] sm:$0xf]
        %v2778 = vld [vmem:[%s811 + $0x3c] sm:$0xf]
        %v2779 = vld [vmem:[%s811 + $0x40] sm:$0xf]
        %v2780 = vld [vmem:[%s811 + $0x44] sm:$0xf]
        %v2781 = vld [vmem:[%s811 + $0x48] sm:$0xf]
        %v2782 = vld [vmem:[%s811 + $0x4c] sm:$0xf]
        %v2783 = vld [vmem:[%s811 + $0x50] sm:$0xf]
        %v2784 = vld [vmem:[%s811 + $0x54] sm:$0xf]
        %v2785 = vld [vmem:[%s811 + $0x58] sm:$0xf]
        %v2786 = vld [vmem:[%s811 + $0x5c] sm:$0xf]
        %v2787 = vld [vmem:[%s811 + $0x60] sm:$0xf]
        %v2788 = vld [vmem:[%s811 + $0x64] sm:$0xf]
        %v2789 = vld [vmem:[%s811 + $0x68] sm:$0xf]
        %v2790 = vld [vmem:[%s811 + $0x6c] sm:$0xf]
        %v2791 = vld [vmem:[%s811 + $0x70] sm:$0xf]
        %v2792 = vld [vmem:[%s811 + $0x74] sm:$0xf]
        %v2793 = vld [vmem:[%s811 + $0x78] sm:$0xf]
        %v2794 = vld [vmem:[%s811 + $0x7c] sm:$0xf]
        %v2795 = vld [vmem:[%s811 + $0x80] sm:$0xf]
        %v2796 = vld [vmem:[%s811 + $0x84] sm:$0xf]
        %v2797 = vld [vmem:[%s811 + $0x88] sm:$0xf]
        %v2798 = vld [vmem:[%s811 + $0x8c] sm:$0xf]
        %v2799 = vld [vmem:[%s811 + $0x90] sm:$0xf]
        %v2800 = vld [vmem:[%s811 + $0x94] sm:$0xf]
        %v2801 = vld [vmem:[%s811 + $0x98] sm:$0xf]
        %v2802 = vld [vmem:[%s811 + $0x9c] sm:$0xf]
        %v2803 = vld [vmem:[%s811 + $0xa0] sm:$0xf]
        %v2804 = vld [vmem:[%s811 + $0xa4] sm:$0xf]
        %v2805 = vld [vmem:[%s811 + $0xa8] sm:$0xf]
        %v2806 = vld [vmem:[%s811 + $0xac] sm:$0xf]
        %v2807 = vld [vmem:[%s811 + $0xb0] sm:$0xf]
        %v2808 = vld [vmem:[%s811 + $0xb4] sm:$0xf]
        %v2809 = vld [vmem:[%s811 + $0xb8] sm:$0xf]
        %v2810 = vld [vmem:[%s811 + $0xbc] sm:$0xf]
        %v2811 = vld [vmem:[%s811 + $0xc0] sm:$0xf]
        %v2812 = vld [vmem:[%s811 + $0xc4] sm:$0xf]
        %v2813 = vld [vmem:[%s811 + $0xc8] sm:$0xf]
        %v2814 = vld [vmem:[%s811 + $0xcc] sm:$0xf]
        %v2815 = vld [vmem:[%s811 + $0xd0] sm:$0xf]
        %v2816 = vld [vmem:[%s811 + $0xd4] sm:$0xf]
        %v2817 = vld [vmem:[%s811 + $0xd8] sm:$0xf]
        %v2818 = vld [vmem:[%s811 + $0xdc] sm:$0xf]
        %v2819 = vld [vmem:[%s811 + $0xe0] sm:$0xf]
        %v2820 = vld [vmem:[%s811 + $0xe4] sm:$0xf]
        %v2821 = vld [vmem:[%s811 + $0xe8] sm:$0xf]
        %v2822 = vld [vmem:[%s811 + $0xec] sm:$0xf]
        %v2823 = vld [vmem:[%s811 + $0xf0] sm:$0xf]
        %v2824 = vld [vmem:[%s811 + $0xf4] sm:$0xf]
        %v2825 = vld [vmem:[%s811 + $0xf8] sm:$0xf]
        %v2826 = vld [vmem:[%s811 + $0xfc] sm:$0xf]
        %v2827 = vld [vmem:[%s811 + $0x100] sm:$0xf]
        %v2828 = vld [vmem:[%s811 + $0x104] sm:$0xf]
        %v2829 = vld [vmem:[%s811 + $0x108] sm:$0xf]
        %v2830 = vld [vmem:[%s811 + $0x10c] sm:$0xf]
        %v2831 = vld [vmem:[%s811 + $0x110] sm:$0xf]
        %v2832 = vld [vmem:[%s811 + $0x114] sm:$0xf]
        %v2833 = vld [vmem:[%s811 + $0x118] sm:$0xf]
        %v2834 = vld [vmem:[%s811 + $0x11c] sm:$0xf]
        %v2835 = vld [vmem:[%s811 + $0x120] sm:$0xf]
        %v2836 = vld [vmem:[%s811 + $0x124] sm:$0xf]
        %v2837 = vld [vmem:[%s811 + $0x128] sm:$0xf]
        %v2838 = vld [vmem:[%s811 + $0x12c] sm:$0xf]
        %v2839 = vld [vmem:[%s811 + $0x130] sm:$0xf]
        %v2840 = vld [vmem:[%s811 + $0x134] sm:$0xf]
        %v2841 = vld [vmem:[%s811 + $0x138] sm:$0xf]
        %v2842 = vld [vmem:[%s811 + $0x13c] sm:$0xf]
        %v2843 = vld [vmem:[%s811 + $0x140] sm:$0xf]
        %v2844 = vld [vmem:[%s811 + $0x144] sm:$0xf]
        %v2845 = vld [vmem:[%s811 + $0x148] sm:$0xf]
        %v2846 = vld [vmem:[%s811 + $0x14c] sm:$0xf]
        %v2847 = vld [vmem:[%s811 + $0x150] sm:$0xf]
        %v2848 = vld [vmem:[%s811 + $0x154] sm:$0xf]
        %v2849 = vld [vmem:[%s811 + $0x158] sm:$0xf]
        %v2850 = vld [vmem:[%s811 + $0x15c] sm:$0xf]
        %v2851 = vld [vmem:[%s811 + $0x160] sm:$0xf]
        %v2852 = vld [vmem:[%s811 + $0x164] sm:$0xf]
        %v2853 = vld [vmem:[%s811 + $0x168] sm:$0xf]
        %v2854 = vld [vmem:[%s811 + $0x16c] sm:$0xf]
        %v2855 = vld [vmem:[%s811 + $0x170] sm:$0xf]
        %v2856 = vld [vmem:[%s811 + $0x174] sm:$0xf]
        %v2857 = vld [vmem:[%s811 + $0x178] sm:$0xf]
        %v2858 = vld [vmem:[%s811 + $0x17c] sm:$0xf]
        %v2859 = vld [vmem:[%s811 + $0x180] sm:$0xf]
        %v2860 = vld [vmem:[%s811 + $0x184] sm:$0xf]
        %v2861 = vld [vmem:[%s811 + $0x188] sm:$0xf]
        %v2862 = vld [vmem:[%s811 + $0x18c] sm:$0xf]
        %v2863 = vld [vmem:[%s811 + $0x190] sm:$0xf]
        %v2864 = vld [vmem:[%s811 + $0x194] sm:$0xf]
        %v2865 = vld [vmem:[%s811 + $0x198] sm:$0xf]
        %v2866 = vld [vmem:[%s811 + $0x19c] sm:$0xf]
        %v2867 = vld [vmem:[%s811 + $0x1a0] sm:$0xf]
        %v2868 = vld [vmem:[%s811 + $0x1a4] sm:$0xf]
        %v2869 = vld [vmem:[%s811 + $0x1a8] sm:$0xf]
        %v2870 = vld [vmem:[%s811 + $0x1ac] sm:$0xf]
        %v2871 = vld [vmem:[%s811 + $0x1b0] sm:$0xf]
        %v2872 = vld [vmem:[%s811 + $0x1b4] sm:$0xf]
        %v2873 = vld [vmem:[%s811 + $0x1b8] sm:$0xf]
        %v2874 = vld [vmem:[%s811 + $0x1bc] sm:$0xf]
        %v2875 = vld [vmem:[%s811 + $0x1c0] sm:$0xf]
        %v2876 = vld [vmem:[%s811 + $0x1c4] sm:$0xf]
        %v2877 = vld [vmem:[%s811 + $0x1c8] sm:$0xf]
        %v2878 = vld [vmem:[%s811 + $0x1cc] sm:$0xf]
        %v2879 = vld [vmem:[%s811 + $0x1d0] sm:$0xf]
        %v2880 = vld [vmem:[%s811 + $0x1d4] sm:$0xf]
        %v2881 = vld [vmem:[%s811 + $0x1d8] sm:$0xf]
        %v2882 = vld [vmem:[%s811 + $0x1dc] sm:$0xf]
        %v2883 = vld [vmem:[%s811 + $0x1e0] sm:$0xf]
        %v2884 = vld [vmem:[%s811 + $0x1e4] sm:$0xf]
        %v2885 = vld [vmem:[%s811 + $0x1e8] sm:$0xf]
        %v2886 = vld [vmem:[%s811 + $0x1ec] sm:$0xf]
        %v2887 = vld [vmem:[%s811 + $0x1f0] sm:$0xf]
        %v2888 = vld [vmem:[%s811 + $0x1f4] sm:$0xf]
        %v2889 = vld [vmem:[%s811 + $0x1f8] sm:$0xf]
        %v2890 = vld [vmem:[%s811 + $0x1fc] sm:$0xf]
        %v2891 = vld [vmem:[%s811 + $0x200] sm:$0xf]
        %v2892 = vld [vmem:[%s811 + $0x204] sm:$0xf]
        %v2893 = vld [vmem:[%s811 + $0x208] sm:$0xf]
        %v2894 = vld [vmem:[%s811 + $0x20c] sm:$0xf]
        %v2895 = vld [vmem:[%s811 + $0x210] sm:$0xf]
        %v2896 = vld [vmem:[%s811 + $0x214] sm:$0xf]
        %v2897 = vld [vmem:[%s811 + $0x218] sm:$0xf]
        %v2898 = vld [vmem:[%s811 + $0x21c] sm:$0xf]
        %v2899 = vld [vmem:[%s811 + $0x220] sm:$0xf]
        %v2900 = vld [vmem:[%s811 + $0x224] sm:$0xf]
        %v2901 = vld [vmem:[%s811 + $0x228] sm:$0xf]
        %v2902 = vld [vmem:[%s811 + $0x22c] sm:$0xf]
        %v2903 = vld [vmem:[%s811 + $0x230] sm:$0xf]
        %v2904 = vld [vmem:[%s811 + $0x234] sm:$0xf]
        %v2905 = vld [vmem:[%s811 + $0x238] sm:$0xf]
        %v2906 = vld [vmem:[%s811 + $0x23c] sm:$0xf]
        %v2907 = vld [vmem:[%s811 + $0x240] sm:$0xf]
        %v2908 = vld [vmem:[%s811 + $0x244] sm:$0xf]
        %v2909 = vld [vmem:[%s811 + $0x248] sm:$0xf]
        %v2910 = vld [vmem:[%s811 + $0x24c] sm:$0xf]
        %v2911 = vld [vmem:[%s811 + $0x250] sm:$0xf]
        %v2912 = vld [vmem:[%s811 + $0x254] sm:$0xf]
        %v2913 = vld [vmem:[%s811 + $0x258] sm:$0xf]
        %v2914 = vld [vmem:[%s811 + $0x25c] sm:$0xf]
        %v2915 = vld [vmem:[%s811 + $0x260] sm:$0xf]
        %v2916 = vld [vmem:[%s811 + $0x264] sm:$0xf]
        %v2917 = vld [vmem:[%s811 + $0x268] sm:$0xf]
        %v2918 = vld [vmem:[%s811 + $0x26c] sm:$0xf]
        %v2919 = vld [vmem:[%s811 + $0x270] sm:$0xf]
        %v2920 = vld [vmem:[%s811 + $0x274] sm:$0xf]
        %v2921 = vld [vmem:[%s811 + $0x278] sm:$0xf]
        %v2922 = vld [vmem:[%s811 + $0x27c] sm:$0xf]
        %v2923 = vld [vmem:[%s811 + $0x280] sm:$0xf]
        %v2924 = vld [vmem:[%s811 + $0x284] sm:$0xf]
        %v2925 = vld [vmem:[%s811 + $0x288] sm:$0xf]
        %v2926 = vld [vmem:[%s811 + $0x28c] sm:$0xf]
        %v2927 = vld [vmem:[%s811 + $0x290] sm:$0xf]
        %v2928 = vld [vmem:[%s811 + $0x294] sm:$0xf]
        %v2929 = vld [vmem:[%s811 + $0x298] sm:$0xf]
        %v2930 = vld [vmem:[%s811 + $0x29c] sm:$0xf]
        %v2931 = vld [vmem:[%s811 + $0x2a0] sm:$0xf]
        %v2932 = vld [vmem:[%s811 + $0x2a4] sm:$0xf]
        %v2933 = vld [vmem:[%s811 + $0x2a8] sm:$0xf]
        %v2934 = vld [vmem:[%s811 + $0x2ac] sm:$0xf]
        %v2935 = vld [vmem:[%s811 + $0x2b0] sm:$0xf]
        %v2936 = vld [vmem:[%s811 + $0x2b4] sm:$0xf]
        %v2937 = vld [vmem:[%s811 + $0x2b8] sm:$0xf]
        %v2938 = vld [vmem:[%s811 + $0x2bc] sm:$0xf]
        %v2939 = vld [vmem:[%s811 + $0x2c0] sm:$0xf]
        %v2940 = vld [vmem:[%s811 + $0x2c4] sm:$0xf]
        %v2941 = vld [vmem:[%s811 + $0x2c8] sm:$0xf]
        %v2942 = vld [vmem:[%s811 + $0x2cc] sm:$0xf]
        %v2943 = vld [vmem:[%s811 + $0x2d0] sm:$0xf]
        %v2944 = vld [vmem:[%s811 + $0x2d4] sm:$0xf]
        %v2945 = vld [vmem:[%s811 + $0x2d8] sm:$0xf]
        %v2946 = vld [vmem:[%s811 + $0x2dc] sm:$0xf]
        %v2947 = vld [vmem:[%s811 + $0x2e0] sm:$0xf]
        %v2948 = vld [vmem:[%s811 + $0x2e4] sm:$0xf]
        %v2949 = vld [vmem:[%s811 + $0x2e8] sm:$0xf]
        %v2950 = vld [vmem:[%s811 + $0x2ec] sm:$0xf]
        %v2951 = vld [vmem:[%s811 + $0x2f0] sm:$0xf]
        %v2952 = vld [vmem:[%s811 + $0x2f4] sm:$0xf]
        %v2953 = vld [vmem:[%s811 + $0x2f8] sm:$0xf]
        %v2954 = vld [vmem:[%s811 + $0x2fc] sm:$0xf]
        %v2955 = vld [vmem:[%s811 + $0x300] sm:$0xf]
        %v2956 = vld [vmem:[%s811 + $0x304] sm:$0xf]
        %v2957 = vld [vmem:[%s811 + $0x308] sm:$0xf]
        %v2958 = vld [vmem:[%s811 + $0x30c] sm:$0xf]
        %v2959 = vld [vmem:[%s811 + $0x310] sm:$0xf]
        %v2960 = vld [vmem:[%s811 + $0x314] sm:$0xf]
        %v2961 = vld [vmem:[%s811 + $0x318] sm:$0xf]
        %v2962 = vld [vmem:[%s811 + $0x31c] sm:$0xf]
        %v2963 = vld [vmem:[%s811 + $0x320] sm:$0xf]
        %v2964 = vld [vmem:[%s811 + $0x324] sm:$0xf]
        %v2965 = vld [vmem:[%s811 + $0x328] sm:$0xf]
        %v2966 = vld [vmem:[%s811 + $0x32c] sm:$0xf]
        %v2967 = vld [vmem:[%s811 + $0x330] sm:$0xf]
        %v2968 = vld [vmem:[%s811 + $0x334] sm:$0xf]
        %v2969 = vld [vmem:[%s811 + $0x338] sm:$0xf]
        %v2970 = vld [vmem:[%s811 + $0x33c] sm:$0xf]
        %v2971 = vld [vmem:[%s811 + $0x340] sm:$0xf]
        %v2972 = vld [vmem:[%s811 + $0x344] sm:$0xf]
        %v2973 = vld [vmem:[%s811 + $0x348] sm:$0xf]
        %v2974 = vld [vmem:[%s811 + $0x34c] sm:$0xf]
        %v2975 = vld [vmem:[%s811 + $0x350] sm:$0xf]
        %v2976 = vld [vmem:[%s811 + $0x354] sm:$0xf]
        %v2977 = vld [vmem:[%s811 + $0x358] sm:$0xf]
        %v2978 = vld [vmem:[%s811 + $0x35c] sm:$0xf]
        %v2979 = vld [vmem:[%s811 + $0x360] sm:$0xf]
        %v2980 = vld [vmem:[%s811 + $0x364] sm:$0xf]
        %v2981 = vld [vmem:[%s811 + $0x368] sm:$0xf]
        %v2982 = vld [vmem:[%s811 + $0x36c] sm:$0xf]
        %v2983 = vld [vmem:[%s811 + $0x370] sm:$0xf]
        %v2984 = vld [vmem:[%s811 + $0x374] sm:$0xf]
        %v2985 = vld [vmem:[%s811 + $0x378] sm:$0xf]
        %v2986 = vld [vmem:[%s811 + $0x37c] sm:$0xf]
        %v2987 = vld [vmem:[%s811 + $0x380] sm:$0xf]
        %v2988 = vld [vmem:[%s811 + $0x384] sm:$0xf]
        %v2989 = vld [vmem:[%s811 + $0x388] sm:$0xf]
        %v2990 = vld [vmem:[%s811 + $0x38c] sm:$0xf]
        %v2991 = vld [vmem:[%s811 + $0x390] sm:$0xf]
        %v2992 = vld [vmem:[%s811 + $0x394] sm:$0xf]
        %v2993 = vld [vmem:[%s811 + $0x398] sm:$0xf]
        %v2994 = vld [vmem:[%s811 + $0x39c] sm:$0xf]
        %v2995 = vld [vmem:[%s811 + $0x3a0] sm:$0xf]
        %v2996 = vld [vmem:[%s811 + $0x3a4] sm:$0xf]
        %v2997 = vld [vmem:[%s811 + $0x3a8] sm:$0xf]
        %v2998 = vld [vmem:[%s811 + $0x3ac] sm:$0xf]
        %v2999 = vld [vmem:[%s811 + $0x3b0] sm:$0xf]
        %v3000 = vld [vmem:[%s811 + $0x3b4] sm:$0xf]
        %v3001 = vld [vmem:[%s811 + $0x3b8] sm:$0xf]
        %v3002 = vld [vmem:[%s811 + $0x3bc] sm:$0xf]
        %v3003 = vld [vmem:[%s811 + $0x3c0] sm:$0xf]
        %v3004 = vld [vmem:[%s811 + $0x3c4] sm:$0xf]
        %v3005 = vld [vmem:[%s811 + $0x3c8] sm:$0xf]
        %v3006 = vld [vmem:[%s811 + $0x3cc] sm:$0xf]
        %v3007 = vld [vmem:[%s811 + $0x3d0] sm:$0xf]
        %v3008 = vld [vmem:[%s811 + $0x3d4] sm:$0xf]
        %v3009 = vld [vmem:[%s811 + $0x3d8] sm:$0xf]
        %v3010 = vld [vmem:[%s811 + $0x3dc] sm:$0xf]
        %v3011 = vld [vmem:[%s811 + $0x3e0] sm:$0xf]
        %v3012 = vld [vmem:[%s811 + $0x3e4] sm:$0xf]
        %v3013 = vld [vmem:[%s811 + $0x3e8] sm:$0xf]
        %v3014 = vld [vmem:[%s811 + $0x3ec] sm:$0xf]
        %v3015 = vld [vmem:[%s811 + $0x3f0] sm:$0xf]
        %v3016 = vld [vmem:[%s811 + $0x3f4] sm:$0xf]
        %v3017 = vld [vmem:[%s811 + $0x3f8] sm:$0xf]
        %v3018 = vld [vmem:[%s811 + $0x3fc] sm:$0xf]
        %v3019 = vld [vmem:[%s814] sm:$0x1]
        %v3021 = vlaneseq
        %v3022 = vshrl.u32 %v3021, 7
        %v3023 = vsub.s32 0, %v3022
        %v3024 = vrot.slane %v3019, %v3023
        %v3282 = vunpack.c.l.b16 %v2763
        %v3283 = vunpack.c.l.b16 %v2764
        %v3284 = vunpack.c.l.b16 %v2765
        %v3285 = vunpack.c.l.b16 %v2766
        %v3286 = vunpack.c.l.b16 %v2767
        %v3287 = vunpack.c.l.b16 %v2768
        %v3288 = vunpack.c.l.b16 %v2769
        %v3289 = vunpack.c.l.b16 %v2770
        %v3290 = vunpack.c.l.b16 %v2771
        %v3291 = vunpack.c.l.b16 %v2772
        %v3292 = vunpack.c.l.b16 %v2773
        %v3293 = vunpack.c.l.b16 %v2774
        %v3294 = vunpack.c.l.b16 %v2775
        %v3295 = vunpack.c.l.b16 %v2776
        %v3296 = vunpack.c.l.b16 %v2777
        %v3297 = vunpack.c.l.b16 %v2778
        %v3298 = vunpack.c.l.b16 %v2779
        %v3299 = vunpack.c.l.b16 %v2780
        %v3300 = vunpack.c.l.b16 %v2781
        %v3301 = vunpack.c.l.b16 %v2782
        %v3302 = vunpack.c.l.b16 %v2783
        %v3303 = vunpack.c.l.b16 %v2784
        %v3304 = vunpack.c.l.b16 %v2785
        %v3305 = vunpack.c.l.b16 %v2786
        %v3306 = vunpack.c.l.b16 %v2787
        %v3307 = vunpack.c.l.b16 %v2788
        %v3308 = vunpack.c.l.b16 %v2789
        %v3309 = vunpack.c.l.b16 %v2790
        %v3310 = vunpack.c.l.b16 %v2791
        %v3311 = vunpack.c.l.b16 %v2792
        %v3312 = vunpack.c.l.b16 %v2793
        %v3313 = vunpack.c.l.b16 %v2794
        %v3314 = vunpack.c.l.b16 %v2795
        %v3315 = vunpack.c.l.b16 %v2796
        %v3316 = vunpack.c.l.b16 %v2797
        %v3317 = vunpack.c.l.b16 %v2798
        %v3318 = vunpack.c.l.b16 %v2799
        %v3319 = vunpack.c.l.b16 %v2800
        %v3320 = vunpack.c.l.b16 %v2801
        %v3321 = vunpack.c.l.b16 %v2802
        %v3322 = vunpack.c.l.b16 %v2803
        %v3323 = vunpack.c.l.b16 %v2804
        %v3324 = vunpack.c.l.b16 %v2805
        %v3325 = vunpack.c.l.b16 %v2806
        %v3326 = vunpack.c.l.b16 %v2807
        %v3327 = vunpack.c.l.b16 %v2808
        %v3328 = vunpack.c.l.b16 %v2809
        %v3329 = vunpack.c.l.b16 %v2810
        %v3330 = vunpack.c.l.b16 %v2811
        %v3331 = vunpack.c.l.b16 %v2812
        %v3332 = vunpack.c.l.b16 %v2813
        %v3333 = vunpack.c.l.b16 %v2814
        %v3334 = vunpack.c.l.b16 %v2815
        %v3335 = vunpack.c.l.b16 %v2816
        %v3336 = vunpack.c.l.b16 %v2817
        %v3337 = vunpack.c.l.b16 %v2818
        %v3338 = vunpack.c.l.b16 %v2819
        %v3339 = vunpack.c.l.b16 %v2820
        %v3340 = vunpack.c.l.b16 %v2821
        %v3341 = vunpack.c.l.b16 %v2822
        %v3342 = vunpack.c.l.b16 %v2823
        %v3343 = vunpack.c.l.b16 %v2824
        %v3344 = vunpack.c.l.b16 %v2825
        %v3345 = vunpack.c.l.b16 %v2826
        %v3346 = vunpack.c.l.b16 %v2827
        %v3347 = vunpack.c.l.b16 %v2828
        %v3348 = vunpack.c.l.b16 %v2829
        %v3349 = vunpack.c.l.b16 %v2830
        %v3350 = vunpack.c.l.b16 %v2831
        %v3351 = vunpack.c.l.b16 %v2832
        %v3352 = vunpack.c.l.b16 %v2833
        %v3353 = vunpack.c.l.b16 %v2834
        %v3354 = vunpack.c.l.b16 %v2835
        %v3355 = vunpack.c.l.b16 %v2836
        %v3356 = vunpack.c.l.b16 %v2837
        %v3357 = vunpack.c.l.b16 %v2838
        %v3358 = vunpack.c.l.b16 %v2839
        %v3359 = vunpack.c.l.b16 %v2840
        %v3360 = vunpack.c.l.b16 %v2841
        %v3361 = vunpack.c.l.b16 %v2842
        %v3362 = vunpack.c.l.b16 %v2843
        %v3363 = vunpack.c.l.b16 %v2844
        %v3364 = vunpack.c.l.b16 %v2845
        %v3365 = vunpack.c.l.b16 %v2846
        %v3366 = vunpack.c.l.b16 %v2847
        %v3367 = vunpack.c.l.b16 %v2848
        %v3368 = vunpack.c.l.b16 %v2849
        %v3369 = vunpack.c.l.b16 %v2850
        %v3370 = vunpack.c.l.b16 %v2851
        %v3371 = vunpack.c.l.b16 %v2852
        %v3372 = vunpack.c.l.b16 %v2853
        %v3373 = vunpack.c.l.b16 %v2854
        %v3374 = vunpack.c.l.b16 %v2855
        %v3375 = vunpack.c.l.b16 %v2856
        %v3376 = vunpack.c.l.b16 %v2857
        %v3377 = vunpack.c.l.b16 %v2858
        %v3378 = vunpack.c.l.b16 %v2859
        %v3379 = vunpack.c.l.b16 %v2860
        %v3380 = vunpack.c.l.b16 %v2861
        %v3381 = vunpack.c.l.b16 %v2862
        %v3382 = vunpack.c.l.b16 %v2863
        %v3383 = vunpack.c.l.b16 %v2864
        %v3384 = vunpack.c.l.b16 %v2865
        %v3385 = vunpack.c.l.b16 %v2866
        %v3386 = vunpack.c.l.b16 %v2867
        %v3387 = vunpack.c.l.b16 %v2868
        %v3388 = vunpack.c.l.b16 %v2869
        %v3389 = vunpack.c.l.b16 %v2870
        %v3390 = vunpack.c.l.b16 %v2871
        %v3391 = vunpack.c.l.b16 %v2872
        %v3392 = vunpack.c.l.b16 %v2873
        %v3393 = vunpack.c.l.b16 %v2874
        %v3394 = vunpack.c.l.b16 %v2875
        %v3395 = vunpack.c.l.b16 %v2876
        %v3396 = vunpack.c.l.b16 %v2877
        %v3397 = vunpack.c.l.b16 %v2878
        %v3398 = vunpack.c.l.b16 %v2879
        %v3399 = vunpack.c.l.b16 %v2880
        %v3400 = vunpack.c.l.b16 %v2881
        %v3401 = vunpack.c.l.b16 %v2882
        %v3402 = vunpack.c.l.b16 %v2883
        %v3403 = vunpack.c.l.b16 %v2884
        %v3404 = vunpack.c.l.b16 %v2885
        %v3405 = vunpack.c.l.b16 %v2886
        %v3406 = vunpack.c.l.b16 %v2887
        %v3407 = vunpack.c.l.b16 %v2888
        %v3408 = vunpack.c.l.b16 %v2889
        %v3409 = vunpack.c.l.b16 %v2890
        %v3410 = vunpack.c.l.b16 %v2891
        %v3411 = vunpack.c.l.b16 %v2892
        %v3412 = vunpack.c.l.b16 %v2893
        %v3413 = vunpack.c.l.b16 %v2894
        %v3414 = vunpack.c.l.b16 %v2895
        %v3415 = vunpack.c.l.b16 %v2896
        %v3416 = vunpack.c.l.b16 %v2897
        %v3417 = vunpack.c.l.b16 %v2898
        %v3418 = vunpack.c.l.b16 %v2899
        %v3419 = vunpack.c.l.b16 %v2900
        %v3420 = vunpack.c.l.b16 %v2901
        %v3421 = vunpack.c.l.b16 %v2902
        %v3422 = vunpack.c.l.b16 %v2903
        %v3423 = vunpack.c.l.b16 %v2904
        %v3424 = vunpack.c.l.b16 %v2905
        %v3425 = vunpack.c.l.b16 %v2906
        %v3426 = vunpack.c.l.b16 %v2907
        %v3427 = vunpack.c.l.b16 %v2908
        %v3428 = vunpack.c.l.b16 %v2909
        %v3429 = vunpack.c.l.b16 %v2910
        %v3430 = vunpack.c.l.b16 %v2911
        %v3431 = vunpack.c.l.b16 %v2912
        %v3432 = vunpack.c.l.b16 %v2913
        %v3433 = vunpack.c.l.b16 %v2914
        %v3434 = vunpack.c.l.b16 %v2915
        %v3435 = vunpack.c.l.b16 %v2916
        %v3436 = vunpack.c.l.b16 %v2917
        %v3437 = vunpack.c.l.b16 %v2918
        %v3438 = vunpack.c.l.b16 %v2919
        %v3439 = vunpack.c.l.b16 %v2920
        %v3440 = vunpack.c.l.b16 %v2921
        %v3441 = vunpack.c.l.b16 %v2922
        %v3442 = vunpack.c.l.b16 %v2923
        %v3443 = vunpack.c.l.b16 %v2924
        %v3444 = vunpack.c.l.b16 %v2925
        %v3445 = vunpack.c.l.b16 %v2926
        %v3446 = vunpack.c.l.b16 %v2927
        %v3447 = vunpack.c.l.b16 %v2928
        %v3448 = vunpack.c.l.b16 %v2929
        %v3449 = vunpack.c.l.b16 %v2930
        %v3450 = vunpack.c.l.b16 %v2931
        %v3451 = vunpack.c.l.b16 %v2932
        %v3452 = vunpack.c.l.b16 %v2933
        %v3453 = vunpack.c.l.b16 %v2934
        %v3454 = vunpack.c.l.b16 %v2935
        %v3455 = vunpack.c.l.b16 %v2936
        %v3456 = vunpack.c.l.b16 %v2937
        %v3457 = vunpack.c.l.b16 %v2938
        %v3458 = vunpack.c.l.b16 %v2939
        %v3459 = vunpack.c.l.b16 %v2940
        %v3460 = vunpack.c.l.b16 %v2941
        %v3461 = vunpack.c.l.b16 %v2942
        %v3462 = vunpack.c.l.b16 %v2943
        %v3463 = vunpack.c.l.b16 %v2944
        %v3464 = vunpack.c.l.b16 %v2945
        %v3465 = vunpack.c.l.b16 %v2946
        %v3466 = vunpack.c.l.b16 %v2947
        %v3467 = vunpack.c.l.b16 %v2948
        %v3468 = vunpack.c.l.b16 %v2949
        %v3469 = vunpack.c.l.b16 %v2950
        %v3470 = vunpack.c.l.b16 %v2951
        %v3471 = vunpack.c.l.b16 %v2952
        %v3472 = vunpack.c.l.b16 %v2953
        %v3473 = vunpack.c.l.b16 %v2954
        %v3474 = vunpack.c.l.b16 %v2955
        %v3475 = vunpack.c.l.b16 %v2956
        %v3476 = vunpack.c.l.b16 %v2957
        %v3477 = vunpack.c.l.b16 %v2958
        %v3478 = vunpack.c.l.b16 %v2959
        %v3479 = vunpack.c.l.b16 %v2960
        %v3480 = vunpack.c.l.b16 %v2961
        %v3481 = vunpack.c.l.b16 %v2962
        %v3482 = vunpack.c.l.b16 %v2963
        %v3483 = vunpack.c.l.b16 %v2964
        %v3484 = vunpack.c.l.b16 %v2965
        %v3485 = vunpack.c.l.b16 %v2966
        %v3486 = vunpack.c.l.b16 %v2967
        %v3487 = vunpack.c.l.b16 %v2968
        %v3488 = vunpack.c.l.b16 %v2969
        %v3489 = vunpack.c.l.b16 %v2970
        %v3490 = vunpack.c.l.b16 %v2971
        %v3491 = vunpack.c.l.b16 %v2972
        %v3492 = vunpack.c.l.b16 %v2973
        %v3493 = vunpack.c.l.b16 %v2974
        %v3494 = vunpack.c.l.b16 %v2975
        %v3495 = vunpack.c.l.b16 %v2976
        %v3496 = vunpack.c.l.b16 %v2977
        %v3497 = vunpack.c.l.b16 %v2978
        %v3498 = vunpack.c.l.b16 %v2979
        %v3499 = vunpack.c.l.b16 %v2980
        %v3500 = vunpack.c.l.b16 %v2981
        %v3501 = vunpack.c.l.b16 %v2982
        %v3502 = vunpack.c.l.b16 %v2983
        %v3503 = vunpack.c.l.b16 %v2984
        %v3504 = vunpack.c.l.b16 %v2985
        %v3505 = vunpack.c.l.b16 %v2986
        %v3506 = vunpack.c.l.b16 %v2987
        %v3507 = vunpack.c.l.b16 %v2988
        %v3508 = vunpack.c.l.b16 %v2989
        %v3509 = vunpack.c.l.b16 %v2990
        %v3510 = vunpack.c.l.b16 %v2991
        %v3511 = vunpack.c.l.b16 %v2992
        %v3512 = vunpack.c.l.b16 %v2993
        %v3513 = vunpack.c.l.b16 %v2994
        %v3514 = vunpack.c.l.b16 %v2995
        %v3515 = vunpack.c.l.b16 %v2996
        %v3516 = vunpack.c.l.b16 %v2997
        %v3517 = vunpack.c.l.b16 %v2998
        %v3518 = vunpack.c.l.b16 %v2999
        %v3519 = vunpack.c.l.b16 %v3000
        %v3520 = vunpack.c.l.b16 %v3001
        %v3521 = vunpack.c.l.b16 %v3002
        %v3522 = vunpack.c.l.b16 %v3003
        %v3523 = vunpack.c.l.b16 %v3004
        %v3524 = vunpack.c.l.b16 %v3005
        %v3525 = vunpack.c.l.b16 %v3006
        %v3526 = vunpack.c.l.b16 %v3007
        %v3527 = vunpack.c.l.b16 %v3008
        %v3528 = vunpack.c.l.b16 %v3009
        %v3529 = vunpack.c.l.b16 %v3010
        %v3530 = vunpack.c.l.b16 %v3011
        %v3531 = vunpack.c.l.b16 %v3012
        %v3532 = vunpack.c.l.b16 %v3013
        %v3533 = vunpack.c.l.b16 %v3014
        %v3534 = vunpack.c.l.b16 %v3015
        %v3535 = vunpack.c.l.b16 %v3016
        %v3536 = vunpack.c.l.b16 %v3017
        %v3537 = vunpack.c.l.b16 %v3018
        %v3538 = vpack.c.b16 %v3283, %v3282
        %v3539 = vpack.c.b16 %v3285, %v3284
        %v3540 = vpack.c.b16 %v3287, %v3286
        %v3541 = vpack.c.b16 %v3289, %v3288
        %v3542 = vpack.c.b16 %v3291, %v3290
        %v3543 = vpack.c.b16 %v3293, %v3292
        %v3544 = vpack.c.b16 %v3295, %v3294
        %v3545 = vpack.c.b16 %v3297, %v3296
        %v3546 = vpack.c.b16 %v3299, %v3298
        %v3547 = vpack.c.b16 %v3301, %v3300
        %v3548 = vpack.c.b16 %v3303, %v3302
        %v3549 = vpack.c.b16 %v3305, %v3304
        %v3550 = vpack.c.b16 %v3307, %v3306
        %v3551 = vpack.c.b16 %v3309, %v3308
        %v3552 = vpack.c.b16 %v3311, %v3310
        %v3553 = vpack.c.b16 %v3313, %v3312
        %v3554 = vpack.c.b16 %v3315, %v3314
        %v3555 = vpack.c.b16 %v3317, %v3316
        %v3556 = vpack.c.b16 %v3319, %v3318
        %v3557 = vpack.c.b16 %v3321, %v3320
        %v3558 = vpack.c.b16 %v3323, %v3322
        %v3559 = vpack.c.b16 %v3325, %v3324
        %v3560 = vpack.c.b16 %v3327, %v3326
        %v3561 = vpack.c.b16 %v3329, %v3328
        %v3562 = vpack.c.b16 %v3331, %v3330
        %v3563 = vpack.c.b16 %v3333, %v3332
        %v3564 = vpack.c.b16 %v3335, %v3334
        %v3565 = vpack.c.b16 %v3337, %v3336
        %v3566 = vpack.c.b16 %v3339, %v3338
        %v3567 = vpack.c.b16 %v3341, %v3340
        %v3568 = vpack.c.b16 %v3343, %v3342
        %v3569 = vpack.c.b16 %v3345, %v3344
        %v3570 = vpack.c.b16 %v3347, %v3346
        %v3571 = vpack.c.b16 %v3349, %v3348
        %v3572 = vpack.c.b16 %v3351, %v3350
        %v3573 = vpack.c.b16 %v3353, %v3352
        %v3574 = vpack.c.b16 %v3355, %v3354
        %v3575 = vpack.c.b16 %v3357, %v3356
        %v3576 = vpack.c.b16 %v3359, %v3358
        %v3577 = vpack.c.b16 %v3361, %v3360
        %v3578 = vpack.c.b16 %v3363, %v3362
        %v3579 = vpack.c.b16 %v3365, %v3364
        %v3580 = vpack.c.b16 %v3367, %v3366
        %v3581 = vpack.c.b16 %v3369, %v3368
        %v3582 = vpack.c.b16 %v3371, %v3370
        %v3583 = vpack.c.b16 %v3373, %v3372
        %v3584 = vpack.c.b16 %v3375, %v3374
        %v3585 = vpack.c.b16 %v3377, %v3376
        %v3586 = vpack.c.b16 %v3379, %v3378
        %v3587 = vpack.c.b16 %v3381, %v3380
        %v3588 = vpack.c.b16 %v3383, %v3382
        %v3589 = vpack.c.b16 %v3385, %v3384
        %v3590 = vpack.c.b16 %v3387, %v3386
        %v3591 = vpack.c.b16 %v3389, %v3388
        %v3592 = vpack.c.b16 %v3391, %v3390
        %v3593 = vpack.c.b16 %v3393, %v3392
        %v3594 = vpack.c.b16 %v3395, %v3394
        %v3595 = vpack.c.b16 %v3397, %v3396
        %v3596 = vpack.c.b16 %v3399, %v3398
        %v3597 = vpack.c.b16 %v3401, %v3400
        %v3598 = vpack.c.b16 %v3403, %v3402
        %v3599 = vpack.c.b16 %v3405, %v3404
        %v3600 = vpack.c.b16 %v3407, %v3406
        %v3601 = vpack.c.b16 %v3409, %v3408
        %v3602 = vpack.c.b16 %v3411, %v3410
        %v3603 = vpack.c.b16 %v3413, %v3412
        %v3604 = vpack.c.b16 %v3415, %v3414
        %v3605 = vpack.c.b16 %v3417, %v3416
        %v3606 = vpack.c.b16 %v3419, %v3418
        %v3607 = vpack.c.b16 %v3421, %v3420
        %v3608 = vpack.c.b16 %v3423, %v3422
        %v3609 = vpack.c.b16 %v3425, %v3424
        %v3610 = vpack.c.b16 %v3427, %v3426
        %v3611 = vpack.c.b16 %v3429, %v3428
        %v3612 = vpack.c.b16 %v3431, %v3430
        %v3613 = vpack.c.b16 %v3433, %v3432
        %v3614 = vpack.c.b16 %v3435, %v3434
        %v3615 = vpack.c.b16 %v3437, %v3436
        %v3616 = vpack.c.b16 %v3439, %v3438
        %v3617 = vpack.c.b16 %v3441, %v3440
        %v3618 = vpack.c.b16 %v3443, %v3442
        %v3619 = vpack.c.b16 %v3445, %v3444
        %v3620 = vpack.c.b16 %v3447, %v3446
        %v3621 = vpack.c.b16 %v3449, %v3448
        %v3622 = vpack.c.b16 %v3451, %v3450
        %v3623 = vpack.c.b16 %v3453, %v3452
        %v3624 = vpack.c.b16 %v3455, %v3454
        %v3625 = vpack.c.b16 %v3457, %v3456
        %v3626 = vpack.c.b16 %v3459, %v3458
        %v3627 = vpack.c.b16 %v3461, %v3460
        %v3628 = vpack.c.b16 %v3463, %v3462
        %v3629 = vpack.c.b16 %v3465, %v3464
        %v3630 = vpack.c.b16 %v3467, %v3466
        %v3631 = vpack.c.b16 %v3469, %v3468
        %v3632 = vpack.c.b16 %v3471, %v3470
        %v3633 = vpack.c.b16 %v3473, %v3472
        %v3634 = vpack.c.b16 %v3475, %v3474
        %v3635 = vpack.c.b16 %v3477, %v3476
        %v3636 = vpack.c.b16 %v3479, %v3478
        %v3637 = vpack.c.b16 %v3481, %v3480
        %v3638 = vpack.c.b16 %v3483, %v3482
        %v3639 = vpack.c.b16 %v3485, %v3484
        %v3640 = vpack.c.b16 %v3487, %v3486
        %v3641 = vpack.c.b16 %v3489, %v3488
        %v3642 = vpack.c.b16 %v3491, %v3490
        %v3643 = vpack.c.b16 %v3493, %v3492
        %v3644 = vpack.c.b16 %v3495, %v3494
        %v3645 = vpack.c.b16 %v3497, %v3496
        %v3646 = vpack.c.b16 %v3499, %v3498
        %v3647 = vpack.c.b16 %v3501, %v3500
        %v3648 = vpack.c.b16 %v3503, %v3502
        %v3649 = vpack.c.b16 %v3505, %v3504
        %v3650 = vpack.c.b16 %v3507, %v3506
        %v3651 = vpack.c.b16 %v3509, %v3508
        %v3652 = vpack.c.b16 %v3511, %v3510
        %v3653 = vpack.c.b16 %v3513, %v3512
        %v3654 = vpack.c.b16 %v3515, %v3514
        %v3655 = vpack.c.b16 %v3517, %v3516
        %v3656 = vpack.c.b16 %v3519, %v3518
        %v3657 = vpack.c.b16 %v3521, %v3520
        %v3658 = vpack.c.b16 %v3523, %v3522
        %v3659 = vpack.c.b16 %v3525, %v3524
        %v3660 = vpack.c.b16 %v3527, %v3526
        %v3661 = vpack.c.b16 %v3529, %v3528
        %v3662 = vpack.c.b16 %v3531, %v3530
        %v3663 = vpack.c.b16 %v3533, %v3532
        %v3664 = vpack.c.b16 %v3535, %v3534
        %v3665 = vpack.c.b16 %v3537, %v3536
        %3794 = vmatprep.subr.bf16.mxu0 0
        %3795 = vmatpush1.bf16.msra.mxu0 %v3545
        %3796 = vmatprep.subr.bf16.mxu0 0
        %3797 = vmatpush1.bf16.msra.mxu0 %v3544
        %3798 = vmatprep.subr.bf16.mxu0 0
        %3799 = vmatpush1.bf16.msra.mxu0 %v3543
        %3800 = vmatprep.subr.bf16.mxu0 0
        %3801 = vmatpush1.bf16.msra.mxu0 %v3542
        %3802 = vmatprep.subr.bf16.mxu0 0
        %3803 = vmatpush1.bf16.msra.mxu0 %v3541
        %3804 = vmatprep.subr.bf16.mxu0 0
        %3805 = vmatpush1.bf16.msra.mxu0 %v3540
        %3806 = vmatprep.subr.bf16.mxu0 0
        %3807 = vmatpush1.bf16.msra.mxu0 %v3539
        %3808 = vmatprep.subr.bf16.mxu0 0
        %3809 = vmatpush1.bf16.msra.mxu0 %v3538
        %3810 = vmatprep.subr.bf16.mxu0 0
        %3811 = vmatpush2.bf16.msra.mxu0 %v3553
        %3812 = vmatprep.subr.bf16.mxu0 0
        %3813 = vmatpush2.bf16.msra.mxu0 %v3552
        %3814 = vmatprep.subr.bf16.mxu0 0
        %3815 = vmatpush2.bf16.msra.mxu0 %v3551
        %3816 = vmatprep.subr.bf16.mxu0 0
        %3817 = vmatpush2.bf16.msra.mxu0 %v3550
        %3818 = vmatprep.subr.bf16.mxu0 0
        %3819 = vmatpush2.bf16.msra.mxu0 %v3549
        %3820 = vmatprep.subr.bf16.mxu0 0
        %3821 = vmatpush2.bf16.msra.mxu0 %v3548
        %3822 = vmatprep.subr.bf16.mxu0 0
        %3823 = vmatpush2.bf16.msra.mxu0 %v3547
        %3824 = vmatprep.subr.bf16.mxu0 0
        %3825 = vmatpush2.bf16.msra.mxu0 %v3546
        %3826 = vmatprep.mubr.bf16.mxu0 %v2732
        %3827 = vmatmul.mubr.bf16.gmra.mxu0 %v2731
        %v3828 = vpop.f32.mrf.mxu0
        %v3829 = vadd.f32 %v3024, %v3828
        %v3830 = vpop.f32.mrf.mxu0
        %v3831 = vpop.f32.mrf.mxu0
        %v3832 = vadd.f32 %v3024, %v3831
        %v3833 = vpop.f32.mrf.mxu0
        %3834 = vmatprep.mubr.bf16.mxu0 %v2748
        %3835 = vmatmul.mubr.bf16.gmra.mxu0 %v2747
        %v3836 = vpop.f32.mrf.mxu0
        %v3837 = vadd.f32 %v3024, %v3836
        %v3838 = vpop.f32.mrf.mxu0
        %v3839 = vpop.f32.mrf.mxu0
        %v3840 = vadd.f32 %v3024, %v3839
        %v3841 = vpop.f32.mrf.mxu0
        %3842 = vdwg.mxu0
        %3843 = vmatprep.subr.bf16.mxu0 0
        %3844 = vmatpush1.bf16.msra.mxu0 %v3561
        %3845 = vmatprep.subr.bf16.mxu0 0
        %3846 = vmatpush1.bf16.msra.mxu0 %v3560
        %3847 = vmatprep.subr.bf16.mxu0 0
        %3848 = vmatpush1.bf16.msra.mxu0 %v3559
        %3849 = vmatprep.subr.bf16.mxu0 0
        %3850 = vmatpush1.bf16.msra.mxu0 %v3558
        %3851 = vmatprep.subr.bf16.mxu0 0
        %3852 = vmatpush1.bf16.msra.mxu0 %v3557
        %3853 = vmatprep.subr.bf16.mxu0 0
        %3854 = vmatpush1.bf16.msra.mxu0 %v3556
        %3855 = vmatprep.subr.bf16.mxu0 0
        %3856 = vmatpush1.bf16.msra.mxu0 %v3555
        %3857 = vmatprep.subr.bf16.mxu0 0
        %3858 = vmatpush1.bf16.msra.mxu0 %v3554
        %3859 = vmatprep.subr.bf16.mxu0 0
        %3860 = vmatpush2.bf16.msra.mxu0 %v3569
        %3861 = vmatprep.subr.bf16.mxu0 0
        %3862 = vmatpush2.bf16.msra.mxu0 %v3568
        %3863 = vmatprep.subr.bf16.mxu0 0
        %3864 = vmatpush2.bf16.msra.mxu0 %v3567
        %3865 = vmatprep.subr.bf16.mxu0 0
        %3866 = vmatpush2.bf16.msra.mxu0 %v3566
        %3867 = vmatprep.subr.bf16.mxu0 0
        %3868 = vmatpush2.bf16.msra.mxu0 %v3565
        %3869 = vmatprep.subr.bf16.mxu0 0
        %3870 = vmatpush2.bf16.msra.mxu0 %v3564
        %3871 = vmatprep.subr.bf16.mxu0 0
        %3872 = vmatpush2.bf16.msra.mxu0 %v3563
        %3873 = vmatprep.subr.bf16.mxu0 0
        %3874 = vmatpush2.bf16.msra.mxu0 %v3562
        %3875 = vmatprep.mubr.bf16.mxu0 %v2734
        %3876 = vmatmul.mubr.bf16.gmra.mxu0 %v2733
        %v3877 = vpop.f32.mrf.mxu0
        %v3878 = vadd.f32 %v3829, %v3877
        %v3879 = vpop.f32.mrf.mxu0
        %v3880 = vpop.f32.mrf.mxu0
        %v3881 = vadd.f32 %v3832, %v3880
        %v3882 = vpop.f32.mrf.mxu0
        %3883 = vmatprep.mubr.bf16.mxu0 %v2750
        %3884 = vmatmul.mubr.bf16.gmra.mxu0 %v2749
        %v3885 = vpop.f32.mrf.mxu0
        %v3886 = vadd.f32 %v3837, %v3885
        %v3887 = vpop.f32.mrf.mxu0
        %v3888 = vpop.f32.mrf.mxu0
        %v3889 = vadd.f32 %v3840, %v3888
        %v3890 = vpop.f32.mrf.mxu0
        %3891 = vdwg.mxu0
        %3892 = vmatprep.subr.bf16.mxu0 0
        %3893 = vmatpush1.bf16.msra.mxu0 %v3577
        %3894 = vmatprep.subr.bf16.mxu0 0
        %3895 = vmatpush1.bf16.msra.mxu0 %v3576
        %3896 = vmatprep.subr.bf16.mxu0 0
        %3897 = vmatpush1.bf16.msra.mxu0 %v3575
        %3898 = vmatprep.subr.bf16.mxu0 0
        %3899 = vmatpush1.bf16.msra.mxu0 %v3574
        %3900 = vmatprep.subr.bf16.mxu0 0
        %3901 = vmatpush1.bf16.msra.mxu0 %v3573
        %3902 = vmatprep.subr.bf16.mxu0 0
        %3903 = vmatpush1.bf16.msra.mxu0 %v3572
        %3904 = vmatprep.subr.bf16.mxu0 0
        %3905 = vmatpush1.bf16.msra.mxu0 %v3571
        %3906 = vmatprep.subr.bf16.mxu0 0
        %3907 = vmatpush1.bf16.msra.mxu0 %v3570
        %3908 = vmatprep.subr.bf16.mxu0 0
        %3909 = vmatpush2.bf16.msra.mxu0 %v3585
        %3910 = vmatprep.subr.bf16.mxu0 0
        %3911 = vmatpush2.bf16.msra.mxu0 %v3584
        %3912 = vmatprep.subr.bf16.mxu0 0
        %3913 = vmatpush2.bf16.msra.mxu0 %v3583
        %3914 = vmatprep.subr.bf16.mxu0 0
        %3915 = vmatpush2.bf16.msra.mxu0 %v3582
        %3916 = vmatprep.subr.bf16.mxu0 0
        %3917 = vmatpush2.bf16.msra.mxu0 %v3581
        %3918 = vmatprep.subr.bf16.mxu0 0
        %3919 = vmatpush2.bf16.msra.mxu0 %v3580
        %3920 = vmatprep.subr.bf16.mxu0 0
        %3921 = vmatpush2.bf16.msra.mxu0 %v3579
        %3922 = vmatprep.subr.bf16.mxu0 0
        %3923 = vmatpush2.bf16.msra.mxu0 %v3578
        %3924 = vmatprep.mubr.bf16.mxu0 %v2736
        %3925 = vmatmul.mubr.bf16.gmra.mxu0 %v2735
        %v3926 = vpop.f32.mrf.mxu0
        %v3927 = vadd.f32 %v3878, %v3926
        %v3928 = vpop.f32.mrf.mxu0
        %v3929 = vpop.f32.mrf.mxu0
        %v3930 = vadd.f32 %v3881, %v3929
        %v3931 = vpop.f32.mrf.mxu0
        %3932 = vmatprep.mubr.bf16.mxu0 %v2752
        %3933 = vmatmul.mubr.bf16.gmra.mxu0 %v2751
        %v3934 = vpop.f32.mrf.mxu0
        %v3935 = vadd.f32 %v3886, %v3934
        %v3936 = vpop.f32.mrf.mxu0
        %v3937 = vpop.f32.mrf.mxu0
        %v3938 = vadd.f32 %v3889, %v3937
        %v3939 = vpop.f32.mrf.mxu0
        %3940 = vdwg.mxu0
        %3941 = vmatprep.subr.bf16.mxu0 0
        %3942 = vmatpush1.bf16.msra.mxu0 %v3593
        %3943 = vmatprep.subr.bf16.mxu0 0
        %3944 = vmatpush1.bf16.msra.mxu0 %v3592
        %3945 = vmatprep.subr.bf16.mxu0 0
        %3946 = vmatpush1.bf16.msra.mxu0 %v3591
        %3947 = vmatprep.subr.bf16.mxu0 0
        %3948 = vmatpush1.bf16.msra.mxu0 %v3590
        %3949 = vmatprep.subr.bf16.mxu0 0
        %3950 = vmatpush1.bf16.msra.mxu0 %v3589
        %3951 = vmatprep.subr.bf16.mxu0 0
        %3952 = vmatpush1.bf16.msra.mxu0 %v3588
        %3953 = vmatprep.subr.bf16.mxu0 0
        %3954 = vmatpush1.bf16.msra.mxu0 %v3587
        %3955 = vmatprep.subr.bf16.mxu0 0
        %3956 = vmatpush1.bf16.msra.mxu0 %v3586
        %3957 = vmatprep.subr.bf16.mxu0 0
        %3958 = vmatpush2.bf16.msra.mxu0 %v3601
        %3959 = vmatprep.subr.bf16.mxu0 0
        %3960 = vmatpush2.bf16.msra.mxu0 %v3600
        %3961 = vmatprep.subr.bf16.mxu0 0
        %3962 = vmatpush2.bf16.msra.mxu0 %v3599
        %3963 = vmatprep.subr.bf16.mxu0 0
        %3964 = vmatpush2.bf16.msra.mxu0 %v3598
        %3965 = vmatprep.subr.bf16.mxu0 0
        %3966 = vmatpush2.bf16.msra.mxu0 %v3597
        %3967 = vmatprep.subr.bf16.mxu0 0
        %3968 = vmatpush2.bf16.msra.mxu0 %v3596
        %3969 = vmatprep.subr.bf16.mxu0 0
        %3970 = vmatpush2.bf16.msra.mxu0 %v3595
        %3971 = vmatprep.subr.bf16.mxu0 0
        %3972 = vmatpush2.bf16.msra.mxu0 %v3594
        %3973 = vmatprep.mubr.bf16.mxu0 %v2738
        %3974 = vmatmul.mubr.bf16.gmra.mxu0 %v2737
        %v3975 = vpop.f32.mrf.mxu0
        %v3976 = vadd.f32 %v3927, %v3975
        %v3977 = vpop.f32.mrf.mxu0
        %v3978 = vpop.f32.mrf.mxu0
        %v3979 = vadd.f32 %v3930, %v3978
        %v3980 = vpop.f32.mrf.mxu0
        %3981 = vmatprep.mubr.bf16.mxu0 %v2754
        %3982 = vmatmul.mubr.bf16.gmra.mxu0 %v2753
        %v3983 = vpop.f32.mrf.mxu0
        %v3984 = vadd.f32 %v3935, %v3983
        %v3985 = vpop.f32.mrf.mxu0
        %v3986 = vpop.f32.mrf.mxu0
        %v3987 = vadd.f32 %v3938, %v3986
        %v3988 = vpop.f32.mrf.mxu0
        %3989 = vdwg.mxu0
        %3990 = vmatprep.subr.bf16.mxu0 0
        %3991 = vmatpush1.bf16.msra.mxu0 %v3609
        %3992 = vmatprep.subr.bf16.mxu0 0
        %3993 = vmatpush1.bf16.msra.mxu0 %v3608
        %3994 = vmatprep.subr.bf16.mxu0 0
        %3995 = vmatpush1.bf16.msra.mxu0 %v3607
        %3996 = vmatprep.subr.bf16.mxu0 0
        %3997 = vmatpush1.bf16.msra.mxu0 %v3606
        %3998 = vmatprep.subr.bf16.mxu0 0
        %3999 = vmatpush1.bf16.msra.mxu0 %v3605
        %4000 = vmatprep.subr.bf16.mxu0 0
        %4001 = vmatpush1.bf16.msra.mxu0 %v3604
        %4002 = vmatprep.subr.bf16.mxu0 0
        %4003 = vmatpush1.bf16.msra.mxu0 %v3603
        %4004 = vmatprep.subr.bf16.mxu0 0
        %4005 = vmatpush1.bf16.msra.mxu0 %v3602
        %4006 = vmatprep.subr.bf16.mxu0 0
        %4007 = vmatpush2.bf16.msra.mxu0 %v3617
        %4008 = vmatprep.subr.bf16.mxu0 0
        %4009 = vmatpush2.bf16.msra.mxu0 %v3616
        %4010 = vmatprep.subr.bf16.mxu0 0
        %4011 = vmatpush2.bf16.msra.mxu0 %v3615
        %4012 = vmatprep.subr.bf16.mxu0 0
        %4013 = vmatpush2.bf16.msra.mxu0 %v3614
        %4014 = vmatprep.subr.bf16.mxu0 0
        %4015 = vmatpush2.bf16.msra.mxu0 %v3613
        %4016 = vmatprep.subr.bf16.mxu0 0
        %4017 = vmatpush2.bf16.msra.mxu0 %v3612
        %4018 = vmatprep.subr.bf16.mxu0 0
        %4019 = vmatpush2.bf16.msra.mxu0 %v3611
        %4020 = vmatprep.subr.bf16.mxu0 0
        %4021 = vmatpush2.bf16.msra.mxu0 %v3610
        %4022 = vmatprep.mubr.bf16.mxu0 %v2740
        %4023 = vmatmul.mubr.bf16.gmra.mxu0 %v2739
        %v4024 = vpop.f32.mrf.mxu0
        %v4025 = vadd.f32 %v3976, %v4024
        %v4026 = vpop.f32.mrf.mxu0
        %v4027 = vpop.f32.mrf.mxu0
        %v4028 = vadd.f32 %v3979, %v4027
        %v4029 = vpop.f32.mrf.mxu0
        %4030 = vmatprep.mubr.bf16.mxu0 %v2756
        %4031 = vmatmul.mubr.bf16.gmra.mxu0 %v2755
        %v4032 = vpop.f32.mrf.mxu0
        %v4033 = vadd.f32 %v3984, %v4032
        %v4034 = vpop.f32.mrf.mxu0
        %v4035 = vpop.f32.mrf.mxu0
        %v4036 = vadd.f32 %v3987, %v4035
        %v4037 = vpop.f32.mrf.mxu0
        %4038 = vdwg.mxu0
        %4039 = vmatprep.subr.bf16.mxu0 0
        %4040 = vmatpush1.bf16.msra.mxu0 %v3625
        %4041 = vmatprep.subr.bf16.mxu0 0
        %4042 = vmatpush1.bf16.msra.mxu0 %v3624
        %4043 = vmatprep.subr.bf16.mxu0 0
        %4044 = vmatpush1.bf16.msra.mxu0 %v3623
        %4045 = vmatprep.subr.bf16.mxu0 0
        %4046 = vmatpush1.bf16.msra.mxu0 %v3622
        %4047 = vmatprep.subr.bf16.mxu0 0
        %4048 = vmatpush1.bf16.msra.mxu0 %v3621
        %4049 = vmatprep.subr.bf16.mxu0 0
        %4050 = vmatpush1.bf16.msra.mxu0 %v3620
        %4051 = vmatprep.subr.bf16.mxu0 0
        %4052 = vmatpush1.bf16.msra.mxu0 %v3619
        %4053 = vmatprep.subr.bf16.mxu0 0
        %4054 = vmatpush1.bf16.msra.mxu0 %v3618
        %4055 = vmatprep.subr.bf16.mxu0 0
        %4056 = vmatpush2.bf16.msra.mxu0 %v3633
        %4057 = vmatprep.subr.bf16.mxu0 0
        %4058 = vmatpush2.bf16.msra.mxu0 %v3632
        %4059 = vmatprep.subr.bf16.mxu0 0
        %4060 = vmatpush2.bf16.msra.mxu0 %v3631
        %4061 = vmatprep.subr.bf16.mxu0 0
        %4062 = vmatpush2.bf16.msra.mxu0 %v3630
        %4063 = vmatprep.subr.bf16.mxu0 0
        %4064 = vmatpush2.bf16.msra.mxu0 %v3629
        %4065 = vmatprep.subr.bf16.mxu0 0
        %4066 = vmatpush2.bf16.msra.mxu0 %v3628
        %4067 = vmatprep.subr.bf16.mxu0 0
        %4068 = vmatpush2.bf16.msra.mxu0 %v3627
        %4069 = vmatprep.subr.bf16.mxu0 0
        %4070 = vmatpush2.bf16.msra.mxu0 %v3626
        %4071 = vmatprep.mubr.bf16.mxu0 %v2742
        %4072 = vmatmul.mubr.bf16.gmra.mxu0 %v2741
        %v4073 = vpop.f32.mrf.mxu0
        %v4074 = vadd.f32 %v4025, %v4073
        %v4075 = vpop.f32.mrf.mxu0
        %v4076 = vpop.f32.mrf.mxu0
        %v4077 = vadd.f32 %v4028, %v4076
        %v4078 = vpop.f32.mrf.mxu0
        %4079 = vmatprep.mubr.bf16.mxu0 %v2758
        %4080 = vmatmul.mubr.bf16.gmra.mxu0 %v2757
        %v4081 = vpop.f32.mrf.mxu0
        %v4082 = vadd.f32 %v4033, %v4081
        %v4083 = vpop.f32.mrf.mxu0
        %v4084 = vpop.f32.mrf.mxu0
        %v4085 = vadd.f32 %v4036, %v4084
        %v4086 = vpop.f32.mrf.mxu0
        %4087 = vdwg.mxu0
        %4088 = vmatprep.subr.bf16.mxu0 0
        %4089 = vmatpush1.bf16.msra.mxu0 %v3641
        %4090 = vmatprep.subr.bf16.mxu0 0
        %4091 = vmatpush1.bf16.msra.mxu0 %v3640
        %4092 = vmatprep.subr.bf16.mxu0 0
        %4093 = vmatpush1.bf16.msra.mxu0 %v3639
        %4094 = vmatprep.subr.bf16.mxu0 0
        %4095 = vmatpush1.bf16.msra.mxu0 %v3638
        %4096 = vmatprep.subr.bf16.mxu0 0
        %4097 = vmatpush1.bf16.msra.mxu0 %v3637
        %4098 = vmatprep.subr.bf16.mxu0 0
        %4099 = vmatpush1.bf16.msra.mxu0 %v3636
        %4100 = vmatprep.subr.bf16.mxu0 0
        %4101 = vmatpush1.bf16.msra.mxu0 %v3635
        %4102 = vmatprep.subr.bf16.mxu0 0
        %4103 = vmatpush1.bf16.msra.mxu0 %v3634
        %4104 = vmatprep.subr.bf16.mxu0 0
        %4105 = vmatpush2.bf16.msra.mxu0 %v3649
        %4106 = vmatprep.subr.bf16.mxu0 0
        %4107 = vmatpush2.bf16.msra.mxu0 %v3648
        %4108 = vmatprep.subr.bf16.mxu0 0
        %4109 = vmatpush2.bf16.msra.mxu0 %v3647
        %4110 = vmatprep.subr.bf16.mxu0 0
        %4111 = vmatpush2.bf16.msra.mxu0 %v3646
        %4112 = vmatprep.subr.bf16.mxu0 0
        %4113 = vmatpush2.bf16.msra.mxu0 %v3645
        %4114 = vmatprep.subr.bf16.mxu0 0
        %4115 = vmatpush2.bf16.msra.mxu0 %v3644
        %4116 = vmatprep.subr.bf16.mxu0 0
        %4117 = vmatpush2.bf16.msra.mxu0 %v3643
        %4118 = vmatprep.subr.bf16.mxu0 0
        %4119 = vmatpush2.bf16.msra.mxu0 %v3642
        %4120 = vmatprep.mubr.bf16.mxu0 %v2744
        %4121 = vmatmul.mubr.bf16.gmra.mxu0 %v2743
        %v4122 = vpop.f32.mrf.mxu0
        %v4123 = vadd.f32 %v4074, %v4122
        %v4124 = vpop.f32.mrf.mxu0
        %v4125 = vpop.f32.mrf.mxu0
        %v4126 = vadd.f32 %v4077, %v4125
        %v4127 = vpop.f32.mrf.mxu0
        %4128 = vmatprep.mubr.bf16.mxu0 %v2760
        %4129 = vmatmul.mubr.bf16.gmra.mxu0 %v2759
        %v4130 = vpop.f32.mrf.mxu0
        %v4131 = vadd.f32 %v4082, %v4130
        %v4132 = vpop.f32.mrf.mxu0
        %v4133 = vpop.f32.mrf.mxu0
        %v4134 = vadd.f32 %v4085, %v4133
        %v4135 = vpop.f32.mrf.mxu0
        %4136 = vdwg.mxu0
        %4137 = vmatprep.subr.bf16.mxu0 0
        %4138 = vmatpush1.bf16.msra.mxu0 %v3657
        %4139 = vmatprep.subr.bf16.mxu0 0
        %4140 = vmatpush1.bf16.msra.mxu0 %v3656
        %4141 = vmatprep.subr.bf16.mxu0 0
        %4142 = vmatpush1.bf16.msra.mxu0 %v3655
        %4143 = vmatprep.subr.bf16.mxu0 0
        %4144 = vmatpush1.bf16.msra.mxu0 %v3654
        %4145 = vmatprep.subr.bf16.mxu0 0
        %4146 = vmatpush1.bf16.msra.mxu0 %v3653
        %4147 = vmatprep.subr.bf16.mxu0 0
        %4148 = vmatpush1.bf16.msra.mxu0 %v3652
        %4149 = vmatprep.subr.bf16.mxu0 0
        %4150 = vmatpush1.bf16.msra.mxu0 %v3651
        %4151 = vmatprep.subr.bf16.mxu0 0
        %4152 = vmatpush1.bf16.msra.mxu0 %v3650
        %4153 = vmatprep.subr.bf16.mxu0 0
        %4154 = vmatpush2.bf16.msra.mxu0 %v3665
        %4155 = vmatprep.subr.bf16.mxu0 0
        %4156 = vmatpush2.bf16.msra.mxu0 %v3664
        %4157 = vmatprep.subr.bf16.mxu0 0
        %4158 = vmatpush2.bf16.msra.mxu0 %v3663
        %4159 = vmatprep.subr.bf16.mxu0 0
        %4160 = vmatpush2.bf16.msra.mxu0 %v3662
        %4161 = vmatprep.subr.bf16.mxu0 0
        %4162 = vmatpush2.bf16.msra.mxu0 %v3661
        %4163 = vmatprep.subr.bf16.mxu0 0
        %4164 = vmatpush2.bf16.msra.mxu0 %v3660
        %4165 = vmatprep.subr.bf16.mxu0 0
        %4166 = vmatpush2.bf16.msra.mxu0 %v3659
        %4167 = vmatprep.subr.bf16.mxu0 0
        %4168 = vmatpush2.bf16.msra.mxu0 %v3658
        %4169 = vmatprep.mubr.bf16.mxu0 %v2746
        %4170 = vmatmul.mubr.bf16.gmra.mxu0 %v2745
        %v4171 = vpop.f32.mrf.mxu0
        %v4172 = vadd.f32 %v4123, %v4171
        %v4173 = vpop.f32.mrf.mxu0
        %v4174 = vpop.f32.mrf.mxu0
        %v4175 = vadd.f32 %v4126, %v4174
        %v4176 = vpop.f32.mrf.mxu0
        %4177 = vmatprep.mubr.bf16.mxu0 %v2762
        %4178 = vmatmul.mubr.bf16.gmra.mxu0 %v2761
        %v4179 = vpop.f32.mrf.mxu0
        %v4180 = vadd.f32 %v4131, %v4179
        %v4181 = vpop.f32.mrf.mxu0
        %v4182 = vpop.f32.mrf.mxu0
        %v4183 = vadd.f32 %v4134, %v4182
        %v4184 = vpop.f32.mrf.mxu0
        %4185 = vdwg.mxu0
        %v4186 = vadd.f32 %v1763, %v4172
        %v4187 = vadd.f32 %v1764, %v4175
        %v4188 = vadd.f32 %v1765, %v4180
        %v4189 = vadd.f32 %v1766, %v4183
        %v4190 = vld [vmem:[%s817] sm:$0x1]
        %v4191 = vld [vmem:[%s820] sm:$0x1]
        %v4192 = vsel %vm999, %v4186, 0.0
        %4193 = vadd.xlane.f32.xlu0 %v4192
        %v4194 = vpop.xlane.xlu0 %4193
        %v4195 = vsel %vm999, %v4187, 0.0
        %4196 = vadd.xlane.f32.xlu0 %v4195
        %v4197 = vpop.xlane.xlu0 %4196
        %v4198 = vsel %vm999, %v4188, 0.0
        %4199 = vadd.xlane.f32.xlu0 %v4198
        %v4200 = vpop.xlane.xlu0 %4199
        %v4201 = vsel %vm999, %v4189, 0.0
        %4202 = vadd.xlane.f32.xlu0 %v4201
        %v4203 = vpop.xlane.xlu0 %4202
        %v4204 = vmul.f32 %v4194, %v1706
        %v4205 = vmul.f32 %v4197, %v1706
        %v4206 = vmul.f32 %v4200, %v1706
        %v4207 = vmul.f32 %v4203, %v1706
        %v4208 = vsub.f32 %v4186, %v4204
        %v4209 = vsub.f32 %v4187, %v4205
        %v4210 = vsub.f32 %v4188, %v4206
        %v4211 = vsub.f32 %v4189, %v4207
        %v4212 = vmul.f32 %v4208, %v4208
        %v4213 = vmul.f32 %v4209, %v4209
        %v4214 = vmul.f32 %v4210, %v4210
        %v4215 = vmul.f32 %v4211, %v4211
        %v4216 = vsel %vm999, %v4212, 0.0
        %4217 = vadd.xlane.f32.xlu0 %v4216
        %v4218 = vpop.xlane.xlu0 %4217
        %v4219 = vsel %vm999, %v4213, 0.0
        %4220 = vadd.xlane.f32.xlu0 %v4219
        %v4221 = vpop.xlane.xlu0 %4220
        %v4222 = vsel %vm999, %v4214, 0.0
        %4223 = vadd.xlane.f32.xlu0 %v4222
        %v4224 = vpop.xlane.xlu0 %4223
        %v4225 = vsel %vm999, %v4215, 0.0
        %4226 = vadd.xlane.f32.xlu0 %v4225
        %v4227 = vpop.xlane.xlu0 %4226
        %v4228 = vmul.f32 %v4218, %v1706
        %v4229 = vmul.f32 %v4221, %v1706
        %v4230 = vmul.f32 %v4224, %v1706
        %v4231 = vmul.f32 %v4227, %v1706
        %v4232 = vadd.f32 %v4228, 1e-05
        %v4233 = vadd.f32 %v4229, 1e-05
        %v4234 = vadd.f32 %v4230, 1e-05
        %v4235 = vadd.f32 %v4231, 1e-05
        %v4236 = vrsqrt.pop %v4232
        %v4237 = vrsqrt.pop %v4233
        %v4238 = vrsqrt.pop %v4234
        %v4239 = vrsqrt.pop %v4235
        %v4240 = vmul.f32 %v4208, %v4236
        %v4241 = vmul.f32 %v4209, %v4237
        %v4242 = vmul.f32 %v4210, %v4238
        %v4243 = vmul.f32 %v4211, %v4239
        %v4245 = vlaneseq
        %v4246 = vshrl.u32 %v4245, 7
        %v4247 = vsub.s32 0, %v4246
        %v4248 = vrot.slane %v4190, %v4247
        %v4250 = vmul.f32 %v4240, %v4248
        %v4251 = vmul.f32 %v4241, %v4248
        %v4252 = vmul.f32 %v4242, %v4248
        %v4253 = vmul.f32 %v4243, %v4248
        %v4255 = vlaneseq
        %v4256 = vshrl.u32 %v4255, 7
        %v4257 = vsub.s32 0, %v4256
        %v4258 = vrot.slane %v4191, %v4257
        %v4260 = vadd.f32 %v4250, %v4258
        %v4261 = vadd.f32 %v4251, %v4258
        %v4262 = vadd.f32 %v4252, %v4258
        %v4263 = vadd.f32 %v4253, %v4258
        %4264 = vst.msk [vmem:[#allocation2] sm:$0xff] %vm999, %v4260
        %4265 = vst.msk [vmem:[#allocation2 + $0x8] sm:$0xff] %vm999, %v4261
        %4266 = vst.msk [vmem:[#allocation2 + $0x10] sm:$0xff] %vm999, %v4262
        %4267 = vst.msk [vmem:[#allocation2 + $0x18] sm:$0xff] %vm999, %v4263
        %p4268 = scmp.eq.s32.totalorder %s33, 2
        // Predicated region
        $region109: #{vit_encoder_forward.1} parent=103 // pred_check
          %p4269 = pneg %p4268
        $region110: #{vit_encoder_forward.1} parent=103 // pred_check_branch
          %4271 = sbr.rel (%p4269) target = $region112
        $region111: #{vit_encoder_forward.1} parent=103 // pred_region
          %v4272 = vld [vmem:[%s6] sm:$0x3]
          %vm4273 = vcmask 261120
          %v4275 = vsel %vm4273, %v4272, 0
          %4277 = vmatprep.subr.mxu0 0.0
          %4278 = vmatpush1.msra.mxu0 0.0
          %4279 = vmatprep.subr.mxu0 0.0
          %4280 = vmatpush1.msra.mxu0 0.0
          %4281 = vmatprep.subr.mxu0 0.0
          %4282 = vmatpush1.msra.mxu0 0.0
          %4283 = vmatprep.subr.mxu0 0.0
          %4284 = vmatpush1.msra.mxu0 0.0
          %4285 = vmatprep.subr.mxu0 0.0
          %4286 = vmatpush1.msra.mxu0 0.0
          %4287 = vmatprep.subr.mxu0 0.0
          %4288 = vmatpush1.msra.mxu0 0.0
          %4289 = vmatprep.subr.mxu0 0.0
          %4290 = vmatpush1.msra.mxu0 0.0
          %4291 = vmatprep.subr.mxu0 0.0
          %4292 = vmatpush1.msra.mxu0 0.0
          %4293 = vmatprep.subr.mxu0 0.0
          %4294 = vmatpush1.msra.mxu0 0.0
          %4295 = vmatprep.subr.mxu0 0.0
          %4296 = vmatpush1.msra.mxu0 0.0
          %4297 = vmatprep.subr.mxu0 0.0
          %4298 = vmatpush1.msra.mxu0 0.0
          %4299 = vmatprep.subr.mxu0 0.0
          %4300 = vmatpush1.msra.mxu0 0.0
          %4301 = vmatprep.subr.mxu0 0.0
          %4302 = vmatpush1.msra.mxu0 %v4263
          %4303 = vmatprep.subr.mxu0 0.0
          %4304 = vmatpush1.msra.mxu0 %v4262
          %4305 = vmatprep.subr.mxu0 0.0
          %4306 = vmatpush1.msra.mxu0 %v4261
          %4307 = vmatprep.subr.mxu0 0.0
          %4308 = vmatpush1.msra.mxu0 %v4260
          %4309 = vmatprep.subr.mxu0 0.0
          %4310 = vmatpush2.msra.mxu0 0.0
          %4311 = vmatprep.subr.mxu0 0.0
          %4312 = vmatpush2.msra.mxu0 0.0
          %4313 = vmatprep.subr.mxu0 0.0
          %4314 = vmatpush2.msra.mxu0 0.0
          %4315 = vmatprep.subr.mxu0 0.0
          %4316 = vmatpush2.msra.mxu0 0.0
          %4317 = vmatprep.subr.mxu0 0.0
          %4318 = vmatpush2.msra.mxu0 0.0
          %4319 = vmatprep.subr.mxu0 0.0
          %4320 = vmatpush2.msra.mxu0 0.0
          %4321 = vmatprep.subr.mxu0 0.0
          %4322 = vmatpush2.msra.mxu0 0.0
          %4323 = vmatprep.subr.mxu0 0.0
          %4324 = vmatpush2.msra.mxu0 0.0
          %4325 = vmatprep.subr.mxu0 0.0
          %4326 = vmatpush2.msra.mxu0 0.0
          %4327 = vmatprep.subr.mxu0 0.0
          %4328 = vmatpush2.msra.mxu0 0.0
          %4329 = vmatprep.subr.mxu0 0.0
          %4330 = vmatpush2.msra.mxu0 0.0
          %4331 = vmatprep.subr.mxu0 0.0
          %4332 = vmatpush2.msra.mxu0 0.0
          %4333 = vmatprep.subr.mxu0 0.0
          %4334 = vmatpush2.msra.mxu0 0.0
          %4335 = vmatprep.subr.mxu0 0.0
          %4336 = vmatpush2.msra.mxu0 0.0
          %4337 = vmatprep.subr.mxu0 0.0
          %4338 = vmatpush2.msra.mxu0 0.0
          %4339 = vmatprep.subr.mxu0 0.0
          %4340 = vmatpush2.msra.mxu0 0.0
          %4341 = vmatprep.mubr.f32.mxu0 0.0
          %4342 = vmatmul.mubr.f32.gmra.mxu0 %v4275
          %v4343 = vpop.f32.mrf.mxu0
          %v4344 = vadd.f32 0.0, %v4343
          %v4345 = vpop.f32.mrf.mxu0
          %4346 = vdwg.mxu0
          %v4347 = vld [vmem:[%s19] sm:$0xff]
          %v4348 = vld [vmem:[%s19 + $0x8] sm:$0xff]
          %v4349 = vld [vmem:[%s19 + $0x10] sm:$0xff]
          %v4350 = vld [vmem:[%s19 + $0x18] sm:$0xff]
          %v4351 = vld [vmem:[%s19 + $0x20] sm:$0xff]
          %v4352 = vld [vmem:[%s19 + $0x28] sm:$0xff]
          %v4353 = vld [vmem:[%s19 + $0x30] sm:$0xff]
          %v4354 = vld [vmem:[%s19 + $0x38] sm:$0xff]
          %v4355 = vld [vmem:[%s20] sm:$0x1]
          %v4357 = vlaneseq
          %v4358 = vshrl.u32 %v4357, 7
          %v4359 = vsub.s32 0, %v4358
          %v4360 = vrot.slane %v4355, %v4359
          %v4363 = vsel %vm999, %v4344, 0
          %4365 = vmatprep.subr.mxu0 0.0
          %4366 = vmatpush1.msra.mxu0 0.0
          %4367 = vmatprep.subr.mxu0 0.0
          %4368 = vmatpush1.msra.mxu0 0.0
          %4369 = vmatprep.subr.mxu0 0.0
          %4370 = vmatpush1.msra.mxu0 0.0
          %4371 = vmatprep.subr.mxu0 0.0
          %4372 = vmatpush1.msra.mxu0 0.0
          %4373 = vmatprep.subr.mxu0 0.0
          %4374 = vmatpush1.msra.mxu0 0.0
          %4375 = vmatprep.subr.mxu0 0.0
          %4376 = vmatpush1.msra.mxu0 0.0
          %4377 = vmatprep.subr.mxu0 0.0
          %4378 = vmatpush1.msra.mxu0 0.0
          %4379 = vmatprep.subr.mxu0 0.0
          %4380 = vmatpush1.msra.mxu0 0.0
          %4381 = vmatprep.subr.mxu0 0.0
          %4382 = vmatpush1.msra.mxu0 %v4354
          %4383 = vmatprep.subr.mxu0 0.0
          %4384 = vmatpush1.msra.mxu0 %v4353
          %4385 = vmatprep.subr.mxu0 0.0
          %4386 = vmatpush1.msra.mxu0 %v4352
          %4387 = vmatprep.subr.mxu0 0.0
          %4388 = vmatpush1.msra.mxu0 %v4351
          %4389 = vmatprep.subr.mxu0 0.0
          %4390 = vmatpush1.msra.mxu0 %v4350
          %4391 = vmatprep.subr.mxu0 0.0
          %4392 = vmatpush1.msra.mxu0 %v4349
          %4393 = vmatprep.subr.mxu0 0.0
          %4394 = vmatpush1.msra.mxu0 %v4348
          %4395 = vmatprep.subr.mxu0 0.0
          %4396 = vmatpush1.msra.mxu0 %v4347
          %4397 = vmatprep.subr.mxu0 0.0
          %4398 = vmatpush2.msra.mxu0 0.0
          %4399 = vmatprep.subr.mxu0 0.0
          %4400 = vmatpush2.msra.mxu0 0.0
          %4401 = vmatprep.subr.mxu0 0.0
          %4402 = vmatpush2.msra.mxu0 0.0
          %4403 = vmatprep.subr.mxu0 0.0
          %4404 = vmatpush2.msra.mxu0 0.0
          %4405 = vmatprep.subr.mxu0 0.0
          %4406 = vmatpush2.msra.mxu0 0.0
          %4407 = vmatprep.subr.mxu0 0.0
          %4408 = vmatpush2.msra.mxu0 0.0
          %4409 = vmatprep.subr.mxu0 0.0
          %4410 = vmatpush2.msra.mxu0 0.0
          %4411 = vmatprep.subr.mxu0 0.0
          %4412 = vmatpush2.msra.mxu0 0.0
          %4413 = vmatprep.subr.mxu0 0.0
          %4414 = vmatpush2.msra.mxu0 0.0
          %4415 = vmatprep.subr.mxu0 0.0
          %4416 = vmatpush2.msra.mxu0 0.0
          %4417 = vmatprep.subr.mxu0 0.0
          %4418 = vmatpush2.msra.mxu0 0.0
          %4419 = vmatprep.subr.mxu0 0.0
          %4420 = vmatpush2.msra.mxu0 0.0
          %4421 = vmatprep.subr.mxu0 0.0
          %4422 = vmatpush2.msra.mxu0 0.0
          %4423 = vmatprep.subr.mxu0 0.0
          %4424 = vmatpush2.msra.mxu0 0.0
          %4425 = vmatprep.subr.mxu0 0.0
          %4426 = vmatpush2.msra.mxu0 0.0
          %4427 = vmatprep.subr.mxu0 0.0
          %4428 = vmatpush2.msra.mxu0 0.0
          %4429 = vmatprep.mubr.f32.mxu0 0.0
          %4430 = vmatmul.mubr.f32.gmra.mxu0 %v4363
          %v4431 = vpop.f32.mrf.mxu0
          %v4432 = vadd.f32 %v4360, %v4431
          %v4433 = vpop.f32.mrf.mxu0
          %4434 = vdwg.mxu0
          %vm4435 = vcmask 254976
          %4436 = vst.msk [vmem:[#allocation3] sm:$0x3] %vm4435, %v4432
        $region112: #{vit_encoder_forward.1} parent=103 // pred_fallthru
          _
        // Predicated region
        $region113: #{vit_encoder_forward.1} parent=103 // pred_check
          %p4437 = pneg %p547
        $region114: #{vit_encoder_forward.1} parent=103 // pred_check_branch
          %4439 = sbr.rel (%p4437) target = $region116
        $region115: #{vit_encoder_forward.1} parent=103 // pred_region
          %s4441 = ssub.s32 32, 32
          %4442 = vsyncadd [#allocation4], %s4441
          %s4444 = sshll.u32 [#allocation3], 4
          %s4445 = int_to_ptr.vmem [resolvable:$true] %s4444
          %4447 = dma.vmem_to_hbm [thread:$0]  %s4445, 32, %s21, [#allocation4]
        $region116: #{vit_encoder_forward.1} parent=103 // pred_fallthru
          _
        // Predicated region
        $region117: #{vit_encoder_forward.1} parent=103 // pred_check
          %p4448 = pneg %p547
        $region118: #{vit_encoder_forward.1} parent=103 // pred_check_branch
          %4450 = sbr.rel (%p4448) target = $region120
        $region119: #{vit_encoder_forward.1} parent=103 // pred_region
          %4451 = dma.done [#allocation4], 32
        $region120: #{vit_encoder_forward.1} parent=103 // pred_fallthru
          _
      $region104: #{vit_encoder_forward.1} parent=5 // pred_fallthru
        _
      %p4452 = scmp.le.s32.totalorder 2, %s28
      // Predicated region
      $region121: #{vit_encoder_forward.1} parent=5 // pred_check
        %p4453 = pneg %p4452
      $region122: #{vit_encoder_forward.1} parent=5 // pred_check_branch
        %4455 = sbr.rel (%p4453) target = $region124
      $region123: #{vit_encoder_forward.1} parent=5 // pred_region
        %s4456 = ssub.s32 %s28, 2
      $region124: #{vit_encoder_forward.1} parent=5 // pred_fallthru
        _
    $region6: #{vit_encoder_forward.1} parent=1 // loop_footer
      %s32 = sadd.s32 1, %s28
    $region7: #{vit_encoder_forward.1} parent=1 // loop_footer_branch
      %27 = sbr.rel target = $region3
    $region8: #{vit_encoder_forward.1} parent=1 // loop_exit
      _
    %4457 = vsyncpa [#allocation4], 1
    %s4458 = scalar_lea.sflag [#allocation4], 1
    %4459 = vsyncpa %s4458, 1

</llo_original>
